<compile_context>
chip_gen: v7x
topology: tpu7x:2x2x1
jax: 0.10.0
libtpu: 0.0.40
codegen_flags: <defaults>
</compile_context>

<pallas_src>
import jax
import jax.numpy as jnp
from jax import lax
from jax.experimental import pallas as pl
from jax.experimental.pallas import tpu as pltpu


_COMPUTE_DTYPE = jnp.bfloat16          # MXU operand dtype (weights + im2col LHS)
_VMEM_CAP = 40 * 1024 * 1024           # safe on v7x (64 MiB/TC); conservative on v5e/v6e


# ---------------------------------------------------------------------------
# Kernel
# ---------------------------------------------------------------------------
def _zero_halo(pad_ref):
    """Refresh the 1-wide zero halo of a padded scratch.

    The interior is fully overwritten every grid step, so only the border strips
    need (re)zeroing.  Done every step (not gated on program_id == 0) so it stays
    correct if the parallel grid axis is split across TensorCores.
    """
    Nb, Hp2, Wp2, C = pad_ref.shape
    dt = pad_ref.dtype
    pad_ref[:, 0:1, :, :] = jnp.zeros((Nb, 1, Wp2, C), dt)
    pad_ref[:, Hp2 - 1:Hp2, :, :] = jnp.zeros((Nb, 1, Wp2, C), dt)
    pad_ref[:, :, 0:1, :] = jnp.zeros((Nb, Hp2, 1, C), dt)
    pad_ref[:, :, Wp2 - 1:Wp2, :] = jnp.zeros((Nb, Hp2, 1, C), dt)


def _conv3x3_im2col(pad_ref, w_ref, b_ref, relu):
    """3x3 same-padding conv over the (Nb, H, W, C) tile held (with halo) in pad_ref.

    The nine taps are static slices of the padded scratch, cast to bf16 and
    concatenated along the channel (lane) axis into one (Nb*H*W, 9*C) operand,
    then contracted with the BN-folded (9*C, Cout) bf16 weight slab in a single
    MXU matmul with f32 accumulation.  Bias add / ReLU stay in f32.
    """
    Nb, Hp2, Wp2, C = pad_ref.shape
    H, W = Hp2 - 2, Wp2 - 2
    M = Nb * H * W

    taps = []
    for kh in range(3):
        for kw in range(3):
            tap = pad_ref[:, kh:kh + H, kw:kw + W, :].reshape(M, C)
            taps.append(tap.astype(_COMPUTE_DTYPE))
    lhs = jnp.concatenate(taps, axis=-1)                                  # (M, 9*C) bf16

    y = jnp.dot(lhs, w_ref[...], preferred_element_type=jnp.float32)     # (M, Cout) f32
    y = y + b_ref[...]                                                    # folded BN bias
    if relu:
        y = jnp.maximum(y, 0.0)
    return y


def _basic_block_kernel(x_ref, w1_ref, b1_ref, w2_ref, b2_ref, o_ref,
                        pad1_ref, pad2_ref):
    Nb, Hp2, Wp2, Cin = pad1_ref.shape
    H, W = Hp2 - 2, Wp2 - 2
    P = pad2_ref.shape[-1]

    _zero_halo(pad1_ref)
    _zero_halo(pad2_ref)

    # conv1 input -> padded scratch interior.  x is NOT kept live across the two
    # convs; it is re-read from the (VMEM-resident) block at the residual add.
    pad1_ref[:, 1:H + 1, 1:W + 1, :] = x_ref[...].astype(pad1_ref.dtype)

    # conv1 (3x3, no bias) + folded bn1 + relu -- one K = 9*Cin MXU contraction.
    h1 = _conv3x3_im2col(pad1_ref, w1_ref, b1_ref, relu=True)             # (M, P) f32
    pad2_ref[:, 1:H + 1, 1:W + 1, :] = h1.reshape(Nb, H, W, P).astype(pad2_ref.dtype)

    # conv2 (3x3, no bias) + folded bn2 -- one K = 9*P MXU contraction.
    h2 = _conv3x3_im2col(pad2_ref, w2_ref, b2_ref, relu=False)            # (M, P) f32

    # residual add (stride=1, downsample=None -> identity, Cin == P) + relu, f32.
    out = h2.reshape(Nb, H, W, P) + x_ref[...]
    o_ref[...] = jnp.maximum(out, 0.0).astype(o_ref.dtype)


# ---------------------------------------------------------------------------
# Wrapper
# ---------------------------------------------------------------------------
def _whole(shape):
    """BlockSpec covering the full (untiled) array."""
    return pl.BlockSpec(shape, lambda *_: (0,) * len(shape))


def _vmem_estimate_bytes(Nb, H, W, Cin, P):
    bf16, f32 = 2, 4
    m = Nb * H * W
    io_blocks = 2 * 2 * m * max(Cin, P) * f32                   # double-buffered x / out blocks
    weights = 2 * (9 * Cin * P + 9 * P * P) * bf16 + 2 * 2 * P * f32
    pads = Nb * (H + 2) * (W + 2) * (Cin + P) * f32             # padded conv-input scratches
    im2col = m * 9 * max(Cin, P) * (bf16 + f32)                 # taps + concatenated LHS
    temps = 6 * m * max(Cin, P) * f32                           # matmul result / relu / residual
    return 2 * (io_blocks + weights + pads + im2col + temps)    # 2x headroom for compiler temps


def _pick_batch_block(N, H, W, Cin, P, max_nb=8):
    """Largest divisor of N (<= max_nb) whose working set fits the VMEM budget."""
    for nb in range(min(N, max_nb), 0, -1):
        if N % nb == 0 and _vmem_estimate_bytes(nb, H, W, Cin, P) <= _VMEM_CAP:
            return nb
    return 1


def basic_block_pallas(x_nhwc, params):
    """x_nhwc: (N, H, W, Cin) float32.  Returns (N, H, W, Cin) float32."""
    N, H, W, Cin = x_nhwc.shape
    K1, P = params["w1"].shape
    assert K1 == 9 * Cin, "conv1 weight must be the folded (9*Cin, planes) slab"
    assert params["w2"].shape == (9 * P, P)
    assert Cin == P, "identity residual requires inplanes == planes (stride=1, no downsample)"

    Nb = _pick_batch_block(N, H, W, Cin, P)
    vmem_limit = int(min(max(_vmem_estimate_bytes(Nb, H, W, Cin, P),
                             16 * 1024 * 1024), _VMEM_CAP))

    grid_spec = pltpu.PrefetchScalarGridSpec(
        num_scalar_prefetch=0,
        grid=(N // Nb,),
        in_specs=[
            pl.BlockSpec((Nb, H, W, Cin), lambda b: (b, 0, 0, 0)),   # x (Nb images / step)
            # TODO(synk): for large P on v7x, single-buffer these whole-weight inputs
            #             (pipeline_mode=pl.Buffered(1)) or add a Cout grid axis.
            _whole((9 * Cin, P)),                                    # conv1 weight (BN folded, bf16)
            _whole((1, P)),                                          # bn1 bias (f32)
            _whole((9 * P, P)),                                      # conv2 weight (BN folded, bf16)
            _whole((1, P)),                                          # bn2 bias (f32)
        ],
        out_specs=pl.BlockSpec((Nb, H, W, P), lambda b: (b, 0, 0, 0)),
        scratch_shapes=[
            pltpu.VMEM((Nb, H + 2, W + 2, Cin), jnp.float32),   # zero-padded conv1 input
            pltpu.VMEM((Nb, H + 2, W + 2, P), jnp.float32),     # zero-padded h1 (conv2 input)
        ],
    )

    return pl.pallas_call(
        _basic_block_kernel,
        out_shape=jax.ShapeDtypeStruct((N, H, W, P), jnp.float32),
        grid_spec=grid_spec,
        compiler_params=pltpu.CompilerParams(
            dimension_semantics=("parallel",),
            vmem_limit_bytes=vmem_limit,
        ),
    )(x_nhwc, params["w1"], params["b1"], params["w2"], params["b2"])


# ---------------------------------------------------------------------------
# Parameters (PyTorch-style raw params -> folded kernel params)
# ---------------------------------------------------------------------------
def make_raw_params(key, inplanes, planes):
    """Deterministic synthetic weights matching BasicBlock's shapes (PyTorch layout)."""
    ks = jax.random.split(key, 4)
    w1 = jax.random.normal(ks[0], (planes, inplanes, 3, 3), jnp.float32) * 0.1
    w2 = jax.random.normal(ks[1], (planes, planes, 3, 3), jnp.float32) * 0.1

    def bn(k, c):
        kg, kb, km, kv = jax.random.split(k, 4)
        gamma = 1.0 + 0.1 * jax.random.normal(kg, (c,), jnp.float32)
        beta = 0.1 * jax.random.normal(kb, (c,), jnp.float32)
        mean = 0.1 * jax.random.normal(km, (c,), jnp.float32)
        var = jnp.abs(jax.random.normal(kv, (c,), jnp.float32)) + 0.5
        return (gamma, beta, mean, var)

    return {"w1": w1, "w2": w2, "bn1": bn(ks[2], planes), "bn2": bn(ks[3], planes)}


def fold_params(raw, eps=1e-5, compute_dtype=_COMPUTE_DTYPE):
    """Fold inference-mode BN into the conv weights and keep only per-channel f32 biases.

    Weights are reshaped to (9*Cin, Cout) matching the kernel's im2col column order
    (kh-major, kw, then channel) and cast to bf16 for the MXU.
    """
    def fold(w_oihw, bn_params):
        gamma, beta, mean, var = bn_params
        scale = gamma / jnp.sqrt(var + eps)                  # (Cout,)
        bias = beta - mean * scale                           # (Cout,)
        w = jnp.transpose(w_oihw, (2, 3, 1, 0)) * scale      # (kh, kw, Cin, Cout), BN-scaled
        kh, kw, cin, cout = w.shape
        return (w.reshape(kh * kw * cin, cout).astype(compute_dtype),
                bias.reshape(1, -1).astype(jnp.float32))

    w1, b1 = fold(raw["w1"], raw["bn1"])
    w2, b2 = fold(raw["w2"], raw["bn2"])
    return {"w1": w1, "b1": b1, "w2": w2, "b2": b2}


# ---------------------------------------------------------------------------
# Pure-JAX reference (independent: lax.conv + explicit BN on the raw params)
# ---------------------------------------------------------------------------
def basic_block_reference(x_nhwc, raw, eps=1e-5):
    def conv(x, w_oihw):
        w_hwio = jnp.transpose(w_oihw, (2, 3, 1, 0))
        return lax.conv_general_dilated(
            x, w_hwio, window_strides=(1, 1), padding=((1, 1), (1, 1)),
            dimension_numbers=("NHWC", "HWIO", "NHWC"),
            precision=lax.Precision.HIGHEST)

    def bn(y, p):
        gamma, beta, mean, var = p
        return (y - mean) * (gamma / jnp.sqrt(var + eps)) + beta

    out = jnp.maximum(bn(conv(x_nhwc, raw["w1"]), raw["bn1"]), 0.0)
    out = bn(conv(out, raw["w2"]), raw["bn2"])
    return jnp.maximum(out + x_nhwc, 0.0)


# ---------------------------------------------------------------------------
# Main
# ---------------------------------------------------------------------------
if __name__ == "__main__":
    key = jax.random.PRNGKey(0)
    N, C, H, W = 2, 32, 16, 16          # inplanes == planes (stride=1, downsample=None)
    kx, kp = jax.random.split(key)

    # PyTorch input would be (N, C, H, W); transpose to the kernel's NHWC layout.
    x_nchw = jax.random.normal(kx, (N, C, H, W), jnp.float32)
    x_nhwc = jnp.transpose(x_nchw, (0, 2, 3, 1))

    raw = make_raw_params(kp, C, C)
    params = fold_params(raw)

    out_nhwc = jax.block_until_ready(basic_block_pallas(x_nhwc, params))
    ref_nhwc = basic_block_reference(x_nhwc, raw)

    assert out_nhwc.shape == (N, H, W, C)
    # bf16 MXU operands with f32 accumulation -> compare with a relative-error check.
    rel = jnp.linalg.norm(out_nhwc - ref_nhwc) / (jnp.linalg.norm(ref_nhwc) + 1e-12)
    assert float(rel) < 2e-2, f"relative error too large: {float(rel)}"
    assert float(jnp.max(jnp.abs(out_nhwc - ref_nhwc))) < 0.25, "max abs error too large"

    # (out_nhwc can be transposed back to (N, C, H, W) to match PyTorch's output layout)
    print("KERNEL_OK")
</pallas_src>

<mosaic_0001>
module attributes {stable_mosaic.version = 11 : i64} {
  func.func @_basic_block_kernel(%arg0: i32, %arg1: memref<2x16x16x32xf32, #tpu.memory_space<vmem>>, %arg2: memref<288x32xbf16, #tpu.memory_space<vmem>>, %arg3: memref<1x32xf32, #tpu.memory_space<vmem>>, %arg4: memref<288x32xbf16, #tpu.memory_space<vmem>>, %arg5: memref<1x32xf32, #tpu.memory_space<vmem>>, %arg6: memref<2x16x16x32xf32, #tpu.memory_space<vmem>>, %arg7: memref<2x18x18x32xf32, #tpu.memory_space<vmem>>, %arg8: memref<2x18x18x32xf32, #tpu.memory_space<vmem>>) attributes {dimension_semantics = [#tpu.dimension_semantics<parallel>], iteration_bounds = array<i64: 1>, scalar_prefetch = 0 : i64, scratch_operands = 2 : i64, tpu.core_type = #tpu.core_type<tc>, window_params = [{transform_indices = @transform_0, window_bounds = array<i64: 2, 16, 16, 32>}, {pipeline_mode = #tpu.pipeline_mode<synchronous>, transform_indices = @transform_1, window_bounds = array<i64: 288, 32>}, {pipeline_mode = #tpu.pipeline_mode<synchronous>, transform_indices = @transform_2, window_bounds = array<i64: 1, 32>}, {pipeline_mode = #tpu.pipeline_mode<synchronous>, transform_indices = @transform_3, window_bounds = array<i64: 288, 32>}, {pipeline_mode = #tpu.pipeline_mode<synchronous>, transform_indices = @transform_4, window_bounds = array<i64: 1, 32>}, {transform_indices = @transform_5, window_bounds = array<i64: 2, 16, 16, 32>}]} {
    %cst = arith.constant 0.000000e+00 : f32
    %0 = vector.broadcast %cst : f32 to vector<2x1x18x32xf32>
    %c0 = arith.constant 0 : index
    %c0_0 = arith.constant 0 : index
    %c0_1 = arith.constant 0 : index
    %c0_2 = arith.constant 0 : index
    %1 = vector.load %arg7[%c0, %c0_0, %c0_1, %c0_2] : memref<2x18x18x32xf32, #tpu.memory_space<vmem>>, vector<2x1x18x32xf32>
    tpu.vector_store %arg7[%c0, %c0_0, %c0_1, %c0_2], %0 {strides = array<i32>} : memref<2x18x18x32xf32, #tpu.memory_space<vmem>>, vector<2x1x18x32xf32>,
    %cst_3 = arith.constant 0.000000e+00 : f32
    %2 = vector.broadcast %cst_3 : f32 to vector<2x1x18x32xf32>
    %c0_4 = arith.constant 0 : index
    %c17 = arith.constant 17 : index
    %c0_5 = arith.constant 0 : index
    %c0_6 = arith.constant 0 : index
    %3 = vector.load %arg7[%c0_4, %c17, %c0_5, %c0_6] : memref<2x18x18x32xf32, #tpu.memory_space<vmem>>, vector<2x1x18x32xf32>
    tpu.vector_store %arg7[%c0_4, %c17, %c0_5, %c0_6], %2 {strides = array<i32>} : memref<2x18x18x32xf32, #tpu.memory_space<vmem>>, vector<2x1x18x32xf32>,
    %cst_7 = arith.constant 0.000000e+00 : f32
    %4 = vector.broadcast %cst_7 : f32 to vector<2x18x1x32xf32>
    %c0_8 = arith.constant 0 : index
    %c0_9 = arith.constant 0 : index
    %c0_10 = arith.constant 0 : index
    %c0_11 = arith.constant 0 : index
    %5 = vector.load %arg7[%c0_8, %c0_9, %c0_10, %c0_11] : memref<2x18x18x32xf32, #tpu.memory_space<vmem>>, vector<2x18x1x32xf32>
    tpu.vector_store %arg7[%c0_8, %c0_9, %c0_10, %c0_11], %4 {strides = array<i32>} : memref<2x18x18x32xf32, #tpu.memory_space<vmem>>, vector<2x18x1x32xf32>,
    %cst_12 = arith.constant 0.000000e+00 : f32
    %6 = vector.broadcast %cst_12 : f32 to vector<2x18x1x32xf32>
    %c0_13 = arith.constant 0 : index
    %c0_14 = arith.constant 0 : index
    %c17_15 = arith.constant 17 : index
    %c0_16 = arith.constant 0 : index
    %7 = vector.load %arg7[%c0_13, %c0_14, %c17_15, %c0_16] : memref<2x18x18x32xf32, #tpu.memory_space<vmem>>, vector<2x18x1x32xf32>
    tpu.vector_store %arg7[%c0_13, %c0_14, %c17_15, %c0_16], %6 {strides = array<i32>} : memref<2x18x18x32xf32, #tpu.memory_space<vmem>>, vector<2x18x1x32xf32>,
    %cst_17 = arith.constant 0.000000e+00 : f32
    %8 = vector.broadcast %cst_17 : f32 to vector<2x1x18x32xf32>
    %c0_18 = arith.constant 0 : index
    %c0_19 = arith.constant 0 : index
    %c0_20 = arith.constant 0 : index
    %c0_21 = arith.constant 0 : index
    %9 = vector.load %arg8[%c0_18, %c0_19, %c0_20, %c0_21] : memref<2x18x18x32xf32, #tpu.memory_space<vmem>>, vector<2x1x18x32xf32>
    tpu.vector_store %arg8[%c0_18, %c0_19, %c0_20, %c0_21], %8 {strides = array<i32>} : memref<2x18x18x32xf32, #tpu.memory_space<vmem>>, vector<2x1x18x32xf32>,
    %cst_22 = arith.constant 0.000000e+00 : f32
    %10 = vector.broadcast %cst_22 : f32 to vector<2x1x18x32xf32>
    %c0_23 = arith.constant 0 : index
    %c17_24 = arith.constant 17 : index
    %c0_25 = arith.constant 0 : index
    %c0_26 = arith.constant 0 : index
    %11 = vector.load %arg8[%c0_23, %c17_24, %c0_25, %c0_26] : memref<2x18x18x32xf32, #tpu.memory_space<vmem>>, vector<2x1x18x32xf32>
    tpu.vector_store %arg8[%c0_23, %c17_24, %c0_25, %c0_26], %10 {strides = array<i32>} : memref<2x18x18x32xf32, #tpu.memory_space<vmem>>, vector<2x1x18x32xf32>,
    %cst_27 = arith.constant 0.000000e+00 : f32
    %12 = vector.broadcast %cst_27 : f32 to vector<2x18x1x32xf32>
    %c0_28 = arith.constant 0 : index
    %c0_29 = arith.constant 0 : index
    %c0_30 = arith.constant 0 : index
    %c0_31 = arith.constant 0 : index
    %13 = vector.load %arg8[%c0_28, %c0_29, %c0_30, %c0_31] : memref<2x18x18x32xf32, #tpu.memory_space<vmem>>, vector<2x18x1x32xf32>
    tpu.vector_store %arg8[%c0_28, %c0_29, %c0_30, %c0_31], %12 {strides = array<i32>} : memref<2x18x18x32xf32, #tpu.memory_space<vmem>>, vector<2x18x1x32xf32>,
    %cst_32 = arith.constant 0.000000e+00 : f32
    %14 = vector.broadcast %cst_32 : f32 to vector<2x18x1x32xf32>
    %c0_33 = arith.constant 0 : index
    %c0_34 = arith.constant 0 : index
    %c17_35 = arith.constant 17 : index
    %c0_36 = arith.constant 0 : index
    %15 = vector.load %arg8[%c0_33, %c0_34, %c17_35, %c0_36] : memref<2x18x18x32xf32, #tpu.memory_space<vmem>>, vector<2x18x1x32xf32>
    tpu.vector_store %arg8[%c0_33, %c0_34, %c17_35, %c0_36], %14 {strides = array<i32>} : memref<2x18x18x32xf32, #tpu.memory_space<vmem>>, vector<2x18x1x32xf32>,
    %c0_37 = arith.constant 0 : index
    %c0_38 = arith.constant 0 : index
    %c0_39 = arith.constant 0 : index
    %c0_40 = arith.constant 0 : index
    %16 = vector.load %arg1[%c0_37, %c0_38, %c0_39, %c0_40] : memref<2x16x16x32xf32, #tpu.memory_space<vmem>>, vector<2x16x16x32xf32>
    %c0_41 = arith.constant 0 : index
    %c1 = arith.constant 1 : index
    %c1_42 = arith.constant 1 : index
    %c0_43 = arith.constant 0 : index
    %17 = vector.load %arg7[%c0_41, %c1, %c1_42, %c0_43] : memref<2x18x18x32xf32, #tpu.memory_space<vmem>>, vector<2x16x16x32xf32>
    tpu.vector_store %arg7[%c0_41, %c1, %c1_42, %c0_43], %16 {strides = array<i32>} : memref<2x18x18x32xf32, #tpu.memory_space<vmem>>, vector<2x16x16x32xf32>,
    %c0_44 = arith.constant 0 : index
    %c0_45 = arith.constant 0 : index
    %c0_46 = arith.constant 0 : index
    %c0_47 = arith.constant 0 : index
    %18 = vector.load %arg7[%c0_44, %c0_45, %c0_46, %c0_47] : memref<2x18x18x32xf32, #tpu.memory_space<vmem>>, vector<2x16x16x32xf32>
    %19 = vector.shape_cast %18 : vector<2x16x16x32xf32> to vector<512x32xf32>
    %20 = arith.truncf %19 : vector<512x32xf32> to vector<512x32xbf16>
    %c0_48 = arith.constant 0 : index
    %c0_49 = arith.constant 0 : index
    %c1_50 = arith.constant 1 : index
    %c0_51 = arith.constant 0 : index
    %21 = vector.load %arg7[%c0_48, %c0_49, %c1_50, %c0_51] : memref<2x18x18x32xf32, #tpu.memory_space<vmem>>, vector<2x16x16x32xf32>
    %22 = vector.shape_cast %21 : vector<2x16x16x32xf32> to vector<512x32xf32>
    %23 = arith.truncf %22 : vector<512x32xf32> to vector<512x32xbf16>
    %c0_52 = arith.constant 0 : index
    %c0_53 = arith.constant 0 : index
    %c2 = arith.constant 2 : index
    %c0_54 = arith.constant 0 : index
    %24 = vector.load %arg7[%c0_52, %c0_53, %c2, %c0_54] : memref<2x18x18x32xf32, #tpu.memory_space<vmem>>, vector<2x16x16x32xf32>
    %25 = vector.shape_cast %24 : vector<2x16x16x32xf32> to vector<512x32xf32>
    %26 = arith.truncf %25 : vector<512x32xf32> to vector<512x32xbf16>
    %c0_55 = arith.constant 0 : index
    %c1_56 = arith.constant 1 : index
    %c0_57 = arith.constant 0 : index
    %c0_58 = arith.constant 0 : index
    %27 = vector.load %arg7[%c0_55, %c1_56, %c0_57, %c0_58] : memref<2x18x18x32xf32, #tpu.memory_space<vmem>>, vector<2x16x16x32xf32>
    %28 = vector.shape_cast %27 : vector<2x16x16x32xf32> to vector<512x32xf32>
    %29 = arith.truncf %28 : vector<512x32xf32> to vector<512x32xbf16>
    %c0_59 = arith.constant 0 : index
    %c1_60 = arith.constant 1 : index
    %c1_61 = arith.constant 1 : index
    %c0_62 = arith.constant 0 : index
    %30 = vector.load %arg7[%c0_59, %c1_60, %c1_61, %c0_62] : memref<2x18x18x32xf32, #tpu.memory_space<vmem>>, vector<2x16x16x32xf32>
    %31 = vector.shape_cast %30 : vector<2x16x16x32xf32> to vector<512x32xf32>
    %32 = arith.truncf %31 : vector<512x32xf32> to vector<512x32xbf16>
    %c0_63 = arith.constant 0 : index
    %c1_64 = arith.constant 1 : index
    %c2_65 = arith.constant 2 : index
    %c0_66 = arith.constant 0 : index
    %33 = vector.load %arg7[%c0_63, %c1_64, %c2_65, %c0_66] : memref<2x18x18x32xf32, #tpu.memory_space<vmem>>, vector<2x16x16x32xf32>
    %34 = vector.shape_cast %33 : vector<2x16x16x32xf32> to vector<512x32xf32>
    %35 = arith.truncf %34 : vector<512x32xf32> to vector<512x32xbf16>
    %c0_67 = arith.constant 0 : index
    %c2_68 = arith.constant 2 : index
    %c0_69 = arith.constant 0 : index
    %c0_70 = arith.constant 0 : index
    %36 = vector.load %arg7[%c0_67, %c2_68, %c0_69, %c0_70] : memref<2x18x18x32xf32, #tpu.memory_space<vmem>>, vector<2x16x16x32xf32>
    %37 = vector.shape_cast %36 : vector<2x16x16x32xf32> to vector<512x32xf32>
    %38 = arith.truncf %37 : vector<512x32xf32> to vector<512x32xbf16>
    %c0_71 = arith.constant 0 : index
    %c2_72 = arith.constant 2 : index
    %c1_73 = arith.constant 1 : index
    %c0_74 = arith.constant 0 : index
    %39 = vector.load %arg7[%c0_71, %c2_72, %c1_73, %c0_74] : memref<2x18x18x32xf32, #tpu.memory_space<vmem>>, vector<2x16x16x32xf32>
    %40 = vector.shape_cast %39 : vector<2x16x16x32xf32> to vector<512x32xf32>
    %41 = arith.truncf %40 : vector<512x32xf32> to vector<512x32xbf16>
    %c0_75 = arith.constant 0 : index
    %c2_76 = arith.constant 2 : index
    %c2_77 = arith.constant 2 : index
    %c0_78 = arith.constant 0 : index
    %42 = vector.load %arg7[%c0_75, %c2_76, %c2_77, %c0_78] : memref<2x18x18x32xf32, #tpu.memory_space<vmem>>, vector<2x16x16x32xf32>
    %43 = vector.shape_cast %42 : vector<2x16x16x32xf32> to vector<512x32xf32>
    %44 = arith.truncf %43 : vector<512x32xf32> to vector<512x32xbf16>
    %45 = tpu.concatenate %20, %23, %26, %29, %32, %35, %38, %41, %44 in 1 : vector<512x32xbf16>, vector<512x32xbf16>, vector<512x32xbf16>, vector<512x32xbf16>, vector<512x32xbf16>, vector<512x32xbf16>, vector<512x32xbf16>, vector<512x32xbf16>, vector<512x32xbf16> -> vector<512x288xbf16>
    %c0_79 = arith.constant 0 : index
    %c0_80 = arith.constant 0 : index
    %46 = vector.load %arg2[%c0_79, %c0_80] : memref<288x32xbf16, #tpu.memory_space<vmem>>, vector<288x32xbf16>
    %cst_81 = arith.constant dense<0.000000e+00> : vector<512x32xf32>
    %47 = tpu.matmul %45, %46, %cst_81 {dimension_numbers = #tpu.dot_dimension_numbers<[1], [0], [0], [1], [0, 0, 1, 1], [], []>} : vector<512x288xbf16>, vector<288x32xbf16>, vector<512x32xf32> -> vector<512x32xf32>
    %c0_82 = arith.constant 0 : index
    %c0_83 = arith.constant 0 : index
    %48 = vector.load %arg3[%c0_82, %c0_83] : memref<1x32xf32, #tpu.memory_space<vmem>>, vector<1x32xf32>
    %49 = vector.broadcast %48 : vector<1x32xf32> to vector<512x32xf32>
    %50 = arith.addf %47, %49 : vector<512x32xf32>
    %cst_84 = arith.constant 0.000000e+00 : f32
    %51 = vector.broadcast %cst_84 : f32 to vector<512x32xf32>
    %52 = arith.maximumf %50, %51 : vector<512x32xf32>
    %53 = vector.shape_cast %52 : vector<512x32xf32> to vector<2x16x16x32xf32>
    %c0_85 = arith.constant 0 : index
    %c1_86 = arith.constant 1 : index
    %c1_87 = arith.constant 1 : index
    %c0_88 = arith.constant 0 : index
    %54 = vector.load %arg8[%c0_85, %c1_86, %c1_87, %c0_88] : memref<2x18x18x32xf32, #tpu.memory_space<vmem>>, vector<2x16x16x32xf32>
    tpu.vector_store %arg8[%c0_85, %c1_86, %c1_87, %c0_88], %53 {strides = array<i32>} : memref<2x18x18x32xf32, #tpu.memory_space<vmem>>, vector<2x16x16x32xf32>,
    %c0_89 = arith.constant 0 : index
    %c0_90 = arith.constant 0 : index
    %c0_91 = arith.constant 0 : index
    %c0_92 = arith.constant 0 : index
    %55 = vector.load %arg8[%c0_89, %c0_90, %c0_91, %c0_92] : memref<2x18x18x32xf32, #tpu.memory_space<vmem>>, vector<2x16x16x32xf32>
    %56 = vector.shape_cast %55 : vector<2x16x16x32xf32> to vector<512x32xf32>
    %57 = arith.truncf %56 : vector<512x32xf32> to vector<512x32xbf16>
    %c0_93 = arith.constant 0 : index
    %c0_94 = arith.constant 0 : index
    %c1_95 = arith.constant 1 : index
    %c0_96 = arith.constant 0 : index
    %58 = vector.load %arg8[%c0_93, %c0_94, %c1_95, %c0_96] : memref<2x18x18x32xf32, #tpu.memory_space<vmem>>, vector<2x16x16x32xf32>
    %59 = vector.shape_cast %58 : vector<2x16x16x32xf32> to vector<512x32xf32>
    %60 = arith.truncf %59 : vector<512x32xf32> to vector<512x32xbf16>
    %c0_97 = arith.constant 0 : index
    %c0_98 = arith.constant 0 : index
    %c2_99 = arith.constant 2 : index
    %c0_100 = arith.constant 0 : index
    %61 = vector.load %arg8[%c0_97, %c0_98, %c2_99, %c0_100] : memref<2x18x18x32xf32, #tpu.memory_space<vmem>>, vector<2x16x16x32xf32>
    %62 = vector.shape_cast %61 : vector<2x16x16x32xf32> to vector<512x32xf32>
    %63 = arith.truncf %62 : vector<512x32xf32> to vector<512x32xbf16>
    %c0_101 = arith.constant 0 : index
    %c1_102 = arith.constant 1 : index
    %c0_103 = arith.constant 0 : index
    %c0_104 = arith.constant 0 : index
    %64 = vector.load %arg8[%c0_101, %c1_102, %c0_103, %c0_104] : memref<2x18x18x32xf32, #tpu.memory_space<vmem>>, vector<2x16x16x32xf32>
    %65 = vector.shape_cast %64 : vector<2x16x16x32xf32> to vector<512x32xf32>
    %66 = arith.truncf %65 : vector<512x32xf32> to vector<512x32xbf16>
    %c0_105 = arith.constant 0 : index
    %c1_106 = arith.constant 1 : index
    %c1_107 = arith.constant 1 : index
    %c0_108 = arith.constant 0 : index
    %67 = vector.load %arg8[%c0_105, %c1_106, %c1_107, %c0_108] : memref<2x18x18x32xf32, #tpu.memory_space<vmem>>, vector<2x16x16x32xf32>
    %68 = vector.shape_cast %67 : vector<2x16x16x32xf32> to vector<512x32xf32>
    %69 = arith.truncf %68 : vector<512x32xf32> to vector<512x32xbf16>
    %c0_109 = arith.constant 0 : index
    %c1_110 = arith.constant 1 : index
    %c2_111 = arith.constant 2 : index
    %c0_112 = arith.constant 0 : index
    %70 = vector.load %arg8[%c0_109, %c1_110, %c2_111, %c0_112] : memref<2x18x18x32xf32, #tpu.memory_space<vmem>>, vector<2x16x16x32xf32>
    %71 = vector.shape_cast %70 : vector<2x16x16x32xf32> to vector<512x32xf32>
    %72 = arith.truncf %71 : vector<512x32xf32> to vector<512x32xbf16>
    %c0_113 = arith.constant 0 : index
    %c2_114 = arith.constant 2 : index
    %c0_115 = arith.constant 0 : index
    %c0_116 = arith.constant 0 : index
    %73 = vector.load %arg8[%c0_113, %c2_114, %c0_115, %c0_116] : memref<2x18x18x32xf32, #tpu.memory_space<vmem>>, vector<2x16x16x32xf32>
    %74 = vector.shape_cast %73 : vector<2x16x16x32xf32> to vector<512x32xf32>
    %75 = arith.truncf %74 : vector<512x32xf32> to vector<512x32xbf16>
    %c0_117 = arith.constant 0 : index
    %c2_118 = arith.constant 2 : index
    %c1_119 = arith.constant 1 : index
    %c0_120 = arith.constant 0 : index
    %76 = vector.load %arg8[%c0_117, %c2_118, %c1_119, %c0_120] : memref<2x18x18x32xf32, #tpu.memory_space<vmem>>, vector<2x16x16x32xf32>
    %77 = vector.shape_cast %76 : vector<2x16x16x32xf32> to vector<512x32xf32>
    %78 = arith.truncf %77 : vector<512x32xf32> to vector<512x32xbf16>
    %c0_121 = arith.constant 0 : index
    %c2_122 = arith.constant 2 : index
    %c2_123 = arith.constant 2 : index
    %c0_124 = arith.constant 0 : index
    %79 = vector.load %arg8[%c0_121, %c2_122, %c2_123, %c0_124] : memref<2x18x18x32xf32, #tpu.memory_space<vmem>>, vector<2x16x16x32xf32>
    %80 = vector.shape_cast %79 : vector<2x16x16x32xf32> to vector<512x32xf32>
    %81 = arith.truncf %80 : vector<512x32xf32> to vector<512x32xbf16>
    %82 = tpu.concatenate %57, %60, %63, %66, %69, %72, %75, %78, %81 in 1 : vector<512x32xbf16>, vector<512x32xbf16>, vector<512x32xbf16>, vector<512x32xbf16>, vector<512x32xbf16>, vector<512x32xbf16>, vector<512x32xbf16>, vector<512x32xbf16>, vector<512x32xbf16> -> vector<512x288xbf16>
    %c0_125 = arith.constant 0 : index
    %c0_126 = arith.constant 0 : index
    %83 = vector.load %arg4[%c0_125, %c0_126] : memref<288x32xbf16, #tpu.memory_space<vmem>>, vector<288x32xbf16>
    %cst_127 = arith.constant dense<0.000000e+00> : vector<512x32xf32>
    %84 = tpu.matmul %82, %83, %cst_127 {dimension_numbers = #tpu.dot_dimension_numbers<[1], [0], [0], [1], [0, 0, 1, 1], [], []>} : vector<512x288xbf16>, vector<288x32xbf16>, vector<512x32xf32> -> vector<512x32xf32>
    %c0_128 = arith.constant 0 : index
    %c0_129 = arith.constant 0 : index
    %85 = vector.load %arg5[%c0_128, %c0_129] : memref<1x32xf32, #tpu.memory_space<vmem>>, vector<1x32xf32>
    %86 = vector.broadcast %85 : vector<1x32xf32> to vector<512x32xf32>
    %87 = arith.addf %84, %86 : vector<512x32xf32>
    %88 = vector.shape_cast %87 : vector<512x32xf32> to vector<2x16x16x32xf32>
    %c0_130 = arith.constant 0 : index
    %c0_131 = arith.constant 0 : index
    %c0_132 = arith.constant 0 : index
    %c0_133 = arith.constant 0 : index
    %89 = vector.load %arg1[%c0_130, %c0_131, %c0_132, %c0_133] : memref<2x16x16x32xf32, #tpu.memory_space<vmem>>, vector<2x16x16x32xf32>
    %90 = arith.addf %88, %89 : vector<2x16x16x32xf32>
    %cst_134 = arith.constant 0.000000e+00 : f32
    %91 = vector.broadcast %cst_134 : f32 to vector<2x16x16x32xf32>
    %92 = arith.maximumf %90, %91 : vector<2x16x16x32xf32>
    %c0_135 = arith.constant 0 : index
    %c0_136 = arith.constant 0 : index
    %c0_137 = arith.constant 0 : index
    %c0_138 = arith.constant 0 : index
    %93 = vector.load %arg6[%c0_135, %c0_136, %c0_137, %c0_138] : memref<2x16x16x32xf32, #tpu.memory_space<vmem>>, vector<2x16x16x32xf32>
    tpu.vector_store %arg6[%c0_135, %c0_136, %c0_137, %c0_138], %92 {strides = array<i32>} : memref<2x16x16x32xf32, #tpu.memory_space<vmem>>, vector<2x16x16x32xf32>,
    return
  }
  func.func @transform_0(%arg0: i32) -> (i32, i32, i32, i32) {
    %c0_i32 = arith.constant 0 : i32
    %c0_i32_0 = arith.constant 0 : i32
    %c0_i32_1 = arith.constant 0 : i32
    %c0_i32_2 = arith.constant 0 : i32
    return %arg0, %c0_i32, %c0_i32_0, %c0_i32_1 : i32, i32, i32, i32
  }
  func.func @transform_1(%arg0: i32) -> (i32, i32) {
    %c0_i32 = arith.constant 0 : i32
    %c0_i32_0 = arith.constant 0 : i32
    %c0_i32_1 = arith.constant 0 : i32
    return %c0_i32, %c0_i32_0 : i32, i32
  }
  func.func @transform_2(%arg0: i32) -> (i32, i32) {
    %c0_i32 = arith.constant 0 : i32
    %c0_i32_0 = arith.constant 0 : i32
    %c0_i32_1 = arith.constant 0 : i32
    return %c0_i32, %c0_i32_0 : i32, i32
  }
  func.func @transform_3(%arg0: i32) -> (i32, i32) {
    %c0_i32 = arith.constant 0 : i32
    %c0_i32_0 = arith.constant 0 : i32
    %c0_i32_1 = arith.constant 0 : i32
    return %c0_i32, %c0_i32_0 : i32, i32
  }
  func.func @transform_4(%arg0: i32) -> (i32, i32) {
    %c0_i32 = arith.constant 0 : i32
    %c0_i32_0 = arith.constant 0 : i32
    %c0_i32_1 = arith.constant 0 : i32
    return %c0_i32, %c0_i32_0 : i32, i32
  }
  func.func @transform_5(%arg0: i32) -> (i32, i32, i32, i32) {
    %c0_i32 = arith.constant 0 : i32
    %c0_i32_0 = arith.constant 0 : i32
    %c0_i32_1 = arith.constant 0 : i32
    %c0_i32_2 = arith.constant 0 : i32
    return %arg0, %c0_i32, %c0_i32_0, %c0_i32_1 : i32, i32, i32, i32
  }
}

</mosaic_0001>

<llo_original>
// kernel: tpu_custom_call.1
$region0: #{tpu_custom_call.1}
  #allocation0 [shape = 'u32[]', space=smem, size = 0x4, offset = 0x4, fixed_abs, tag = 'smem constant byte address 0x4 - core index']
  #allocation1 [shape = 'u32[144,128]{1,0:T(1,128)}', space=vmem, size = 0x12000, scoped, tag = 'internal scratch']
  #allocation2 [shape = 'f32[2,18,18,32]{3,2,1,0:T(8,128)}', space=vmem, size = 0x6c000, scoped, tag = 'scratch operand']
  #allocation3 [shape = 'f32[2,18,18,32]{3,2,1,0:T(8,128)}', space=vmem, size = 0x6c000, scoped, tag = 'scratch operand']
  %s0 = inlined_call_operand.hbm [shape: f32[2,16,16,32], index: 0, kind: input, shape index: {}]
  %s1 = inlined_call_operand.vmem [shape: bf16[288,32], index: 1, kind: input, shape index: {}]
  %s2 = inlined_call_operand.vmem [shape: f32[1,32], index: 2, kind: input, shape index: {}]
  %s3 = inlined_call_operand.vmem [shape: bf16[288,32], index: 3, kind: input, shape index: {}]
  %s4 = inlined_call_operand.vmem [shape: f32[1,32], index: 4, kind: input, shape index: {}]
  %s5 = inlined_call_operand.hbm [shape: f32[2,16,16,32], index: 5, kind: output, shape index: {}]
  %s6 = sld [smem:[#allocation0]]
  $region34: #{tpu_custom_call.1} parent=0
    _
  %s8 = ssub.s32 1, %s6
  %s9 = scalar_select 0, %s8, %s6
  $region1: #{tpu_custom_call.1} parent=0
    #allocation4 [shape = 'u8[262144]{0}', space=vmem, size = 0x40000, scoped, tag = 'input window, operand 0, single buffered']
    #allocation5 [shape = 's32[1]{0}', space=sflag, size = 0x4, scoped, tag = 'scoped memory for tpu_custom_call.1']
    #allocation6 [shape = 's32[1]{0}', space=sflag, size = 0x4, scoped, tag = 'scoped memory for tpu_custom_call.1']
    #allocation7 [shape = 'u8[262144]{0}', space=vmem, size = 0x40000, scoped, tag = 'output window, operand 0, single buffered']
    %10 = vsyncpa [#allocation5], 0
    %11 = vsyncpa [#allocation6], 0
    // Predicated region
    $region2: #{tpu_custom_call.1} parent=1 // pred_check
      _
    $region3: #{tpu_custom_call.1} parent=1 // pred_check_branch
      %13 = sbr.rel (0) target = $region5
    $region4: #{tpu_custom_call.1} parent=1 // pred_region
      %s15 = ssub.s32 8192, 8192
      %16 = vsyncadd [#allocation5], %s15
      %s17 = sshll.u32 [#allocation4], 4
      %s18 = int_to_ptr.vmem [resolvable:$true] %s17
      %23 = dma.hbm_to_vmem [thread:$0]  %s0, 8192, %s18, [#allocation5], 128, 128, 8
    $region5: #{tpu_custom_call.1} parent=1 // pred_fallthru
      _
    // Predicated region
    $region6: #{tpu_custom_call.1} parent=1 // pred_check
      _
    $region7: #{tpu_custom_call.1} parent=1 // pred_check_branch
      %25 = sbr.rel (0) target = $region9
    $region8: #{tpu_custom_call.1} parent=1 // pred_region
      _
    $region9: #{tpu_custom_call.1} parent=1 // pred_fallthru
      _
    // Predicated region
    $region10: #{tpu_custom_call.1} parent=1 // pred_check
      _
    $region11: #{tpu_custom_call.1} parent=1 // pred_check_branch
      %27 = sbr.rel (0) target = $region13
    $region12: #{tpu_custom_call.1} parent=1 // pred_region
      _
    $region13: #{tpu_custom_call.1} parent=1 // pred_fallthru
      _
    // Predicated region
    $region14: #{tpu_custom_call.1} parent=1 // pred_check
      _
    $region15: #{tpu_custom_call.1} parent=1 // pred_check_branch
      %29 = sbr.rel (0) target = $region17
    $region16: #{tpu_custom_call.1} parent=1 // pred_region
      _
    $region17: #{tpu_custom_call.1} parent=1 // pred_fallthru
      _
    // Predicated region
    $region18: #{tpu_custom_call.1} parent=1 // pred_check
      _
    $region19: #{tpu_custom_call.1} parent=1 // pred_check_branch
      %31 = sbr.rel (0) target = $region21
    $region20: #{tpu_custom_call.1} parent=1 // pred_region
      _
    $region21: #{tpu_custom_call.1} parent=1 // pred_fallthru
      _
    // Predicated region
    $region22: #{tpu_custom_call.1} parent=1 // pred_check
      _
    $region23: #{tpu_custom_call.1} parent=1 // pred_check_branch
      %33 = sbr.rel (0) target = $region25
    $region24: #{tpu_custom_call.1} parent=1 // pred_region
      %34 = dma.done [#allocation5], 8192
    $region25: #{tpu_custom_call.1} parent=1 // pred_fallthru
      _
    %vm36 = vcmask 261120
    %37 = vst.msk [vmem:[#allocation2] sm:$0xff] %vm36, 0.0
    %38 = vst.msk [vmem:[#allocation2 + $0x8] sm:$0xff] %vm36, 0.0
    %vm39 = vcmask 254976
    %40 = vst.msk [vmem:[#allocation2 + $0x10] sm:$0x3] %vm39, 0.0
    %41 = vst.msk [vmem:[#allocation2 + $0x1b0] sm:$0xff] %vm36, 0.0
    %42 = vst.msk [vmem:[#allocation2 + $0x1b8] sm:$0xff] %vm36, 0.0
    %43 = vst.msk [vmem:[#allocation2 + $0x1c0] sm:$0x3] %vm39, 0.0
    %s44 = scalar_lea.vmem [#allocation2], 408
    %45 = vst.msk [vmem:[%s44] sm:$0xff] %vm36, 0.0
    %46 = vst.msk [vmem:[%s44 + $0x8] sm:$0xff] %vm36, 0.0
    %47 = vst.msk [vmem:[%s44 + $0x10] sm:$0x3] %vm39, 0.0
    %48 = vst.msk [vmem:[%s44 + $0x1b0] sm:$0xff] %vm36, 0.0
    %49 = vst.msk [vmem:[%s44 + $0x1b8] sm:$0xff] %vm36, 0.0
    %50 = vst.msk [vmem:[%s44 + $0x1c0] sm:$0x3] %vm39, 0.0
    %vm51 = vcmask 253952
    %52 = vst.msk [vmem:[#allocation2] sm:$0x1] %vm51, 0.0
    %53 = vst.msk [vmem:[#allocation2 + $0x18] sm:$0x1] %vm51, 0.0
    %54 = vst.msk [vmem:[#allocation2 + $0x30] sm:$0x1] %vm51, 0.0
    %55 = vst.msk [vmem:[#allocation2 + $0x48] sm:$0x1] %vm51, 0.0
    %56 = vst.msk [vmem:[#allocation2 + $0x60] sm:$0x1] %vm51, 0.0
    %57 = vst.msk [vmem:[#allocation2 + $0x78] sm:$0x1] %vm51, 0.0
    %58 = vst.msk [vmem:[#allocation2 + $0x90] sm:$0x1] %vm51, 0.0
    %59 = vst.msk [vmem:[#allocation2 + $0xa8] sm:$0x1] %vm51, 0.0
    %60 = vst.msk [vmem:[#allocation2 + $0xc0] sm:$0x1] %vm51, 0.0
    %61 = vst.msk [vmem:[#allocation2 + $0xd8] sm:$0x1] %vm51, 0.0
    %62 = vst.msk [vmem:[#allocation2 + $0xf0] sm:$0x1] %vm51, 0.0
    %63 = vst.msk [vmem:[#allocation2 + $0x108] sm:$0x1] %vm51, 0.0
    %64 = vst.msk [vmem:[#allocation2 + $0x120] sm:$0x1] %vm51, 0.0
    %65 = vst.msk [vmem:[#allocation2 + $0x138] sm:$0x1] %vm51, 0.0
    %66 = vst.msk [vmem:[#allocation2 + $0x150] sm:$0x1] %vm51, 0.0
    %67 = vst.msk [vmem:[#allocation2 + $0x168] sm:$0x1] %vm51, 0.0
    %68 = vst.msk [vmem:[#allocation2 + $0x180] sm:$0x1] %vm51, 0.0
    %69 = vst.msk [vmem:[#allocation2 + $0x198] sm:$0x1] %vm51, 0.0
    %70 = vst.msk [vmem:[#allocation2 + $0x1b0] sm:$0x1] %vm51, 0.0
    %71 = vst.msk [vmem:[#allocation2 + $0x1c8] sm:$0x1] %vm51, 0.0
    %72 = vst.msk [vmem:[#allocation2 + $0x1e0] sm:$0x1] %vm51, 0.0
    %73 = vst.msk [vmem:[#allocation2 + $0x1f8] sm:$0x1] %vm51, 0.0
    %74 = vst.msk [vmem:[#allocation2 + $0x210] sm:$0x1] %vm51, 0.0
    %75 = vst.msk [vmem:[#allocation2 + $0x228] sm:$0x1] %vm51, 0.0
    %76 = vst.msk [vmem:[#allocation2 + $0x240] sm:$0x1] %vm51, 0.0
    %77 = vst.msk [vmem:[#allocation2 + $0x258] sm:$0x1] %vm51, 0.0
    %78 = vst.msk [vmem:[#allocation2 + $0x270] sm:$0x1] %vm51, 0.0
    %79 = vst.msk [vmem:[#allocation2 + $0x288] sm:$0x1] %vm51, 0.0
    %80 = vst.msk [vmem:[#allocation2 + $0x2a0] sm:$0x1] %vm51, 0.0
    %81 = vst.msk [vmem:[#allocation2 + $0x2b8] sm:$0x1] %vm51, 0.0
    %82 = vst.msk [vmem:[#allocation2 + $0x2d0] sm:$0x1] %vm51, 0.0
    %83 = vst.msk [vmem:[#allocation2 + $0x2e8] sm:$0x1] %vm51, 0.0
    %84 = vst.msk [vmem:[#allocation2 + $0x300] sm:$0x1] %vm51, 0.0
    %85 = vst.msk [vmem:[#allocation2 + $0x318] sm:$0x1] %vm51, 0.0
    %86 = vst.msk [vmem:[#allocation2 + $0x330] sm:$0x1] %vm51, 0.0
    %87 = vst.msk [vmem:[#allocation2 + $0x348] sm:$0x1] %vm51, 0.0
    %88 = vst.msk [vmem:[#allocation2 + $0x11] sm:$0x1] %vm51, 0.0
    %89 = vst.msk [vmem:[#allocation2 + $0x29] sm:$0x1] %vm51, 0.0
    %90 = vst.msk [vmem:[#allocation2 + $0x41] sm:$0x1] %vm51, 0.0
    %91 = vst.msk [vmem:[#allocation2 + $0x59] sm:$0x1] %vm51, 0.0
    %92 = vst.msk [vmem:[#allocation2 + $0x71] sm:$0x1] %vm51, 0.0
    %93 = vst.msk [vmem:[#allocation2 + $0x89] sm:$0x1] %vm51, 0.0
    %94 = vst.msk [vmem:[#allocation2 + $0xa1] sm:$0x1] %vm51, 0.0
    %95 = vst.msk [vmem:[#allocation2 + $0xb9] sm:$0x1] %vm51, 0.0
    %96 = vst.msk [vmem:[#allocation2 + $0xd1] sm:$0x1] %vm51, 0.0
    %97 = vst.msk [vmem:[#allocation2 + $0xe9] sm:$0x1] %vm51, 0.0
    %98 = vst.msk [vmem:[#allocation2 + $0x101] sm:$0x1] %vm51, 0.0
    %99 = vst.msk [vmem:[#allocation2 + $0x119] sm:$0x1] %vm51, 0.0
    %100 = vst.msk [vmem:[#allocation2 + $0x131] sm:$0x1] %vm51, 0.0
    %101 = vst.msk [vmem:[#allocation2 + $0x149] sm:$0x1] %vm51, 0.0
    %102 = vst.msk [vmem:[#allocation2 + $0x161] sm:$0x1] %vm51, 0.0
    %103 = vst.msk [vmem:[#allocation2 + $0x179] sm:$0x1] %vm51, 0.0
    %104 = vst.msk [vmem:[#allocation2 + $0x191] sm:$0x1] %vm51, 0.0
    %105 = vst.msk [vmem:[#allocation2 + $0x1a9] sm:$0x1] %vm51, 0.0
    %106 = vst.msk [vmem:[#allocation2 + $0x1c1] sm:$0x1] %vm51, 0.0
    %107 = vst.msk [vmem:[#allocation2 + $0x1d9] sm:$0x1] %vm51, 0.0
    %108 = vst.msk [vmem:[#allocation2 + $0x1f1] sm:$0x1] %vm51, 0.0
    %109 = vst.msk [vmem:[#allocation2 + $0x209] sm:$0x1] %vm51, 0.0
    %110 = vst.msk [vmem:[#allocation2 + $0x221] sm:$0x1] %vm51, 0.0
    %111 = vst.msk [vmem:[#allocation2 + $0x239] sm:$0x1] %vm51, 0.0
    %112 = vst.msk [vmem:[#allocation2 + $0x251] sm:$0x1] %vm51, 0.0
    %113 = vst.msk [vmem:[#allocation2 + $0x269] sm:$0x1] %vm51, 0.0
    %114 = vst.msk [vmem:[#allocation2 + $0x281] sm:$0x1] %vm51, 0.0
    %115 = vst.msk [vmem:[#allocation2 + $0x299] sm:$0x1] %vm51, 0.0
    %116 = vst.msk [vmem:[#allocation2 + $0x2b1] sm:$0x1] %vm51, 0.0
    %117 = vst.msk [vmem:[#allocation2 + $0x2c9] sm:$0x1] %vm51, 0.0
    %118 = vst.msk [vmem:[#allocation2 + $0x2e1] sm:$0x1] %vm51, 0.0
    %119 = vst.msk [vmem:[#allocation2 + $0x2f9] sm:$0x1] %vm51, 0.0
    %120 = vst.msk [vmem:[#allocation2 + $0x311] sm:$0x1] %vm51, 0.0
    %121 = vst.msk [vmem:[#allocation2 + $0x329] sm:$0x1] %vm51, 0.0
    %122 = vst.msk [vmem:[#allocation2 + $0x341] sm:$0x1] %vm51, 0.0
    %123 = vst.msk [vmem:[#allocation2 + $0x359] sm:$0x1] %vm51, 0.0
    %124 = vst.msk [vmem:[#allocation3] sm:$0xff] %vm36, 0.0
    %125 = vst.msk [vmem:[#allocation3 + $0x8] sm:$0xff] %vm36, 0.0
    %126 = vst.msk [vmem:[#allocation3 + $0x10] sm:$0x3] %vm39, 0.0
    %127 = vst.msk [vmem:[#allocation3 + $0x1b0] sm:$0xff] %vm36, 0.0
    %128 = vst.msk [vmem:[#allocation3 + $0x1b8] sm:$0xff] %vm36, 0.0
    %129 = vst.msk [vmem:[#allocation3 + $0x1c0] sm:$0x3] %vm39, 0.0
    %s130 = scalar_lea.vmem [#allocation3], 408
    %131 = vst.msk [vmem:[%s130] sm:$0xff] %vm36, 0.0
    %132 = vst.msk [vmem:[%s130 + $0x8] sm:$0xff] %vm36, 0.0
    %133 = vst.msk [vmem:[%s130 + $0x10] sm:$0x3] %vm39, 0.0
    %134 = vst.msk [vmem:[%s130 + $0x1b0] sm:$0xff] %vm36, 0.0
    %135 = vst.msk [vmem:[%s130 + $0x1b8] sm:$0xff] %vm36, 0.0
    %136 = vst.msk [vmem:[%s130 + $0x1c0] sm:$0x3] %vm39, 0.0
    %137 = vst.msk [vmem:[#allocation3] sm:$0x1] %vm51, 0.0
    %138 = vst.msk [vmem:[#allocation3 + $0x18] sm:$0x1] %vm51, 0.0
    %139 = vst.msk [vmem:[#allocation3 + $0x30] sm:$0x1] %vm51, 0.0
    %140 = vst.msk [vmem:[#allocation3 + $0x48] sm:$0x1] %vm51, 0.0
    %141 = vst.msk [vmem:[#allocation3 + $0x60] sm:$0x1] %vm51, 0.0
    %142 = vst.msk [vmem:[#allocation3 + $0x78] sm:$0x1] %vm51, 0.0
    %143 = vst.msk [vmem:[#allocation3 + $0x90] sm:$0x1] %vm51, 0.0
    %144 = vst.msk [vmem:[#allocation3 + $0xa8] sm:$0x1] %vm51, 0.0
    %145 = vst.msk [vmem:[#allocation3 + $0xc0] sm:$0x1] %vm51, 0.0
    %146 = vst.msk [vmem:[#allocation3 + $0xd8] sm:$0x1] %vm51, 0.0
    %147 = vst.msk [vmem:[#allocation3 + $0xf0] sm:$0x1] %vm51, 0.0
    %148 = vst.msk [vmem:[#allocation3 + $0x108] sm:$0x1] %vm51, 0.0
    %149 = vst.msk [vmem:[#allocation3 + $0x120] sm:$0x1] %vm51, 0.0
    %150 = vst.msk [vmem:[#allocation3 + $0x138] sm:$0x1] %vm51, 0.0
    %151 = vst.msk [vmem:[#allocation3 + $0x150] sm:$0x1] %vm51, 0.0
    %152 = vst.msk [vmem:[#allocation3 + $0x168] sm:$0x1] %vm51, 0.0
    %153 = vst.msk [vmem:[#allocation3 + $0x180] sm:$0x1] %vm51, 0.0
    %154 = vst.msk [vmem:[#allocation3 + $0x198] sm:$0x1] %vm51, 0.0
    %155 = vst.msk [vmem:[#allocation3 + $0x1b0] sm:$0x1] %vm51, 0.0
    %156 = vst.msk [vmem:[#allocation3 + $0x1c8] sm:$0x1] %vm51, 0.0
    %157 = vst.msk [vmem:[#allocation3 + $0x1e0] sm:$0x1] %vm51, 0.0
    %158 = vst.msk [vmem:[#allocation3 + $0x1f8] sm:$0x1] %vm51, 0.0
    %159 = vst.msk [vmem:[#allocation3 + $0x210] sm:$0x1] %vm51, 0.0
    %160 = vst.msk [vmem:[#allocation3 + $0x228] sm:$0x1] %vm51, 0.0
    %161 = vst.msk [vmem:[#allocation3 + $0x240] sm:$0x1] %vm51, 0.0
    %162 = vst.msk [vmem:[#allocation3 + $0x258] sm:$0x1] %vm51, 0.0
    %163 = vst.msk [vmem:[#allocation3 + $0x270] sm:$0x1] %vm51, 0.0
    %164 = vst.msk [vmem:[#allocation3 + $0x288] sm:$0x1] %vm51, 0.0
    %165 = vst.msk [vmem:[#allocation3 + $0x2a0] sm:$0x1] %vm51, 0.0
    %166 = vst.msk [vmem:[#allocation3 + $0x2b8] sm:$0x1] %vm51, 0.0
    %167 = vst.msk [vmem:[#allocation3 + $0x2d0] sm:$0x1] %vm51, 0.0
    %168 = vst.msk [vmem:[#allocation3 + $0x2e8] sm:$0x1] %vm51, 0.0
    %169 = vst.msk [vmem:[#allocation3 + $0x300] sm:$0x1] %vm51, 0.0
    %170 = vst.msk [vmem:[#allocation3 + $0x318] sm:$0x1] %vm51, 0.0
    %171 = vst.msk [vmem:[#allocation3 + $0x330] sm:$0x1] %vm51, 0.0
    %172 = vst.msk [vmem:[#allocation3 + $0x348] sm:$0x1] %vm51, 0.0
    %173 = vst.msk [vmem:[#allocation3 + $0x11] sm:$0x1] %vm51, 0.0
    %174 = vst.msk [vmem:[#allocation3 + $0x29] sm:$0x1] %vm51, 0.0
    %175 = vst.msk [vmem:[#allocation3 + $0x41] sm:$0x1] %vm51, 0.0
    %176 = vst.msk [vmem:[#allocation3 + $0x59] sm:$0x1] %vm51, 0.0
    %177 = vst.msk [vmem:[#allocation3 + $0x71] sm:$0x1] %vm51, 0.0
    %178 = vst.msk [vmem:[#allocation3 + $0x89] sm:$0x1] %vm51, 0.0
    %179 = vst.msk [vmem:[#allocation3 + $0xa1] sm:$0x1] %vm51, 0.0
    %180 = vst.msk [vmem:[#allocation3 + $0xb9] sm:$0x1] %vm51, 0.0
    %181 = vst.msk [vmem:[#allocation3 + $0xd1] sm:$0x1] %vm51, 0.0
    %182 = vst.msk [vmem:[#allocation3 + $0xe9] sm:$0x1] %vm51, 0.0
    %183 = vst.msk [vmem:[#allocation3 + $0x101] sm:$0x1] %vm51, 0.0
    %184 = vst.msk [vmem:[#allocation3 + $0x119] sm:$0x1] %vm51, 0.0
    %185 = vst.msk [vmem:[#allocation3 + $0x131] sm:$0x1] %vm51, 0.0
    %186 = vst.msk [vmem:[#allocation3 + $0x149] sm:$0x1] %vm51, 0.0
    %187 = vst.msk [vmem:[#allocation3 + $0x161] sm:$0x1] %vm51, 0.0
    %188 = vst.msk [vmem:[#allocation3 + $0x179] sm:$0x1] %vm51, 0.0
    %189 = vst.msk [vmem:[#allocation3 + $0x191] sm:$0x1] %vm51, 0.0
    %190 = vst.msk [vmem:[#allocation3 + $0x1a9] sm:$0x1] %vm51, 0.0
    %191 = vst.msk [vmem:[#allocation3 + $0x1c1] sm:$0x1] %vm51, 0.0
    %192 = vst.msk [vmem:[#allocation3 + $0x1d9] sm:$0x1] %vm51, 0.0
    %193 = vst.msk [vmem:[#allocation3 + $0x1f1] sm:$0x1] %vm51, 0.0
    %194 = vst.msk [vmem:[#allocation3 + $0x209] sm:$0x1] %vm51, 0.0
    %195 = vst.msk [vmem:[#allocation3 + $0x221] sm:$0x1] %vm51, 0.0
    %196 = vst.msk [vmem:[#allocation3 + $0x239] sm:$0x1] %vm51, 0.0
    %197 = vst.msk [vmem:[#allocation3 + $0x251] sm:$0x1] %vm51, 0.0
    %198 = vst.msk [vmem:[#allocation3 + $0x269] sm:$0x1] %vm51, 0.0
    %199 = vst.msk [vmem:[#allocation3 + $0x281] sm:$0x1] %vm51, 0.0
    %200 = vst.msk [vmem:[#allocation3 + $0x299] sm:$0x1] %vm51, 0.0
    %201 = vst.msk [vmem:[#allocation3 + $0x2b1] sm:$0x1] %vm51, 0.0
    %202 = vst.msk [vmem:[#allocation3 + $0x2c9] sm:$0x1] %vm51, 0.0
    %203 = vst.msk [vmem:[#allocation3 + $0x2e1] sm:$0x1] %vm51, 0.0
    %204 = vst.msk [vmem:[#allocation3 + $0x2f9] sm:$0x1] %vm51, 0.0
    %205 = vst.msk [vmem:[#allocation3 + $0x311] sm:$0x1] %vm51, 0.0
    %206 = vst.msk [vmem:[#allocation3 + $0x329] sm:$0x1] %vm51, 0.0
    %207 = vst.msk [vmem:[#allocation3 + $0x341] sm:$0x1] %vm51, 0.0
    %208 = vst.msk [vmem:[#allocation3 + $0x359] sm:$0x1] %vm51, 0.0
    %v209 = vld [vmem:[#allocation4] sm:$0xff]
    %v210 = vld [vmem:[#allocation4 + $0x8] sm:$0xff]
    %v211 = vld [vmem:[#allocation4 + $0x10] sm:$0xff]
    %v212 = vld [vmem:[#allocation4 + $0x18] sm:$0xff]
    %v213 = vld [vmem:[#allocation4 + $0x20] sm:$0xff]
    %v214 = vld [vmem:[#allocation4 + $0x28] sm:$0xff]
    %v215 = vld [vmem:[#allocation4 + $0x30] sm:$0xff]
    %v216 = vld [vmem:[#allocation4 + $0x38] sm:$0xff]
    %v217 = vld [vmem:[#allocation4 + $0x40] sm:$0xff]
    %v218 = vld [vmem:[#allocation4 + $0x48] sm:$0xff]
    %v219 = vld [vmem:[#allocation4 + $0x50] sm:$0xff]
    %v220 = vld [vmem:[#allocation4 + $0x58] sm:$0xff]
    %v221 = vld [vmem:[#allocation4 + $0x60] sm:$0xff]
    %v222 = vld [vmem:[#allocation4 + $0x68] sm:$0xff]
    %v223 = vld [vmem:[#allocation4 + $0x70] sm:$0xff]
    %v224 = vld [vmem:[#allocation4 + $0x78] sm:$0xff]
    %v225 = vld [vmem:[#allocation4 + $0x80] sm:$0xff]
    %v226 = vld [vmem:[#allocation4 + $0x88] sm:$0xff]
    %v227 = vld [vmem:[#allocation4 + $0x90] sm:$0xff]
    %v228 = vld [vmem:[#allocation4 + $0x98] sm:$0xff]
    %v229 = vld [vmem:[#allocation4 + $0xa0] sm:$0xff]
    %v230 = vld [vmem:[#allocation4 + $0xa8] sm:$0xff]
    %v231 = vld [vmem:[#allocation4 + $0xb0] sm:$0xff]
    %v232 = vld [vmem:[#allocation4 + $0xb8] sm:$0xff]
    %v233 = vld [vmem:[#allocation4 + $0xc0] sm:$0xff]
    %v234 = vld [vmem:[#allocation4 + $0xc8] sm:$0xff]
    %v235 = vld [vmem:[#allocation4 + $0xd0] sm:$0xff]
    %v236 = vld [vmem:[#allocation4 + $0xd8] sm:$0xff]
    %v237 = vld [vmem:[#allocation4 + $0xe0] sm:$0xff]
    %v238 = vld [vmem:[#allocation4 + $0xe8] sm:$0xff]
    %v239 = vld [vmem:[#allocation4 + $0xf0] sm:$0xff]
    %v240 = vld [vmem:[#allocation4 + $0xf8] sm:$0xff]
    %v241 = vld [vmem:[#allocation4 + $0x100] sm:$0xff]
    %v242 = vld [vmem:[#allocation4 + $0x108] sm:$0xff]
    %v243 = vld [vmem:[#allocation4 + $0x110] sm:$0xff]
    %v244 = vld [vmem:[#allocation4 + $0x118] sm:$0xff]
    %v245 = vld [vmem:[#allocation4 + $0x120] sm:$0xff]
    %v246 = vld [vmem:[#allocation4 + $0x128] sm:$0xff]
    %v247 = vld [vmem:[#allocation4 + $0x130] sm:$0xff]
    %v248 = vld [vmem:[#allocation4 + $0x138] sm:$0xff]
    %v249 = vld [vmem:[#allocation4 + $0x140] sm:$0xff]
    %v250 = vld [vmem:[#allocation4 + $0x148] sm:$0xff]
    %v251 = vld [vmem:[#allocation4 + $0x150] sm:$0xff]
    %v252 = vld [vmem:[#allocation4 + $0x158] sm:$0xff]
    %v253 = vld [vmem:[#allocation4 + $0x160] sm:$0xff]
    %v254 = vld [vmem:[#allocation4 + $0x168] sm:$0xff]
    %v255 = vld [vmem:[#allocation4 + $0x170] sm:$0xff]
    %v256 = vld [vmem:[#allocation4 + $0x178] sm:$0xff]
    %v257 = vld [vmem:[#allocation4 + $0x180] sm:$0xff]
    %v258 = vld [vmem:[#allocation4 + $0x188] sm:$0xff]
    %v259 = vld [vmem:[#allocation4 + $0x190] sm:$0xff]
    %v260 = vld [vmem:[#allocation4 + $0x198] sm:$0xff]
    %v261 = vld [vmem:[#allocation4 + $0x1a0] sm:$0xff]
    %v262 = vld [vmem:[#allocation4 + $0x1a8] sm:$0xff]
    %v263 = vld [vmem:[#allocation4 + $0x1b0] sm:$0xff]
    %v264 = vld [vmem:[#allocation4 + $0x1b8] sm:$0xff]
    %v265 = vld [vmem:[#allocation4 + $0x1c0] sm:$0xff]
    %v266 = vld [vmem:[#allocation4 + $0x1c8] sm:$0xff]
    %v267 = vld [vmem:[#allocation4 + $0x1d0] sm:$0xff]
    %v268 = vld [vmem:[#allocation4 + $0x1d8] sm:$0xff]
    %v269 = vld [vmem:[#allocation4 + $0x1e0] sm:$0xff]
    %v270 = vld [vmem:[#allocation4 + $0x1e8] sm:$0xff]
    %v271 = vld [vmem:[#allocation4 + $0x1f0] sm:$0xff]
    %v272 = vld [vmem:[#allocation4 + $0x1f8] sm:$0xff]
    %s273 = scalar_lea.vmem [#allocation2], 24
    %274 = vst.msk [vmem:[%s273 + $0x1] sm:$0xff] %vm36, %v209
    %275 = vst.msk [vmem:[%s273 + $0x9] sm:$0xff] %vm36, %v210
    %276 = vst.msk [vmem:[%s273 + $0x19] sm:$0xff] %vm36, %v211
    %277 = vst.msk [vmem:[%s273 + $0x21] sm:$0xff] %vm36, %v212
    %278 = vst.msk [vmem:[%s273 + $0x31] sm:$0xff] %vm36, %v213
    %279 = vst.msk [vmem:[%s273 + $0x39] sm:$0xff] %vm36, %v214
    %280 = vst.msk [vmem:[%s273 + $0x49] sm:$0xff] %vm36, %v215
    %281 = vst.msk [vmem:[%s273 + $0x51] sm:$0xff] %vm36, %v216
    %282 = vst.msk [vmem:[%s273 + $0x61] sm:$0xff] %vm36, %v217
    %283 = vst.msk [vmem:[%s273 + $0x69] sm:$0xff] %vm36, %v218
    %284 = vst.msk [vmem:[%s273 + $0x79] sm:$0xff] %vm36, %v219
    %285 = vst.msk [vmem:[%s273 + $0x81] sm:$0xff] %vm36, %v220
    %286 = vst.msk [vmem:[%s273 + $0x91] sm:$0xff] %vm36, %v221
    %287 = vst.msk [vmem:[%s273 + $0x99] sm:$0xff] %vm36, %v222
    %288 = vst.msk [vmem:[%s273 + $0xa9] sm:$0xff] %vm36, %v223
    %289 = vst.msk [vmem:[%s273 + $0xb1] sm:$0xff] %vm36, %v224
    %290 = vst.msk [vmem:[%s273 + $0xc1] sm:$0xff] %vm36, %v225
    %291 = vst.msk [vmem:[%s273 + $0xc9] sm:$0xff] %vm36, %v226
    %292 = vst.msk [vmem:[%s273 + $0xd9] sm:$0xff] %vm36, %v227
    %293 = vst.msk [vmem:[%s273 + $0xe1] sm:$0xff] %vm36, %v228
    %294 = vst.msk [vmem:[%s273 + $0xf1] sm:$0xff] %vm36, %v229
    %295 = vst.msk [vmem:[%s273 + $0xf9] sm:$0xff] %vm36, %v230
    %296 = vst.msk [vmem:[%s273 + $0x109] sm:$0xff] %vm36, %v231
    %297 = vst.msk [vmem:[%s273 + $0x111] sm:$0xff] %vm36, %v232
    %298 = vst.msk [vmem:[%s273 + $0x121] sm:$0xff] %vm36, %v233
    %299 = vst.msk [vmem:[%s273 + $0x129] sm:$0xff] %vm36, %v234
    %300 = vst.msk [vmem:[%s273 + $0x139] sm:$0xff] %vm36, %v235
    %301 = vst.msk [vmem:[%s273 + $0x141] sm:$0xff] %vm36, %v236
    %302 = vst.msk [vmem:[%s273 + $0x151] sm:$0xff] %vm36, %v237
    %303 = vst.msk [vmem:[%s273 + $0x159] sm:$0xff] %vm36, %v238
    %304 = vst.msk [vmem:[%s273 + $0x169] sm:$0xff] %vm36, %v239
    %305 = vst.msk [vmem:[%s273 + $0x171] sm:$0xff] %vm36, %v240
    %306 = vst.msk [vmem:[%s273 + $0x1b1] sm:$0xff] %vm36, %v241
    %307 = vst.msk [vmem:[%s273 + $0x1b9] sm:$0xff] %vm36, %v242
    %308 = vst.msk [vmem:[%s273 + $0x1c9] sm:$0xff] %vm36, %v243
    %309 = vst.msk [vmem:[%s273 + $0x1d1] sm:$0xff] %vm36, %v244
    %310 = vst.msk [vmem:[%s273 + $0x1e1] sm:$0xff] %vm36, %v245
    %311 = vst.msk [vmem:[%s273 + $0x1e9] sm:$0xff] %vm36, %v246
    %312 = vst.msk [vmem:[%s273 + $0x1f9] sm:$0xff] %vm36, %v247
    %313 = vst.msk [vmem:[%s273 + $0x201] sm:$0xff] %vm36, %v248
    %314 = vst.msk [vmem:[%s273 + $0x211] sm:$0xff] %vm36, %v249
    %315 = vst.msk [vmem:[%s273 + $0x219] sm:$0xff] %vm36, %v250
    %316 = vst.msk [vmem:[%s273 + $0x229] sm:$0xff] %vm36, %v251
    %317 = vst.msk [vmem:[%s273 + $0x231] sm:$0xff] %vm36, %v252
    %318 = vst.msk [vmem:[%s273 + $0x241] sm:$0xff] %vm36, %v253
    %319 = vst.msk [vmem:[%s273 + $0x249] sm:$0xff] %vm36, %v254
    %320 = vst.msk [vmem:[%s273 + $0x259] sm:$0xff] %vm36, %v255
    %321 = vst.msk [vmem:[%s273 + $0x261] sm:$0xff] %vm36, %v256
    %322 = vst.msk [vmem:[%s273 + $0x271] sm:$0xff] %vm36, %v257
    %323 = vst.msk [vmem:[%s273 + $0x279] sm:$0xff] %vm36, %v258
    %324 = vst.msk [vmem:[%s273 + $0x289] sm:$0xff] %vm36, %v259
    %325 = vst.msk [vmem:[%s273 + $0x291] sm:$0xff] %vm36, %v260
    %326 = vst.msk [vmem:[%s273 + $0x2a1] sm:$0xff] %vm36, %v261
    %327 = vst.msk [vmem:[%s273 + $0x2a9] sm:$0xff] %vm36, %v262
    %328 = vst.msk [vmem:[%s273 + $0x2b9] sm:$0xff] %vm36, %v263
    %329 = vst.msk [vmem:[%s273 + $0x2c1] sm:$0xff] %vm36, %v264
    %330 = vst.msk [vmem:[%s273 + $0x2d1] sm:$0xff] %vm36, %v265
    %331 = vst.msk [vmem:[%s273 + $0x2d9] sm:$0xff] %vm36, %v266
    %332 = vst.msk [vmem:[%s273 + $0x2e9] sm:$0xff] %vm36, %v267
    %333 = vst.msk [vmem:[%s273 + $0x2f1] sm:$0xff] %vm36, %v268
    %334 = vst.msk [vmem:[%s273 + $0x301] sm:$0xff] %vm36, %v269
    %335 = vst.msk [vmem:[%s273 + $0x309] sm:$0xff] %vm36, %v270
    %336 = vst.msk [vmem:[%s273 + $0x319] sm:$0xff] %vm36, %v271
    %337 = vst.msk [vmem:[%s273 + $0x321] sm:$0xff] %vm36, %v272
    %v338 = vld [vmem:[#allocation2] sm:$0xff]
    %v339 = vld [vmem:[#allocation2 + $0x8] sm:$0xff]
    %v340 = vld [vmem:[#allocation2 + $0x18] sm:$0xff]
    %v341 = vld [vmem:[#allocation2 + $0x20] sm:$0xff]
    %v342 = vld [vmem:[#allocation2 + $0x30] sm:$0xff]
    %v343 = vld [vmem:[#allocation2 + $0x38] sm:$0xff]
    %v344 = vld [vmem:[#allocation2 + $0x48] sm:$0xff]
    %v345 = vld [vmem:[#allocation2 + $0x50] sm:$0xff]
    %v346 = vld [vmem:[#allocation2 + $0x60] sm:$0xff]
    %v347 = vld [vmem:[#allocation2 + $0x68] sm:$0xff]
    %v348 = vld [vmem:[#allocation2 + $0x78] sm:$0xff]
    %v349 = vld [vmem:[#allocation2 + $0x80] sm:$0xff]
    %v350 = vld [vmem:[#allocation2 + $0x90] sm:$0xff]
    %v351 = vld [vmem:[#allocation2 + $0x98] sm:$0xff]
    %v352 = vld [vmem:[#allocation2 + $0xa8] sm:$0xff]
    %v353 = vld [vmem:[#allocation2 + $0xb0] sm:$0xff]
    %v354 = vld [vmem:[#allocation2 + $0xc0] sm:$0xff]
    %v355 = vld [vmem:[#allocation2 + $0xc8] sm:$0xff]
    %v356 = vld [vmem:[#allocation2 + $0xd8] sm:$0xff]
    %v357 = vld [vmem:[#allocation2 + $0xe0] sm:$0xff]
    %v358 = vld [vmem:[#allocation2 + $0xf0] sm:$0xff]
    %v359 = vld [vmem:[#allocation2 + $0xf8] sm:$0xff]
    %v360 = vld [vmem:[#allocation2 + $0x108] sm:$0xff]
    %v361 = vld [vmem:[#allocation2 + $0x110] sm:$0xff]
    %v362 = vld [vmem:[#allocation2 + $0x120] sm:$0xff]
    %v363 = vld [vmem:[#allocation2 + $0x128] sm:$0xff]
    %v364 = vld [vmem:[#allocation2 + $0x138] sm:$0xff]
    %v365 = vld [vmem:[#allocation2 + $0x140] sm:$0xff]
    %v366 = vld [vmem:[#allocation2 + $0x150] sm:$0xff]
    %v367 = vld [vmem:[#allocation2 + $0x158] sm:$0xff]
    %v368 = vld [vmem:[#allocation2 + $0x168] sm:$0xff]
    %v369 = vld [vmem:[#allocation2 + $0x170] sm:$0xff]
    %v370 = vld [vmem:[#allocation2 + $0x1b0] sm:$0xff]
    %v371 = vld [vmem:[#allocation2 + $0x1b8] sm:$0xff]
    %v372 = vld [vmem:[#allocation2 + $0x1c8] sm:$0xff]
    %v373 = vld [vmem:[#allocation2 + $0x1d0] sm:$0xff]
    %v374 = vld [vmem:[#allocation2 + $0x1e0] sm:$0xff]
    %v375 = vld [vmem:[#allocation2 + $0x1e8] sm:$0xff]
    %v376 = vld [vmem:[#allocation2 + $0x1f8] sm:$0xff]
    %v377 = vld [vmem:[#allocation2 + $0x200] sm:$0xff]
    %v378 = vld [vmem:[#allocation2 + $0x210] sm:$0xff]
    %v379 = vld [vmem:[#allocation2 + $0x218] sm:$0xff]
    %v380 = vld [vmem:[#allocation2 + $0x228] sm:$0xff]
    %v381 = vld [vmem:[#allocation2 + $0x230] sm:$0xff]
    %v382 = vld [vmem:[#allocation2 + $0x240] sm:$0xff]
    %v383 = vld [vmem:[#allocation2 + $0x248] sm:$0xff]
    %v384 = vld [vmem:[#allocation2 + $0x258] sm:$0xff]
    %v385 = vld [vmem:[#allocation2 + $0x260] sm:$0xff]
    %v386 = vld [vmem:[#allocation2 + $0x270] sm:$0xff]
    %v387 = vld [vmem:[#allocation2 + $0x278] sm:$0xff]
    %v388 = vld [vmem:[#allocation2 + $0x288] sm:$0xff]
    %v389 = vld [vmem:[#allocation2 + $0x290] sm:$0xff]
    %v390 = vld [vmem:[#allocation2 + $0x2a0] sm:$0xff]
    %v391 = vld [vmem:[#allocation2 + $0x2a8] sm:$0xff]
    %v392 = vld [vmem:[#allocation2 + $0x2b8] sm:$0xff]
    %v393 = vld [vmem:[#allocation2 + $0x2c0] sm:$0xff]
    %v394 = vld [vmem:[#allocation2 + $0x2d0] sm:$0xff]
    %v395 = vld [vmem:[#allocation2 + $0x2d8] sm:$0xff]
    %v396 = vld [vmem:[#allocation2 + $0x2e8] sm:$0xff]
    %v397 = vld [vmem:[#allocation2 + $0x2f0] sm:$0xff]
    %v398 = vld [vmem:[#allocation2 + $0x300] sm:$0xff]
    %v399 = vld [vmem:[#allocation2 + $0x308] sm:$0xff]
    %v400 = vld [vmem:[#allocation2 + $0x318] sm:$0xff]
    %v401 = vld [vmem:[#allocation2 + $0x320] sm:$0xff]
    %v402 = vpack.c.bf16 %v339, %v338
    %v403 = vpack.c.bf16 %v341, %v340
    %v404 = vpack.c.bf16 %v343, %v342
    %v405 = vpack.c.bf16 %v345, %v344
    %v406 = vpack.c.bf16 %v347, %v346
    %v407 = vpack.c.bf16 %v349, %v348
    %v408 = vpack.c.bf16 %v351, %v350
    %v409 = vpack.c.bf16 %v353, %v352
    %v410 = vpack.c.bf16 %v355, %v354
    %v411 = vpack.c.bf16 %v357, %v356
    %v412 = vpack.c.bf16 %v359, %v358
    %v413 = vpack.c.bf16 %v361, %v360
    %v414 = vpack.c.bf16 %v363, %v362
    %v415 = vpack.c.bf16 %v365, %v364
    %v416 = vpack.c.bf16 %v367, %v366
    %v417 = vpack.c.bf16 %v369, %v368
    %v418 = vpack.c.bf16 %v371, %v370
    %v419 = vpack.c.bf16 %v373, %v372
    %v420 = vpack.c.bf16 %v375, %v374
    %v421 = vpack.c.bf16 %v377, %v376
    %v422 = vpack.c.bf16 %v379, %v378
    %v423 = vpack.c.bf16 %v381, %v380
    %v424 = vpack.c.bf16 %v383, %v382
    %v425 = vpack.c.bf16 %v385, %v384
    %v426 = vpack.c.bf16 %v387, %v386
    %v427 = vpack.c.bf16 %v389, %v388
    %v428 = vpack.c.bf16 %v391, %v390
    %v429 = vpack.c.bf16 %v393, %v392
    %v430 = vpack.c.bf16 %v395, %v394
    %v431 = vpack.c.bf16 %v397, %v396
    %v432 = vpack.c.bf16 %v399, %v398
    %v433 = vpack.c.bf16 %v401, %v400
    %v434 = vld [vmem:[#allocation2 + $0x1] sm:$0xff]
    %v435 = vld [vmem:[#allocation2 + $0x9] sm:$0xff]
    %v436 = vld [vmem:[#allocation2 + $0x19] sm:$0xff]
    %v437 = vld [vmem:[#allocation2 + $0x21] sm:$0xff]
    %v438 = vld [vmem:[#allocation2 + $0x31] sm:$0xff]
    %v439 = vld [vmem:[#allocation2 + $0x39] sm:$0xff]
    %v440 = vld [vmem:[#allocation2 + $0x49] sm:$0xff]
    %v441 = vld [vmem:[#allocation2 + $0x51] sm:$0xff]
    %v442 = vld [vmem:[#allocation2 + $0x61] sm:$0xff]
    %v443 = vld [vmem:[#allocation2 + $0x69] sm:$0xff]
    %v444 = vld [vmem:[#allocation2 + $0x79] sm:$0xff]
    %v445 = vld [vmem:[#allocation2 + $0x81] sm:$0xff]
    %v446 = vld [vmem:[#allocation2 + $0x91] sm:$0xff]
    %v447 = vld [vmem:[#allocation2 + $0x99] sm:$0xff]
    %v448 = vld [vmem:[#allocation2 + $0xa9] sm:$0xff]
    %v449 = vld [vmem:[#allocation2 + $0xb1] sm:$0xff]
    %v450 = vld [vmem:[#allocation2 + $0xc1] sm:$0xff]
    %v451 = vld [vmem:[#allocation2 + $0xc9] sm:$0xff]
    %v452 = vld [vmem:[#allocation2 + $0xd9] sm:$0xff]
    %v453 = vld [vmem:[#allocation2 + $0xe1] sm:$0xff]
    %v454 = vld [vmem:[#allocation2 + $0xf1] sm:$0xff]
    %v455 = vld [vmem:[#allocation2 + $0xf9] sm:$0xff]
    %v456 = vld [vmem:[#allocation2 + $0x109] sm:$0xff]
    %v457 = vld [vmem:[#allocation2 + $0x111] sm:$0xff]
    %v458 = vld [vmem:[#allocation2 + $0x121] sm:$0xff]
    %v459 = vld [vmem:[#allocation2 + $0x129] sm:$0xff]
    %v460 = vld [vmem:[#allocation2 + $0x139] sm:$0xff]
    %v461 = vld [vmem:[#allocation2 + $0x141] sm:$0xff]
    %v462 = vld [vmem:[#allocation2 + $0x151] sm:$0xff]
    %v463 = vld [vmem:[#allocation2 + $0x159] sm:$0xff]
    %v464 = vld [vmem:[#allocation2 + $0x169] sm:$0xff]
    %v465 = vld [vmem:[#allocation2 + $0x171] sm:$0xff]
    %v466 = vld [vmem:[#allocation2 + $0x1b1] sm:$0xff]
    %v467 = vld [vmem:[#allocation2 + $0x1b9] sm:$0xff]
    %v468 = vld [vmem:[#allocation2 + $0x1c9] sm:$0xff]
    %v469 = vld [vmem:[#allocation2 + $0x1d1] sm:$0xff]
    %v470 = vld [vmem:[#allocation2 + $0x1e1] sm:$0xff]
    %v471 = vld [vmem:[#allocation2 + $0x1e9] sm:$0xff]
    %v472 = vld [vmem:[#allocation2 + $0x1f9] sm:$0xff]
    %v473 = vld [vmem:[#allocation2 + $0x201] sm:$0xff]
    %v474 = vld [vmem:[#allocation2 + $0x211] sm:$0xff]
    %v475 = vld [vmem:[#allocation2 + $0x219] sm:$0xff]
    %v476 = vld [vmem:[#allocation2 + $0x229] sm:$0xff]
    %v477 = vld [vmem:[#allocation2 + $0x231] sm:$0xff]
    %v478 = vld [vmem:[#allocation2 + $0x241] sm:$0xff]
    %v479 = vld [vmem:[#allocation2 + $0x249] sm:$0xff]
    %v480 = vld [vmem:[#allocation2 + $0x259] sm:$0xff]
    %v481 = vld [vmem:[#allocation2 + $0x261] sm:$0xff]
    %v482 = vld [vmem:[#allocation2 + $0x271] sm:$0xff]
    %v483 = vld [vmem:[#allocation2 + $0x279] sm:$0xff]
    %v484 = vld [vmem:[#allocation2 + $0x289] sm:$0xff]
    %v485 = vld [vmem:[#allocation2 + $0x291] sm:$0xff]
    %v486 = vld [vmem:[#allocation2 + $0x2a1] sm:$0xff]
    %v487 = vld [vmem:[#allocation2 + $0x2a9] sm:$0xff]
    %v488 = vld [vmem:[#allocation2 + $0x2b9] sm:$0xff]
    %v489 = vld [vmem:[#allocation2 + $0x2c1] sm:$0xff]
    %v490 = vld [vmem:[#allocation2 + $0x2d1] sm:$0xff]
    %v491 = vld [vmem:[#allocation2 + $0x2d9] sm:$0xff]
    %v492 = vld [vmem:[#allocation2 + $0x2e9] sm:$0xff]
    %v493 = vld [vmem:[#allocation2 + $0x2f1] sm:$0xff]
    %v494 = vld [vmem:[#allocation2 + $0x301] sm:$0xff]
    %v495 = vld [vmem:[#allocation2 + $0x309] sm:$0xff]
    %v496 = vld [vmem:[#allocation2 + $0x319] sm:$0xff]
    %v497 = vld [vmem:[#allocation2 + $0x321] sm:$0xff]
    %v498 = vpack.c.bf16 %v435, %v434
    %v499 = vpack.c.bf16 %v437, %v436
    %v500 = vpack.c.bf16 %v439, %v438
    %v501 = vpack.c.bf16 %v441, %v440
    %v502 = vpack.c.bf16 %v443, %v442
    %v503 = vpack.c.bf16 %v445, %v444
    %v504 = vpack.c.bf16 %v447, %v446
    %v505 = vpack.c.bf16 %v449, %v448
    %v506 = vpack.c.bf16 %v451, %v450
    %v507 = vpack.c.bf16 %v453, %v452
    %v508 = vpack.c.bf16 %v455, %v454
    %v509 = vpack.c.bf16 %v457, %v456
    %v510 = vpack.c.bf16 %v459, %v458
    %v511 = vpack.c.bf16 %v461, %v460
    %v512 = vpack.c.bf16 %v463, %v462
    %v513 = vpack.c.bf16 %v465, %v464
    %v514 = vpack.c.bf16 %v467, %v466
    %v515 = vpack.c.bf16 %v469, %v468
    %v516 = vpack.c.bf16 %v471, %v470
    %v517 = vpack.c.bf16 %v473, %v472
    %v518 = vpack.c.bf16 %v475, %v474
    %v519 = vpack.c.bf16 %v477, %v476
    %v520 = vpack.c.bf16 %v479, %v478
    %v521 = vpack.c.bf16 %v481, %v480
    %v522 = vpack.c.bf16 %v483, %v482
    %v523 = vpack.c.bf16 %v485, %v484
    %v524 = vpack.c.bf16 %v487, %v486
    %v525 = vpack.c.bf16 %v489, %v488
    %v526 = vpack.c.bf16 %v491, %v490
    %v527 = vpack.c.bf16 %v493, %v492
    %v528 = vpack.c.bf16 %v495, %v494
    %v529 = vpack.c.bf16 %v497, %v496
    %v530 = vld [vmem:[#allocation2 + $0x2] sm:$0xff]
    %v531 = vld [vmem:[#allocation2 + $0xa] sm:$0xff]
    %v532 = vld [vmem:[#allocation2 + $0x1a] sm:$0xff]
    %v533 = vld [vmem:[#allocation2 + $0x22] sm:$0xff]
    %v534 = vld [vmem:[#allocation2 + $0x32] sm:$0xff]
    %v535 = vld [vmem:[#allocation2 + $0x3a] sm:$0xff]
    %v536 = vld [vmem:[#allocation2 + $0x4a] sm:$0xff]
    %v537 = vld [vmem:[#allocation2 + $0x52] sm:$0xff]
    %v538 = vld [vmem:[#allocation2 + $0x62] sm:$0xff]
    %v539 = vld [vmem:[#allocation2 + $0x6a] sm:$0xff]
    %v540 = vld [vmem:[#allocation2 + $0x7a] sm:$0xff]
    %v541 = vld [vmem:[#allocation2 + $0x82] sm:$0xff]
    %v542 = vld [vmem:[#allocation2 + $0x92] sm:$0xff]
    %v543 = vld [vmem:[#allocation2 + $0x9a] sm:$0xff]
    %v544 = vld [vmem:[#allocation2 + $0xaa] sm:$0xff]
    %v545 = vld [vmem:[#allocation2 + $0xb2] sm:$0xff]
    %v546 = vld [vmem:[#allocation2 + $0xc2] sm:$0xff]
    %v547 = vld [vmem:[#allocation2 + $0xca] sm:$0xff]
    %v548 = vld [vmem:[#allocation2 + $0xda] sm:$0xff]
    %v549 = vld [vmem:[#allocation2 + $0xe2] sm:$0xff]
    %v550 = vld [vmem:[#allocation2 + $0xf2] sm:$0xff]
    %v551 = vld [vmem:[#allocation2 + $0xfa] sm:$0xff]
    %v552 = vld [vmem:[#allocation2 + $0x10a] sm:$0xff]
    %v553 = vld [vmem:[#allocation2 + $0x112] sm:$0xff]
    %v554 = vld [vmem:[#allocation2 + $0x122] sm:$0xff]
    %v555 = vld [vmem:[#allocation2 + $0x12a] sm:$0xff]
    %v556 = vld [vmem:[#allocation2 + $0x13a] sm:$0xff]
    %v557 = vld [vmem:[#allocation2 + $0x142] sm:$0xff]
    %v558 = vld [vmem:[#allocation2 + $0x152] sm:$0xff]
    %v559 = vld [vmem:[#allocation2 + $0x15a] sm:$0xff]
    %v560 = vld [vmem:[#allocation2 + $0x16a] sm:$0xff]
    %v561 = vld [vmem:[#allocation2 + $0x172] sm:$0xff]
    %v562 = vld [vmem:[#allocation2 + $0x1b2] sm:$0xff]
    %v563 = vld [vmem:[#allocation2 + $0x1ba] sm:$0xff]
    %v564 = vld [vmem:[#allocation2 + $0x1ca] sm:$0xff]
    %v565 = vld [vmem:[#allocation2 + $0x1d2] sm:$0xff]
    %v566 = vld [vmem:[#allocation2 + $0x1e2] sm:$0xff]
    %v567 = vld [vmem:[#allocation2 + $0x1ea] sm:$0xff]
    %v568 = vld [vmem:[#allocation2 + $0x1fa] sm:$0xff]
    %v569 = vld [vmem:[#allocation2 + $0x202] sm:$0xff]
    %v570 = vld [vmem:[#allocation2 + $0x212] sm:$0xff]
    %v571 = vld [vmem:[#allocation2 + $0x21a] sm:$0xff]
    %v572 = vld [vmem:[#allocation2 + $0x22a] sm:$0xff]
    %v573 = vld [vmem:[#allocation2 + $0x232] sm:$0xff]
    %v574 = vld [vmem:[#allocation2 + $0x242] sm:$0xff]
    %v575 = vld [vmem:[#allocation2 + $0x24a] sm:$0xff]
    %v576 = vld [vmem:[#allocation2 + $0x25a] sm:$0xff]
    %v577 = vld [vmem:[#allocation2 + $0x262] sm:$0xff]
    %v578 = vld [vmem:[#allocation2 + $0x272] sm:$0xff]
    %v579 = vld [vmem:[#allocation2 + $0x27a] sm:$0xff]
    %v580 = vld [vmem:[#allocation2 + $0x28a] sm:$0xff]
    %v581 = vld [vmem:[#allocation2 + $0x292] sm:$0xff]
    %v582 = vld [vmem:[#allocation2 + $0x2a2] sm:$0xff]
    %v583 = vld [vmem:[#allocation2 + $0x2aa] sm:$0xff]
    %v584 = vld [vmem:[#allocation2 + $0x2ba] sm:$0xff]
    %v585 = vld [vmem:[#allocation2 + $0x2c2] sm:$0xff]
    %v586 = vld [vmem:[#allocation2 + $0x2d2] sm:$0xff]
    %v587 = vld [vmem:[#allocation2 + $0x2da] sm:$0xff]
    %v588 = vld [vmem:[#allocation2 + $0x2ea] sm:$0xff]
    %v589 = vld [vmem:[#allocation2 + $0x2f2] sm:$0xff]
    %v590 = vld [vmem:[#allocation2 + $0x302] sm:$0xff]
    %v591 = vld [vmem:[#allocation2 + $0x30a] sm:$0xff]
    %v592 = vld [vmem:[#allocation2 + $0x31a] sm:$0xff]
    %v593 = vld [vmem:[#allocation2 + $0x322] sm:$0xff]
    %v594 = vpack.c.bf16 %v531, %v530
    %v595 = vpack.c.bf16 %v533, %v532
    %v596 = vpack.c.bf16 %v535, %v534
    %v597 = vpack.c.bf16 %v537, %v536
    %v598 = vpack.c.bf16 %v539, %v538
    %v599 = vpack.c.bf16 %v541, %v540
    %v600 = vpack.c.bf16 %v543, %v542
    %v601 = vpack.c.bf16 %v545, %v544
    %v602 = vpack.c.bf16 %v547, %v546
    %v603 = vpack.c.bf16 %v549, %v548
    %v604 = vpack.c.bf16 %v551, %v550
    %v605 = vpack.c.bf16 %v553, %v552
    %v606 = vpack.c.bf16 %v555, %v554
    %v607 = vpack.c.bf16 %v557, %v556
    %v608 = vpack.c.bf16 %v559, %v558
    %v609 = vpack.c.bf16 %v561, %v560
    %v610 = vpack.c.bf16 %v563, %v562
    %v611 = vpack.c.bf16 %v565, %v564
    %v612 = vpack.c.bf16 %v567, %v566
    %v613 = vpack.c.bf16 %v569, %v568
    %v614 = vpack.c.bf16 %v571, %v570
    %v615 = vpack.c.bf16 %v573, %v572
    %v616 = vpack.c.bf16 %v575, %v574
    %v617 = vpack.c.bf16 %v577, %v576
    %v618 = vpack.c.bf16 %v579, %v578
    %v619 = vpack.c.bf16 %v581, %v580
    %v620 = vpack.c.bf16 %v583, %v582
    %v621 = vpack.c.bf16 %v585, %v584
    %v622 = vpack.c.bf16 %v587, %v586
    %v623 = vpack.c.bf16 %v589, %v588
    %v624 = vpack.c.bf16 %v591, %v590
    %v625 = vpack.c.bf16 %v593, %v592
    %v626 = vld [vmem:[%s273] sm:$0xff]
    %v627 = vld [vmem:[%s273 + $0x8] sm:$0xff]
    %v628 = vld [vmem:[%s273 + $0x18] sm:$0xff]
    %v629 = vld [vmem:[%s273 + $0x20] sm:$0xff]
    %v630 = vld [vmem:[%s273 + $0x30] sm:$0xff]
    %v631 = vld [vmem:[%s273 + $0x38] sm:$0xff]
    %v632 = vld [vmem:[%s273 + $0x48] sm:$0xff]
    %v633 = vld [vmem:[%s273 + $0x50] sm:$0xff]
    %v634 = vld [vmem:[%s273 + $0x60] sm:$0xff]
    %v635 = vld [vmem:[%s273 + $0x68] sm:$0xff]
    %v636 = vld [vmem:[%s273 + $0x78] sm:$0xff]
    %v637 = vld [vmem:[%s273 + $0x80] sm:$0xff]
    %v638 = vld [vmem:[%s273 + $0x90] sm:$0xff]
    %v639 = vld [vmem:[%s273 + $0x98] sm:$0xff]
    %v640 = vld [vmem:[%s273 + $0xa8] sm:$0xff]
    %v641 = vld [vmem:[%s273 + $0xb0] sm:$0xff]
    %v642 = vld [vmem:[%s273 + $0xc0] sm:$0xff]
    %v643 = vld [vmem:[%s273 + $0xc8] sm:$0xff]
    %v644 = vld [vmem:[%s273 + $0xd8] sm:$0xff]
    %v645 = vld [vmem:[%s273 + $0xe0] sm:$0xff]
    %v646 = vld [vmem:[%s273 + $0xf0] sm:$0xff]
    %v647 = vld [vmem:[%s273 + $0xf8] sm:$0xff]
    %v648 = vld [vmem:[%s273 + $0x108] sm:$0xff]
    %v649 = vld [vmem:[%s273 + $0x110] sm:$0xff]
    %v650 = vld [vmem:[%s273 + $0x120] sm:$0xff]
    %v651 = vld [vmem:[%s273 + $0x128] sm:$0xff]
    %v652 = vld [vmem:[%s273 + $0x138] sm:$0xff]
    %v653 = vld [vmem:[%s273 + $0x140] sm:$0xff]
    %v654 = vld [vmem:[%s273 + $0x150] sm:$0xff]
    %v655 = vld [vmem:[%s273 + $0x158] sm:$0xff]
    %v656 = vld [vmem:[%s273 + $0x168] sm:$0xff]
    %v657 = vld [vmem:[%s273 + $0x170] sm:$0xff]
    %v658 = vld [vmem:[%s273 + $0x1b0] sm:$0xff]
    %v659 = vld [vmem:[%s273 + $0x1b8] sm:$0xff]
    %v660 = vld [vmem:[%s273 + $0x1c8] sm:$0xff]
    %v661 = vld [vmem:[%s273 + $0x1d0] sm:$0xff]
    %v662 = vld [vmem:[%s273 + $0x1e0] sm:$0xff]
    %v663 = vld [vmem:[%s273 + $0x1e8] sm:$0xff]
    %v664 = vld [vmem:[%s273 + $0x1f8] sm:$0xff]
    %v665 = vld [vmem:[%s273 + $0x200] sm:$0xff]
    %v666 = vld [vmem:[%s273 + $0x210] sm:$0xff]
    %v667 = vld [vmem:[%s273 + $0x218] sm:$0xff]
    %v668 = vld [vmem:[%s273 + $0x228] sm:$0xff]
    %v669 = vld [vmem:[%s273 + $0x230] sm:$0xff]
    %v670 = vld [vmem:[%s273 + $0x240] sm:$0xff]
    %v671 = vld [vmem:[%s273 + $0x248] sm:$0xff]
    %v672 = vld [vmem:[%s273 + $0x258] sm:$0xff]
    %v673 = vld [vmem:[%s273 + $0x260] sm:$0xff]
    %v674 = vld [vmem:[%s273 + $0x270] sm:$0xff]
    %v675 = vld [vmem:[%s273 + $0x278] sm:$0xff]
    %v676 = vld [vmem:[%s273 + $0x288] sm:$0xff]
    %v677 = vld [vmem:[%s273 + $0x290] sm:$0xff]
    %v678 = vld [vmem:[%s273 + $0x2a0] sm:$0xff]
    %v679 = vld [vmem:[%s273 + $0x2a8] sm:$0xff]
    %v680 = vld [vmem:[%s273 + $0x2b8] sm:$0xff]
    %v681 = vld [vmem:[%s273 + $0x2c0] sm:$0xff]
    %v682 = vld [vmem:[%s273 + $0x2d0] sm:$0xff]
    %v683 = vld [vmem:[%s273 + $0x2d8] sm:$0xff]
    %v684 = vld [vmem:[%s273 + $0x2e8] sm:$0xff]
    %v685 = vld [vmem:[%s273 + $0x2f0] sm:$0xff]
    %v686 = vld [vmem:[%s273 + $0x300] sm:$0xff]
    %v687 = vld [vmem:[%s273 + $0x308] sm:$0xff]
    %v688 = vld [vmem:[%s273 + $0x318] sm:$0xff]
    %v689 = vld [vmem:[%s273 + $0x320] sm:$0xff]
    %v690 = vpack.c.bf16 %v627, %v626
    %v691 = vpack.c.bf16 %v629, %v628
    %v692 = vpack.c.bf16 %v631, %v630
    %v693 = vpack.c.bf16 %v633, %v632
    %v694 = vpack.c.bf16 %v635, %v634
    %v695 = vpack.c.bf16 %v637, %v636
    %v696 = vpack.c.bf16 %v639, %v638
    %v697 = vpack.c.bf16 %v641, %v640
    %v698 = vpack.c.bf16 %v643, %v642
    %v699 = vpack.c.bf16 %v645, %v644
    %v700 = vpack.c.bf16 %v647, %v646
    %v701 = vpack.c.bf16 %v649, %v648
    %v702 = vpack.c.bf16 %v651, %v650
    %v703 = vpack.c.bf16 %v653, %v652
    %v704 = vpack.c.bf16 %v655, %v654
    %v705 = vpack.c.bf16 %v657, %v656
    %v706 = vpack.c.bf16 %v659, %v658
    %v707 = vpack.c.bf16 %v661, %v660
    %v708 = vpack.c.bf16 %v663, %v662
    %v709 = vpack.c.bf16 %v665, %v664
    %v710 = vpack.c.bf16 %v667, %v666
    %v711 = vpack.c.bf16 %v669, %v668
    %v712 = vpack.c.bf16 %v671, %v670
    %v713 = vpack.c.bf16 %v673, %v672
    %v714 = vpack.c.bf16 %v675, %v674
    %v715 = vpack.c.bf16 %v677, %v676
    %v716 = vpack.c.bf16 %v679, %v678
    %v717 = vpack.c.bf16 %v681, %v680
    %v718 = vpack.c.bf16 %v683, %v682
    %v719 = vpack.c.bf16 %v685, %v684
    %v720 = vpack.c.bf16 %v687, %v686
    %v721 = vpack.c.bf16 %v689, %v688
    %v722 = vld [vmem:[%s273 + $0x1] sm:$0xff]
    %v723 = vld [vmem:[%s273 + $0x9] sm:$0xff]
    %v724 = vld [vmem:[%s273 + $0x19] sm:$0xff]
    %v725 = vld [vmem:[%s273 + $0x21] sm:$0xff]
    %v726 = vld [vmem:[%s273 + $0x31] sm:$0xff]
    %v727 = vld [vmem:[%s273 + $0x39] sm:$0xff]
    %v728 = vld [vmem:[%s273 + $0x49] sm:$0xff]
    %v729 = vld [vmem:[%s273 + $0x51] sm:$0xff]
    %v730 = vld [vmem:[%s273 + $0x61] sm:$0xff]
    %v731 = vld [vmem:[%s273 + $0x69] sm:$0xff]
    %v732 = vld [vmem:[%s273 + $0x79] sm:$0xff]
    %v733 = vld [vmem:[%s273 + $0x81] sm:$0xff]
    %v734 = vld [vmem:[%s273 + $0x91] sm:$0xff]
    %v735 = vld [vmem:[%s273 + $0x99] sm:$0xff]
    %v736 = vld [vmem:[%s273 + $0xa9] sm:$0xff]
    %v737 = vld [vmem:[%s273 + $0xb1] sm:$0xff]
    %v738 = vld [vmem:[%s273 + $0xc1] sm:$0xff]
    %v739 = vld [vmem:[%s273 + $0xc9] sm:$0xff]
    %v740 = vld [vmem:[%s273 + $0xd9] sm:$0xff]
    %v741 = vld [vmem:[%s273 + $0xe1] sm:$0xff]
    %v742 = vld [vmem:[%s273 + $0xf1] sm:$0xff]
    %v743 = vld [vmem:[%s273 + $0xf9] sm:$0xff]
    %v744 = vld [vmem:[%s273 + $0x109] sm:$0xff]
    %v745 = vld [vmem:[%s273 + $0x111] sm:$0xff]
    %v746 = vld [vmem:[%s273 + $0x121] sm:$0xff]
    %v747 = vld [vmem:[%s273 + $0x129] sm:$0xff]
    %v748 = vld [vmem:[%s273 + $0x139] sm:$0xff]
    %v749 = vld [vmem:[%s273 + $0x141] sm:$0xff]
    %v750 = vld [vmem:[%s273 + $0x151] sm:$0xff]
    %v751 = vld [vmem:[%s273 + $0x159] sm:$0xff]
    %v752 = vld [vmem:[%s273 + $0x169] sm:$0xff]
    %v753 = vld [vmem:[%s273 + $0x171] sm:$0xff]
    %v754 = vld [vmem:[%s273 + $0x1b1] sm:$0xff]
    %v755 = vld [vmem:[%s273 + $0x1b9] sm:$0xff]
    %v756 = vld [vmem:[%s273 + $0x1c9] sm:$0xff]
    %v757 = vld [vmem:[%s273 + $0x1d1] sm:$0xff]
    %v758 = vld [vmem:[%s273 + $0x1e1] sm:$0xff]
    %v759 = vld [vmem:[%s273 + $0x1e9] sm:$0xff]
    %v760 = vld [vmem:[%s273 + $0x1f9] sm:$0xff]
    %v761 = vld [vmem:[%s273 + $0x201] sm:$0xff]
    %v762 = vld [vmem:[%s273 + $0x211] sm:$0xff]
    %v763 = vld [vmem:[%s273 + $0x219] sm:$0xff]
    %v764 = vld [vmem:[%s273 + $0x229] sm:$0xff]
    %v765 = vld [vmem:[%s273 + $0x231] sm:$0xff]
    %v766 = vld [vmem:[%s273 + $0x241] sm:$0xff]
    %v767 = vld [vmem:[%s273 + $0x249] sm:$0xff]
    %v768 = vld [vmem:[%s273 + $0x259] sm:$0xff]
    %v769 = vld [vmem:[%s273 + $0x261] sm:$0xff]
    %v770 = vld [vmem:[%s273 + $0x271] sm:$0xff]
    %v771 = vld [vmem:[%s273 + $0x279] sm:$0xff]
    %v772 = vld [vmem:[%s273 + $0x289] sm:$0xff]
    %v773 = vld [vmem:[%s273 + $0x291] sm:$0xff]
    %v774 = vld [vmem:[%s273 + $0x2a1] sm:$0xff]
    %v775 = vld [vmem:[%s273 + $0x2a9] sm:$0xff]
    %v776 = vld [vmem:[%s273 + $0x2b9] sm:$0xff]
    %v777 = vld [vmem:[%s273 + $0x2c1] sm:$0xff]
    %v778 = vld [vmem:[%s273 + $0x2d1] sm:$0xff]
    %v779 = vld [vmem:[%s273 + $0x2d9] sm:$0xff]
    %v780 = vld [vmem:[%s273 + $0x2e9] sm:$0xff]
    %v781 = vld [vmem:[%s273 + $0x2f1] sm:$0xff]
    %v782 = vld [vmem:[%s273 + $0x301] sm:$0xff]
    %v783 = vld [vmem:[%s273 + $0x309] sm:$0xff]
    %v784 = vld [vmem:[%s273 + $0x319] sm:$0xff]
    %v785 = vld [vmem:[%s273 + $0x321] sm:$0xff]
    %v786 = vpack.c.bf16 %v723, %v722
    %v787 = vpack.c.bf16 %v725, %v724
    %v788 = vpack.c.bf16 %v727, %v726
    %v789 = vpack.c.bf16 %v729, %v728
    %v790 = vpack.c.bf16 %v731, %v730
    %v791 = vpack.c.bf16 %v733, %v732
    %v792 = vpack.c.bf16 %v735, %v734
    %v793 = vpack.c.bf16 %v737, %v736
    %v794 = vpack.c.bf16 %v739, %v738
    %v795 = vpack.c.bf16 %v741, %v740
    %v796 = vpack.c.bf16 %v743, %v742
    %v797 = vpack.c.bf16 %v745, %v744
    %v798 = vpack.c.bf16 %v747, %v746
    %v799 = vpack.c.bf16 %v749, %v748
    %v800 = vpack.c.bf16 %v751, %v750
    %v801 = vpack.c.bf16 %v753, %v752
    %v802 = vpack.c.bf16 %v755, %v754
    %v803 = vpack.c.bf16 %v757, %v756
    %v804 = vpack.c.bf16 %v759, %v758
    %v805 = vpack.c.bf16 %v761, %v760
    %v806 = vpack.c.bf16 %v763, %v762
    %v807 = vpack.c.bf16 %v765, %v764
    %v808 = vpack.c.bf16 %v767, %v766
    %v809 = vpack.c.bf16 %v769, %v768
    %v810 = vpack.c.bf16 %v771, %v770
    %v811 = vpack.c.bf16 %v773, %v772
    %v812 = vpack.c.bf16 %v775, %v774
    %v813 = vpack.c.bf16 %v777, %v776
    %v814 = vpack.c.bf16 %v779, %v778
    %v815 = vpack.c.bf16 %v781, %v780
    %v816 = vpack.c.bf16 %v783, %v782
    %v817 = vpack.c.bf16 %v785, %v784
    %v818 = vld [vmem:[%s273 + $0x2] sm:$0xff]
    %v819 = vld [vmem:[%s273 + $0xa] sm:$0xff]
    %v820 = vld [vmem:[%s273 + $0x1a] sm:$0xff]
    %v821 = vld [vmem:[%s273 + $0x22] sm:$0xff]
    %v822 = vld [vmem:[%s273 + $0x32] sm:$0xff]
    %v823 = vld [vmem:[%s273 + $0x3a] sm:$0xff]
    %v824 = vld [vmem:[%s273 + $0x4a] sm:$0xff]
    %v825 = vld [vmem:[%s273 + $0x52] sm:$0xff]
    %v826 = vld [vmem:[%s273 + $0x62] sm:$0xff]
    %v827 = vld [vmem:[%s273 + $0x6a] sm:$0xff]
    %v828 = vld [vmem:[%s273 + $0x7a] sm:$0xff]
    %v829 = vld [vmem:[%s273 + $0x82] sm:$0xff]
    %v830 = vld [vmem:[%s273 + $0x92] sm:$0xff]
    %v831 = vld [vmem:[%s273 + $0x9a] sm:$0xff]
    %v832 = vld [vmem:[%s273 + $0xaa] sm:$0xff]
    %v833 = vld [vmem:[%s273 + $0xb2] sm:$0xff]
    %v834 = vld [vmem:[%s273 + $0xc2] sm:$0xff]
    %v835 = vld [vmem:[%s273 + $0xca] sm:$0xff]
    %v836 = vld [vmem:[%s273 + $0xda] sm:$0xff]
    %v837 = vld [vmem:[%s273 + $0xe2] sm:$0xff]
    %v838 = vld [vmem:[%s273 + $0xf2] sm:$0xff]
    %v839 = vld [vmem:[%s273 + $0xfa] sm:$0xff]
    %v840 = vld [vmem:[%s273 + $0x10a] sm:$0xff]
    %v841 = vld [vmem:[%s273 + $0x112] sm:$0xff]
    %v842 = vld [vmem:[%s273 + $0x122] sm:$0xff]
    %v843 = vld [vmem:[%s273 + $0x12a] sm:$0xff]
    %v844 = vld [vmem:[%s273 + $0x13a] sm:$0xff]
    %v845 = vld [vmem:[%s273 + $0x142] sm:$0xff]
    %v846 = vld [vmem:[%s273 + $0x152] sm:$0xff]
    %v847 = vld [vmem:[%s273 + $0x15a] sm:$0xff]
    %v848 = vld [vmem:[%s273 + $0x16a] sm:$0xff]
    %v849 = vld [vmem:[%s273 + $0x172] sm:$0xff]
    %v850 = vld [vmem:[%s273 + $0x1b2] sm:$0xff]
    %v851 = vld [vmem:[%s273 + $0x1ba] sm:$0xff]
    %v852 = vld [vmem:[%s273 + $0x1ca] sm:$0xff]
    %v853 = vld [vmem:[%s273 + $0x1d2] sm:$0xff]
    %v854 = vld [vmem:[%s273 + $0x1e2] sm:$0xff]
    %v855 = vld [vmem:[%s273 + $0x1ea] sm:$0xff]
    %v856 = vld [vmem:[%s273 + $0x1fa] sm:$0xff]
    %v857 = vld [vmem:[%s273 + $0x202] sm:$0xff]
    %v858 = vld [vmem:[%s273 + $0x212] sm:$0xff]
    %v859 = vld [vmem:[%s273 + $0x21a] sm:$0xff]
    %v860 = vld [vmem:[%s273 + $0x22a] sm:$0xff]
    %v861 = vld [vmem:[%s273 + $0x232] sm:$0xff]
    %v862 = vld [vmem:[%s273 + $0x242] sm:$0xff]
    %v863 = vld [vmem:[%s273 + $0x24a] sm:$0xff]
    %v864 = vld [vmem:[%s273 + $0x25a] sm:$0xff]
    %v865 = vld [vmem:[%s273 + $0x262] sm:$0xff]
    %v866 = vld [vmem:[%s273 + $0x272] sm:$0xff]
    %v867 = vld [vmem:[%s273 + $0x27a] sm:$0xff]
    %v868 = vld [vmem:[%s273 + $0x28a] sm:$0xff]
    %v869 = vld [vmem:[%s273 + $0x292] sm:$0xff]
    %v870 = vld [vmem:[%s273 + $0x2a2] sm:$0xff]
    %v871 = vld [vmem:[%s273 + $0x2aa] sm:$0xff]
    %v872 = vld [vmem:[%s273 + $0x2ba] sm:$0xff]
    %v873 = vld [vmem:[%s273 + $0x2c2] sm:$0xff]
    %v874 = vld [vmem:[%s273 + $0x2d2] sm:$0xff]
    %v875 = vld [vmem:[%s273 + $0x2da] sm:$0xff]
    %v876 = vld [vmem:[%s273 + $0x2ea] sm:$0xff]
    %v877 = vld [vmem:[%s273 + $0x2f2] sm:$0xff]
    %v878 = vld [vmem:[%s273 + $0x302] sm:$0xff]
    %v879 = vld [vmem:[%s273 + $0x30a] sm:$0xff]
    %v880 = vld [vmem:[%s273 + $0x31a] sm:$0xff]
    %v881 = vld [vmem:[%s273 + $0x322] sm:$0xff]
    %v882 = vpack.c.bf16 %v819, %v818
    %v883 = vpack.c.bf16 %v821, %v820
    %v884 = vpack.c.bf16 %v823, %v822
    %v885 = vpack.c.bf16 %v825, %v824
    %v886 = vpack.c.bf16 %v827, %v826
    %v887 = vpack.c.bf16 %v829, %v828
    %v888 = vpack.c.bf16 %v831, %v830
    %v889 = vpack.c.bf16 %v833, %v832
    %v890 = vpack.c.bf16 %v835, %v834
    %v891 = vpack.c.bf16 %v837, %v836
    %v892 = vpack.c.bf16 %v839, %v838
    %v893 = vpack.c.bf16 %v841, %v840
    %v894 = vpack.c.bf16 %v843, %v842
    %v895 = vpack.c.bf16 %v845, %v844
    %v896 = vpack.c.bf16 %v847, %v846
    %v897 = vpack.c.bf16 %v849, %v848
    %v898 = vpack.c.bf16 %v851, %v850
    %v899 = vpack.c.bf16 %v853, %v852
    %v900 = vpack.c.bf16 %v855, %v854
    %v901 = vpack.c.bf16 %v857, %v856
    %v902 = vpack.c.bf16 %v859, %v858
    %v903 = vpack.c.bf16 %v861, %v860
    %v904 = vpack.c.bf16 %v863, %v862
    %v905 = vpack.c.bf16 %v865, %v864
    %v906 = vpack.c.bf16 %v867, %v866
    %v907 = vpack.c.bf16 %v869, %v868
    %v908 = vpack.c.bf16 %v871, %v870
    %v909 = vpack.c.bf16 %v873, %v872
    %v910 = vpack.c.bf16 %v875, %v874
    %v911 = vpack.c.bf16 %v877, %v876
    %v912 = vpack.c.bf16 %v879, %v878
    %v913 = vpack.c.bf16 %v881, %v880
    %s914 = scalar_lea.vmem [#allocation2], 48
    %v915 = vld [vmem:[%s914] sm:$0xff]
    %v916 = vld [vmem:[%s914 + $0x8] sm:$0xff]
    %v917 = vld [vmem:[%s914 + $0x18] sm:$0xff]
    %v918 = vld [vmem:[%s914 + $0x20] sm:$0xff]
    %v919 = vld [vmem:[%s914 + $0x30] sm:$0xff]
    %v920 = vld [vmem:[%s914 + $0x38] sm:$0xff]
    %v921 = vld [vmem:[%s914 + $0x48] sm:$0xff]
    %v922 = vld [vmem:[%s914 + $0x50] sm:$0xff]
    %v923 = vld [vmem:[%s914 + $0x60] sm:$0xff]
    %v924 = vld [vmem:[%s914 + $0x68] sm:$0xff]
    %v925 = vld [vmem:[%s914 + $0x78] sm:$0xff]
    %v926 = vld [vmem:[%s914 + $0x80] sm:$0xff]
    %v927 = vld [vmem:[%s914 + $0x90] sm:$0xff]
    %v928 = vld [vmem:[%s914 + $0x98] sm:$0xff]
    %v929 = vld [vmem:[%s914 + $0xa8] sm:$0xff]
    %v930 = vld [vmem:[%s914 + $0xb0] sm:$0xff]
    %v931 = vld [vmem:[%s914 + $0xc0] sm:$0xff]
    %v932 = vld [vmem:[%s914 + $0xc8] sm:$0xff]
    %v933 = vld [vmem:[%s914 + $0xd8] sm:$0xff]
    %v934 = vld [vmem:[%s914 + $0xe0] sm:$0xff]
    %v935 = vld [vmem:[%s914 + $0xf0] sm:$0xff]
    %v936 = vld [vmem:[%s914 + $0xf8] sm:$0xff]
    %v937 = vld [vmem:[%s914 + $0x108] sm:$0xff]
    %v938 = vld [vmem:[%s914 + $0x110] sm:$0xff]
    %v939 = vld [vmem:[%s914 + $0x120] sm:$0xff]
    %v940 = vld [vmem:[%s914 + $0x128] sm:$0xff]
    %v941 = vld [vmem:[%s914 + $0x138] sm:$0xff]
    %v942 = vld [vmem:[%s914 + $0x140] sm:$0xff]
    %v943 = vld [vmem:[%s914 + $0x150] sm:$0xff]
    %v944 = vld [vmem:[%s914 + $0x158] sm:$0xff]
    %v945 = vld [vmem:[%s914 + $0x168] sm:$0xff]
    %v946 = vld [vmem:[%s914 + $0x170] sm:$0xff]
    %v947 = vld [vmem:[%s914 + $0x1b0] sm:$0xff]
    %v948 = vld [vmem:[%s914 + $0x1b8] sm:$0xff]
    %v949 = vld [vmem:[%s914 + $0x1c8] sm:$0xff]
    %v950 = vld [vmem:[%s914 + $0x1d0] sm:$0xff]
    %v951 = vld [vmem:[%s914 + $0x1e0] sm:$0xff]
    %v952 = vld [vmem:[%s914 + $0x1e8] sm:$0xff]
    %v953 = vld [vmem:[%s914 + $0x1f8] sm:$0xff]
    %v954 = vld [vmem:[%s914 + $0x200] sm:$0xff]
    %v955 = vld [vmem:[%s914 + $0x210] sm:$0xff]
    %v956 = vld [vmem:[%s914 + $0x218] sm:$0xff]
    %v957 = vld [vmem:[%s914 + $0x228] sm:$0xff]
    %v958 = vld [vmem:[%s914 + $0x230] sm:$0xff]
    %v959 = vld [vmem:[%s914 + $0x240] sm:$0xff]
    %v960 = vld [vmem:[%s914 + $0x248] sm:$0xff]
    %v961 = vld [vmem:[%s914 + $0x258] sm:$0xff]
    %v962 = vld [vmem:[%s914 + $0x260] sm:$0xff]
    %v963 = vld [vmem:[%s914 + $0x270] sm:$0xff]
    %v964 = vld [vmem:[%s914 + $0x278] sm:$0xff]
    %v965 = vld [vmem:[%s914 + $0x288] sm:$0xff]
    %v966 = vld [vmem:[%s914 + $0x290] sm:$0xff]
    %v967 = vld [vmem:[%s914 + $0x2a0] sm:$0xff]
    %v968 = vld [vmem:[%s914 + $0x2a8] sm:$0xff]
    %v969 = vld [vmem:[%s914 + $0x2b8] sm:$0xff]
    %v970 = vld [vmem:[%s914 + $0x2c0] sm:$0xff]
    %v971 = vld [vmem:[%s914 + $0x2d0] sm:$0xff]
    %v972 = vld [vmem:[%s914 + $0x2d8] sm:$0xff]
    %v973 = vld [vmem:[%s914 + $0x2e8] sm:$0xff]
    %v974 = vld [vmem:[%s914 + $0x2f0] sm:$0xff]
    %v975 = vld [vmem:[%s914 + $0x300] sm:$0xff]
    %v976 = vld [vmem:[%s914 + $0x308] sm:$0xff]
    %v977 = vld [vmem:[%s914 + $0x318] sm:$0xff]
    %v978 = vld [vmem:[%s914 + $0x320] sm:$0xff]
    %v979 = vpack.c.bf16 %v916, %v915
    %v980 = vpack.c.bf16 %v918, %v917
    %v981 = vpack.c.bf16 %v920, %v919
    %v982 = vpack.c.bf16 %v922, %v921
    %v983 = vpack.c.bf16 %v924, %v923
    %v984 = vpack.c.bf16 %v926, %v925
    %v985 = vpack.c.bf16 %v928, %v927
    %v986 = vpack.c.bf16 %v930, %v929
    %v987 = vpack.c.bf16 %v932, %v931
    %v988 = vpack.c.bf16 %v934, %v933
    %v989 = vpack.c.bf16 %v936, %v935
    %v990 = vpack.c.bf16 %v938, %v937
    %v991 = vpack.c.bf16 %v940, %v939
    %v992 = vpack.c.bf16 %v942, %v941
    %v993 = vpack.c.bf16 %v944, %v943
    %v994 = vpack.c.bf16 %v946, %v945
    %v995 = vpack.c.bf16 %v948, %v947
    %v996 = vpack.c.bf16 %v950, %v949
    %v997 = vpack.c.bf16 %v952, %v951
    %v998 = vpack.c.bf16 %v954, %v953
    %v999 = vpack.c.bf16 %v956, %v955
    %v1000 = vpack.c.bf16 %v958, %v957
    %v1001 = vpack.c.bf16 %v960, %v959
    %v1002 = vpack.c.bf16 %v962, %v961
    %v1003 = vpack.c.bf16 %v964, %v963
    %v1004 = vpack.c.bf16 %v966, %v965
    %v1005 = vpack.c.bf16 %v968, %v967
    %v1006 = vpack.c.bf16 %v970, %v969
    %v1007 = vpack.c.bf16 %v972, %v971
    %v1008 = vpack.c.bf16 %v974, %v973
    %v1009 = vpack.c.bf16 %v976, %v975
    %v1010 = vpack.c.bf16 %v978, %v977
    %v1011 = vld [vmem:[%s914 + $0x1] sm:$0xff]
    %v1012 = vld [vmem:[%s914 + $0x9] sm:$0xff]
    %v1013 = vld [vmem:[%s914 + $0x19] sm:$0xff]
    %v1014 = vld [vmem:[%s914 + $0x21] sm:$0xff]
    %v1015 = vld [vmem:[%s914 + $0x31] sm:$0xff]
    %v1016 = vld [vmem:[%s914 + $0x39] sm:$0xff]
    %v1017 = vld [vmem:[%s914 + $0x49] sm:$0xff]
    %v1018 = vld [vmem:[%s914 + $0x51] sm:$0xff]
    %v1019 = vld [vmem:[%s914 + $0x61] sm:$0xff]
    %v1020 = vld [vmem:[%s914 + $0x69] sm:$0xff]
    %v1021 = vld [vmem:[%s914 + $0x79] sm:$0xff]
    %v1022 = vld [vmem:[%s914 + $0x81] sm:$0xff]
    %v1023 = vld [vmem:[%s914 + $0x91] sm:$0xff]
    %v1024 = vld [vmem:[%s914 + $0x99] sm:$0xff]
    %v1025 = vld [vmem:[%s914 + $0xa9] sm:$0xff]
    %v1026 = vld [vmem:[%s914 + $0xb1] sm:$0xff]
    %v1027 = vld [vmem:[%s914 + $0xc1] sm:$0xff]
    %v1028 = vld [vmem:[%s914 + $0xc9] sm:$0xff]
    %v1029 = vld [vmem:[%s914 + $0xd9] sm:$0xff]
    %v1030 = vld [vmem:[%s914 + $0xe1] sm:$0xff]
    %v1031 = vld [vmem:[%s914 + $0xf1] sm:$0xff]
    %v1032 = vld [vmem:[%s914 + $0xf9] sm:$0xff]
    %v1033 = vld [vmem:[%s914 + $0x109] sm:$0xff]
    %v1034 = vld [vmem:[%s914 + $0x111] sm:$0xff]
    %v1035 = vld [vmem:[%s914 + $0x121] sm:$0xff]
    %v1036 = vld [vmem:[%s914 + $0x129] sm:$0xff]
    %v1037 = vld [vmem:[%s914 + $0x139] sm:$0xff]
    %v1038 = vld [vmem:[%s914 + $0x141] sm:$0xff]
    %v1039 = vld [vmem:[%s914 + $0x151] sm:$0xff]
    %v1040 = vld [vmem:[%s914 + $0x159] sm:$0xff]
    %v1041 = vld [vmem:[%s914 + $0x169] sm:$0xff]
    %v1042 = vld [vmem:[%s914 + $0x171] sm:$0xff]
    %v1043 = vld [vmem:[%s914 + $0x1b1] sm:$0xff]
    %v1044 = vld [vmem:[%s914 + $0x1b9] sm:$0xff]
    %v1045 = vld [vmem:[%s914 + $0x1c9] sm:$0xff]
    %v1046 = vld [vmem:[%s914 + $0x1d1] sm:$0xff]
    %v1047 = vld [vmem:[%s914 + $0x1e1] sm:$0xff]
    %v1048 = vld [vmem:[%s914 + $0x1e9] sm:$0xff]
    %v1049 = vld [vmem:[%s914 + $0x1f9] sm:$0xff]
    %v1050 = vld [vmem:[%s914 + $0x201] sm:$0xff]
    %v1051 = vld [vmem:[%s914 + $0x211] sm:$0xff]
    %v1052 = vld [vmem:[%s914 + $0x219] sm:$0xff]
    %v1053 = vld [vmem:[%s914 + $0x229] sm:$0xff]
    %v1054 = vld [vmem:[%s914 + $0x231] sm:$0xff]
    %v1055 = vld [vmem:[%s914 + $0x241] sm:$0xff]
    %v1056 = vld [vmem:[%s914 + $0x249] sm:$0xff]
    %v1057 = vld [vmem:[%s914 + $0x259] sm:$0xff]
    %v1058 = vld [vmem:[%s914 + $0x261] sm:$0xff]
    %v1059 = vld [vmem:[%s914 + $0x271] sm:$0xff]
    %v1060 = vld [vmem:[%s914 + $0x279] sm:$0xff]
    %v1061 = vld [vmem:[%s914 + $0x289] sm:$0xff]
    %v1062 = vld [vmem:[%s914 + $0x291] sm:$0xff]
    %v1063 = vld [vmem:[%s914 + $0x2a1] sm:$0xff]
    %v1064 = vld [vmem:[%s914 + $0x2a9] sm:$0xff]
    %v1065 = vld [vmem:[%s914 + $0x2b9] sm:$0xff]
    %v1066 = vld [vmem:[%s914 + $0x2c1] sm:$0xff]
    %v1067 = vld [vmem:[%s914 + $0x2d1] sm:$0xff]
    %v1068 = vld [vmem:[%s914 + $0x2d9] sm:$0xff]
    %v1069 = vld [vmem:[%s914 + $0x2e9] sm:$0xff]
    %v1070 = vld [vmem:[%s914 + $0x2f1] sm:$0xff]
    %v1071 = vld [vmem:[%s914 + $0x301] sm:$0xff]
    %v1072 = vld [vmem:[%s914 + $0x309] sm:$0xff]
    %v1073 = vld [vmem:[%s914 + $0x319] sm:$0xff]
    %v1074 = vld [vmem:[%s914 + $0x321] sm:$0xff]
    %v1075 = vpack.c.bf16 %v1012, %v1011
    %v1076 = vpack.c.bf16 %v1014, %v1013
    %v1077 = vpack.c.bf16 %v1016, %v1015
    %v1078 = vpack.c.bf16 %v1018, %v1017
    %v1079 = vpack.c.bf16 %v1020, %v1019
    %v1080 = vpack.c.bf16 %v1022, %v1021
    %v1081 = vpack.c.bf16 %v1024, %v1023
    %v1082 = vpack.c.bf16 %v1026, %v1025
    %v1083 = vpack.c.bf16 %v1028, %v1027
    %v1084 = vpack.c.bf16 %v1030, %v1029
    %v1085 = vpack.c.bf16 %v1032, %v1031
    %v1086 = vpack.c.bf16 %v1034, %v1033
    %v1087 = vpack.c.bf16 %v1036, %v1035
    %v1088 = vpack.c.bf16 %v1038, %v1037
    %v1089 = vpack.c.bf16 %v1040, %v1039
    %v1090 = vpack.c.bf16 %v1042, %v1041
    %v1091 = vpack.c.bf16 %v1044, %v1043
    %v1092 = vpack.c.bf16 %v1046, %v1045
    %v1093 = vpack.c.bf16 %v1048, %v1047
    %v1094 = vpack.c.bf16 %v1050, %v1049
    %v1095 = vpack.c.bf16 %v1052, %v1051
    %v1096 = vpack.c.bf16 %v1054, %v1053
    %v1097 = vpack.c.bf16 %v1056, %v1055
    %v1098 = vpack.c.bf16 %v1058, %v1057
    %v1099 = vpack.c.bf16 %v1060, %v1059
    %v1100 = vpack.c.bf16 %v1062, %v1061
    %v1101 = vpack.c.bf16 %v1064, %v1063
    %v1102 = vpack.c.bf16 %v1066, %v1065
    %v1103 = vpack.c.bf16 %v1068, %v1067
    %v1104 = vpack.c.bf16 %v1070, %v1069
    %v1105 = vpack.c.bf16 %v1072, %v1071
    %v1106 = vpack.c.bf16 %v1074, %v1073
    %v1107 = vld [vmem:[%s914 + $0x2] sm:$0xff]
    %v1108 = vld [vmem:[%s914 + $0xa] sm:$0xff]
    %v1109 = vld [vmem:[%s914 + $0x1a] sm:$0xff]
    %v1110 = vld [vmem:[%s914 + $0x22] sm:$0xff]
    %v1111 = vld [vmem:[%s914 + $0x32] sm:$0xff]
    %v1112 = vld [vmem:[%s914 + $0x3a] sm:$0xff]
    %v1113 = vld [vmem:[%s914 + $0x4a] sm:$0xff]
    %v1114 = vld [vmem:[%s914 + $0x52] sm:$0xff]
    %v1115 = vld [vmem:[%s914 + $0x62] sm:$0xff]
    %v1116 = vld [vmem:[%s914 + $0x6a] sm:$0xff]
    %v1117 = vld [vmem:[%s914 + $0x7a] sm:$0xff]
    %v1118 = vld [vmem:[%s914 + $0x82] sm:$0xff]
    %v1119 = vld [vmem:[%s914 + $0x92] sm:$0xff]
    %v1120 = vld [vmem:[%s914 + $0x9a] sm:$0xff]
    %v1121 = vld [vmem:[%s914 + $0xaa] sm:$0xff]
    %v1122 = vld [vmem:[%s914 + $0xb2] sm:$0xff]
    %v1123 = vld [vmem:[%s914 + $0xc2] sm:$0xff]
    %v1124 = vld [vmem:[%s914 + $0xca] sm:$0xff]
    %v1125 = vld [vmem:[%s914 + $0xda] sm:$0xff]
    %v1126 = vld [vmem:[%s914 + $0xe2] sm:$0xff]
    %v1127 = vld [vmem:[%s914 + $0xf2] sm:$0xff]
    %v1128 = vld [vmem:[%s914 + $0xfa] sm:$0xff]
    %v1129 = vld [vmem:[%s914 + $0x10a] sm:$0xff]
    %v1130 = vld [vmem:[%s914 + $0x112] sm:$0xff]
    %v1131 = vld [vmem:[%s914 + $0x122] sm:$0xff]
    %v1132 = vld [vmem:[%s914 + $0x12a] sm:$0xff]
    %v1133 = vld [vmem:[%s914 + $0x13a] sm:$0xff]
    %v1134 = vld [vmem:[%s914 + $0x142] sm:$0xff]
    %v1135 = vld [vmem:[%s914 + $0x152] sm:$0xff]
    %v1136 = vld [vmem:[%s914 + $0x15a] sm:$0xff]
    %v1137 = vld [vmem:[%s914 + $0x16a] sm:$0xff]
    %v1138 = vld [vmem:[%s914 + $0x172] sm:$0xff]
    %v1139 = vld [vmem:[%s914 + $0x1b2] sm:$0xff]
    %v1140 = vld [vmem:[%s914 + $0x1ba] sm:$0xff]
    %v1141 = vld [vmem:[%s914 + $0x1ca] sm:$0xff]
    %v1142 = vld [vmem:[%s914 + $0x1d2] sm:$0xff]
    %v1143 = vld [vmem:[%s914 + $0x1e2] sm:$0xff]
    %v1144 = vld [vmem:[%s914 + $0x1ea] sm:$0xff]
    %v1145 = vld [vmem:[%s914 + $0x1fa] sm:$0xff]
    %v1146 = vld [vmem:[%s914 + $0x202] sm:$0xff]
    %v1147 = vld [vmem:[%s914 + $0x212] sm:$0xff]
    %v1148 = vld [vmem:[%s914 + $0x21a] sm:$0xff]
    %v1149 = vld [vmem:[%s914 + $0x22a] sm:$0xff]
    %v1150 = vld [vmem:[%s914 + $0x232] sm:$0xff]
    %v1151 = vld [vmem:[%s914 + $0x242] sm:$0xff]
    %v1152 = vld [vmem:[%s914 + $0x24a] sm:$0xff]
    %v1153 = vld [vmem:[%s914 + $0x25a] sm:$0xff]
    %v1154 = vld [vmem:[%s914 + $0x262] sm:$0xff]
    %v1155 = vld [vmem:[%s914 + $0x272] sm:$0xff]
    %v1156 = vld [vmem:[%s914 + $0x27a] sm:$0xff]
    %v1157 = vld [vmem:[%s914 + $0x28a] sm:$0xff]
    %v1158 = vld [vmem:[%s914 + $0x292] sm:$0xff]
    %v1159 = vld [vmem:[%s914 + $0x2a2] sm:$0xff]
    %v1160 = vld [vmem:[%s914 + $0x2aa] sm:$0xff]
    %v1161 = vld [vmem:[%s914 + $0x2ba] sm:$0xff]
    %v1162 = vld [vmem:[%s914 + $0x2c2] sm:$0xff]
    %v1163 = vld [vmem:[%s914 + $0x2d2] sm:$0xff]
    %v1164 = vld [vmem:[%s914 + $0x2da] sm:$0xff]
    %v1165 = vld [vmem:[%s914 + $0x2ea] sm:$0xff]
    %v1166 = vld [vmem:[%s914 + $0x2f2] sm:$0xff]
    %v1167 = vld [vmem:[%s914 + $0x302] sm:$0xff]
    %v1168 = vld [vmem:[%s914 + $0x30a] sm:$0xff]
    %v1169 = vld [vmem:[%s914 + $0x31a] sm:$0xff]
    %v1170 = vld [vmem:[%s914 + $0x322] sm:$0xff]
    %v1171 = vpack.c.bf16 %v1108, %v1107
    %v1172 = vpack.c.bf16 %v1110, %v1109
    %v1173 = vpack.c.bf16 %v1112, %v1111
    %v1174 = vpack.c.bf16 %v1114, %v1113
    %v1175 = vpack.c.bf16 %v1116, %v1115
    %v1176 = vpack.c.bf16 %v1118, %v1117
    %v1177 = vpack.c.bf16 %v1120, %v1119
    %v1178 = vpack.c.bf16 %v1122, %v1121
    %v1179 = vpack.c.bf16 %v1124, %v1123
    %v1180 = vpack.c.bf16 %v1126, %v1125
    %v1181 = vpack.c.bf16 %v1128, %v1127
    %v1182 = vpack.c.bf16 %v1130, %v1129
    %v1183 = vpack.c.bf16 %v1132, %v1131
    %v1184 = vpack.c.bf16 %v1134, %v1133
    %v1185 = vpack.c.bf16 %v1136, %v1135
    %v1186 = vpack.c.bf16 %v1138, %v1137
    %v1187 = vpack.c.bf16 %v1140, %v1139
    %v1188 = vpack.c.bf16 %v1142, %v1141
    %v1189 = vpack.c.bf16 %v1144, %v1143
    %v1190 = vpack.c.bf16 %v1146, %v1145
    %v1191 = vpack.c.bf16 %v1148, %v1147
    %v1192 = vpack.c.bf16 %v1150, %v1149
    %v1193 = vpack.c.bf16 %v1152, %v1151
    %v1194 = vpack.c.bf16 %v1154, %v1153
    %v1195 = vpack.c.bf16 %v1156, %v1155
    %v1196 = vpack.c.bf16 %v1158, %v1157
    %v1197 = vpack.c.bf16 %v1160, %v1159
    %v1198 = vpack.c.bf16 %v1162, %v1161
    %v1199 = vpack.c.bf16 %v1164, %v1163
    %v1200 = vpack.c.bf16 %v1166, %v1165
    %v1201 = vpack.c.bf16 %v1168, %v1167
    %v1202 = vpack.c.bf16 %v1170, %v1169
    %1235 = vrot.lane.b32.xlu0 %v498, 32
    %v1236 = vpop.permute.xlu0 %1235
    %1237 = vrot.lane.b32.xlu0 %v499, 32
    %v1238 = vpop.permute.xlu0 %1237
    %1239 = vrot.lane.b32.xlu0 %v500, 32
    %v1240 = vpop.permute.xlu0 %1239
    %1241 = vrot.lane.b32.xlu0 %v501, 32
    %v1242 = vpop.permute.xlu0 %1241
    %1243 = vrot.lane.b32.xlu0 %v502, 32
    %v1244 = vpop.permute.xlu0 %1243
    %1245 = vrot.lane.b32.xlu0 %v503, 32
    %v1246 = vpop.permute.xlu0 %1245
    %1247 = vrot.lane.b32.xlu0 %v504, 32
    %v1248 = vpop.permute.xlu0 %1247
    %1249 = vrot.lane.b32.xlu0 %v505, 32
    %v1250 = vpop.permute.xlu0 %1249
    %1251 = vrot.lane.b32.xlu0 %v506, 32
    %v1252 = vpop.permute.xlu0 %1251
    %1253 = vrot.lane.b32.xlu0 %v507, 32
    %v1254 = vpop.permute.xlu0 %1253
    %1255 = vrot.lane.b32.xlu0 %v508, 32
    %v1256 = vpop.permute.xlu0 %1255
    %1257 = vrot.lane.b32.xlu0 %v509, 32
    %v1258 = vpop.permute.xlu0 %1257
    %1259 = vrot.lane.b32.xlu0 %v510, 32
    %v1260 = vpop.permute.xlu0 %1259
    %1261 = vrot.lane.b32.xlu0 %v511, 32
    %v1262 = vpop.permute.xlu0 %1261
    %1263 = vrot.lane.b32.xlu0 %v512, 32
    %v1264 = vpop.permute.xlu0 %1263
    %1265 = vrot.lane.b32.xlu0 %v513, 32
    %v1266 = vpop.permute.xlu0 %1265
    %1267 = vrot.lane.b32.xlu0 %v514, 32
    %v1268 = vpop.permute.xlu0 %1267
    %1269 = vrot.lane.b32.xlu0 %v515, 32
    %v1270 = vpop.permute.xlu0 %1269
    %1271 = vrot.lane.b32.xlu0 %v516, 32
    %v1272 = vpop.permute.xlu0 %1271
    %1273 = vrot.lane.b32.xlu0 %v517, 32
    %v1274 = vpop.permute.xlu0 %1273
    %1275 = vrot.lane.b32.xlu0 %v518, 32
    %v1276 = vpop.permute.xlu0 %1275
    %1277 = vrot.lane.b32.xlu0 %v519, 32
    %v1278 = vpop.permute.xlu0 %1277
    %1279 = vrot.lane.b32.xlu0 %v520, 32
    %v1280 = vpop.permute.xlu0 %1279
    %1281 = vrot.lane.b32.xlu0 %v521, 32
    %v1282 = vpop.permute.xlu0 %1281
    %1283 = vrot.lane.b32.xlu0 %v522, 32
    %v1284 = vpop.permute.xlu0 %1283
    %1285 = vrot.lane.b32.xlu0 %v523, 32
    %v1286 = vpop.permute.xlu0 %1285
    %1287 = vrot.lane.b32.xlu0 %v524, 32
    %v1288 = vpop.permute.xlu0 %1287
    %1289 = vrot.lane.b32.xlu0 %v525, 32
    %v1290 = vpop.permute.xlu0 %1289
    %1291 = vrot.lane.b32.xlu0 %v526, 32
    %v1292 = vpop.permute.xlu0 %1291
    %1293 = vrot.lane.b32.xlu0 %v527, 32
    %v1294 = vpop.permute.xlu0 %1293
    %1295 = vrot.lane.b32.xlu0 %v528, 32
    %v1296 = vpop.permute.xlu0 %1295
    %1297 = vrot.lane.b32.xlu0 %v529, 32
    %v1298 = vpop.permute.xlu0 %1297
    %1331 = vrot.lane.b32.xlu0 %v594, 64
    %v1332 = vpop.permute.xlu0 %1331
    %1333 = vrot.lane.b32.xlu0 %v595, 64
    %v1334 = vpop.permute.xlu0 %1333
    %1335 = vrot.lane.b32.xlu0 %v596, 64
    %v1336 = vpop.permute.xlu0 %1335
    %1337 = vrot.lane.b32.xlu0 %v597, 64
    %v1338 = vpop.permute.xlu0 %1337
    %1339 = vrot.lane.b32.xlu0 %v598, 64
    %v1340 = vpop.permute.xlu0 %1339
    %1341 = vrot.lane.b32.xlu0 %v599, 64
    %v1342 = vpop.permute.xlu0 %1341
    %1343 = vrot.lane.b32.xlu0 %v600, 64
    %v1344 = vpop.permute.xlu0 %1343
    %1345 = vrot.lane.b32.xlu0 %v601, 64
    %v1346 = vpop.permute.xlu0 %1345
    %1347 = vrot.lane.b32.xlu0 %v602, 64
    %v1348 = vpop.permute.xlu0 %1347
    %1349 = vrot.lane.b32.xlu0 %v603, 64
    %v1350 = vpop.permute.xlu0 %1349
    %1351 = vrot.lane.b32.xlu0 %v604, 64
    %v1352 = vpop.permute.xlu0 %1351
    %1353 = vrot.lane.b32.xlu0 %v605, 64
    %v1354 = vpop.permute.xlu0 %1353
    %1355 = vrot.lane.b32.xlu0 %v606, 64
    %v1356 = vpop.permute.xlu0 %1355
    %1357 = vrot.lane.b32.xlu0 %v607, 64
    %v1358 = vpop.permute.xlu0 %1357
    %1359 = vrot.lane.b32.xlu0 %v608, 64
    %v1360 = vpop.permute.xlu0 %1359
    %1361 = vrot.lane.b32.xlu0 %v609, 64
    %v1362 = vpop.permute.xlu0 %1361
    %1363 = vrot.lane.b32.xlu0 %v610, 64
    %v1364 = vpop.permute.xlu0 %1363
    %1365 = vrot.lane.b32.xlu0 %v611, 64
    %v1366 = vpop.permute.xlu0 %1365
    %1367 = vrot.lane.b32.xlu0 %v612, 64
    %v1368 = vpop.permute.xlu0 %1367
    %1369 = vrot.lane.b32.xlu0 %v613, 64
    %v1370 = vpop.permute.xlu0 %1369
    %1371 = vrot.lane.b32.xlu0 %v614, 64
    %v1372 = vpop.permute.xlu0 %1371
    %1373 = vrot.lane.b32.xlu0 %v615, 64
    %v1374 = vpop.permute.xlu0 %1373
    %1375 = vrot.lane.b32.xlu0 %v616, 64
    %v1376 = vpop.permute.xlu0 %1375
    %1377 = vrot.lane.b32.xlu0 %v617, 64
    %v1378 = vpop.permute.xlu0 %1377
    %1379 = vrot.lane.b32.xlu0 %v618, 64
    %v1380 = vpop.permute.xlu0 %1379
    %1381 = vrot.lane.b32.xlu0 %v619, 64
    %v1382 = vpop.permute.xlu0 %1381
    %1383 = vrot.lane.b32.xlu0 %v620, 64
    %v1384 = vpop.permute.xlu0 %1383
    %1385 = vrot.lane.b32.xlu0 %v621, 64
    %v1386 = vpop.permute.xlu0 %1385
    %1387 = vrot.lane.b32.xlu0 %v622, 64
    %v1388 = vpop.permute.xlu0 %1387
    %1389 = vrot.lane.b32.xlu0 %v623, 64
    %v1390 = vpop.permute.xlu0 %1389
    %1391 = vrot.lane.b32.xlu0 %v624, 64
    %v1392 = vpop.permute.xlu0 %1391
    %1393 = vrot.lane.b32.xlu0 %v625, 64
    %v1394 = vpop.permute.xlu0 %1393
    %1427 = vrot.lane.b32.xlu0 %v690, 96
    %v1428 = vpop.permute.xlu0 %1427
    %1429 = vrot.lane.b32.xlu0 %v691, 96
    %v1430 = vpop.permute.xlu0 %1429
    %1431 = vrot.lane.b32.xlu0 %v692, 96
    %v1432 = vpop.permute.xlu0 %1431
    %1433 = vrot.lane.b32.xlu0 %v693, 96
    %v1434 = vpop.permute.xlu0 %1433
    %1435 = vrot.lane.b32.xlu0 %v694, 96
    %v1436 = vpop.permute.xlu0 %1435
    %1437 = vrot.lane.b32.xlu0 %v695, 96
    %v1438 = vpop.permute.xlu0 %1437
    %1439 = vrot.lane.b32.xlu0 %v696, 96
    %v1440 = vpop.permute.xlu0 %1439
    %1441 = vrot.lane.b32.xlu0 %v697, 96
    %v1442 = vpop.permute.xlu0 %1441
    %1443 = vrot.lane.b32.xlu0 %v698, 96
    %v1444 = vpop.permute.xlu0 %1443
    %1445 = vrot.lane.b32.xlu0 %v699, 96
    %v1446 = vpop.permute.xlu0 %1445
    %1447 = vrot.lane.b32.xlu0 %v700, 96
    %v1448 = vpop.permute.xlu0 %1447
    %1449 = vrot.lane.b32.xlu0 %v701, 96
    %v1450 = vpop.permute.xlu0 %1449
    %1451 = vrot.lane.b32.xlu0 %v702, 96
    %v1452 = vpop.permute.xlu0 %1451
    %1453 = vrot.lane.b32.xlu0 %v703, 96
    %v1454 = vpop.permute.xlu0 %1453
    %1455 = vrot.lane.b32.xlu0 %v704, 96
    %v1456 = vpop.permute.xlu0 %1455
    %1457 = vrot.lane.b32.xlu0 %v705, 96
    %v1458 = vpop.permute.xlu0 %1457
    %1459 = vrot.lane.b32.xlu0 %v706, 96
    %v1460 = vpop.permute.xlu0 %1459
    %1461 = vrot.lane.b32.xlu0 %v707, 96
    %v1462 = vpop.permute.xlu0 %1461
    %1463 = vrot.lane.b32.xlu0 %v708, 96
    %v1464 = vpop.permute.xlu0 %1463
    %1465 = vrot.lane.b32.xlu0 %v709, 96
    %v1466 = vpop.permute.xlu0 %1465
    %1467 = vrot.lane.b32.xlu0 %v710, 96
    %v1468 = vpop.permute.xlu0 %1467
    %1469 = vrot.lane.b32.xlu0 %v711, 96
    %v1470 = vpop.permute.xlu0 %1469
    %1471 = vrot.lane.b32.xlu0 %v712, 96
    %v1472 = vpop.permute.xlu0 %1471
    %1473 = vrot.lane.b32.xlu0 %v713, 96
    %v1474 = vpop.permute.xlu0 %1473
    %1475 = vrot.lane.b32.xlu0 %v714, 96
    %v1476 = vpop.permute.xlu0 %1475
    %1477 = vrot.lane.b32.xlu0 %v715, 96
    %v1478 = vpop.permute.xlu0 %1477
    %1479 = vrot.lane.b32.xlu0 %v716, 96
    %v1480 = vpop.permute.xlu0 %1479
    %1481 = vrot.lane.b32.xlu0 %v717, 96
    %v1482 = vpop.permute.xlu0 %1481
    %1483 = vrot.lane.b32.xlu0 %v718, 96
    %v1484 = vpop.permute.xlu0 %1483
    %1485 = vrot.lane.b32.xlu0 %v719, 96
    %v1486 = vpop.permute.xlu0 %1485
    %1487 = vrot.lane.b32.xlu0 %v720, 96
    %v1488 = vpop.permute.xlu0 %1487
    %1489 = vrot.lane.b32.xlu0 %v721, 96
    %v1490 = vpop.permute.xlu0 %1489
    %1523 = vrot.lane.b32.xlu0 %v882, 32
    %v1524 = vpop.permute.xlu0 %1523
    %1525 = vrot.lane.b32.xlu0 %v883, 32
    %v1526 = vpop.permute.xlu0 %1525
    %1527 = vrot.lane.b32.xlu0 %v884, 32
    %v1528 = vpop.permute.xlu0 %1527
    %1529 = vrot.lane.b32.xlu0 %v885, 32
    %v1530 = vpop.permute.xlu0 %1529
    %1531 = vrot.lane.b32.xlu0 %v886, 32
    %v1532 = vpop.permute.xlu0 %1531
    %1533 = vrot.lane.b32.xlu0 %v887, 32
    %v1534 = vpop.permute.xlu0 %1533
    %1535 = vrot.lane.b32.xlu0 %v888, 32
    %v1536 = vpop.permute.xlu0 %1535
    %1537 = vrot.lane.b32.xlu0 %v889, 32
    %v1538 = vpop.permute.xlu0 %1537
    %1539 = vrot.lane.b32.xlu0 %v890, 32
    %v1540 = vpop.permute.xlu0 %1539
    %1541 = vrot.lane.b32.xlu0 %v891, 32
    %v1542 = vpop.permute.xlu0 %1541
    %1543 = vrot.lane.b32.xlu0 %v892, 32
    %v1544 = vpop.permute.xlu0 %1543
    %1545 = vrot.lane.b32.xlu0 %v893, 32
    %v1546 = vpop.permute.xlu0 %1545
    %1547 = vrot.lane.b32.xlu0 %v894, 32
    %v1548 = vpop.permute.xlu0 %1547
    %1549 = vrot.lane.b32.xlu0 %v895, 32
    %v1550 = vpop.permute.xlu0 %1549
    %1551 = vrot.lane.b32.xlu0 %v896, 32
    %v1552 = vpop.permute.xlu0 %1551
    %1553 = vrot.lane.b32.xlu0 %v897, 32
    %v1554 = vpop.permute.xlu0 %1553
    %1555 = vrot.lane.b32.xlu0 %v898, 32
    %v1556 = vpop.permute.xlu0 %1555
    %1557 = vrot.lane.b32.xlu0 %v899, 32
    %v1558 = vpop.permute.xlu0 %1557
    %1559 = vrot.lane.b32.xlu0 %v900, 32
    %v1560 = vpop.permute.xlu0 %1559
    %1561 = vrot.lane.b32.xlu0 %v901, 32
    %v1562 = vpop.permute.xlu0 %1561
    %1563 = vrot.lane.b32.xlu0 %v902, 32
    %v1564 = vpop.permute.xlu0 %1563
    %1565 = vrot.lane.b32.xlu0 %v903, 32
    %v1566 = vpop.permute.xlu0 %1565
    %1567 = vrot.lane.b32.xlu0 %v904, 32
    %v1568 = vpop.permute.xlu0 %1567
    %1569 = vrot.lane.b32.xlu0 %v905, 32
    %v1570 = vpop.permute.xlu0 %1569
    %1571 = vrot.lane.b32.xlu0 %v906, 32
    %v1572 = vpop.permute.xlu0 %1571
    %1573 = vrot.lane.b32.xlu0 %v907, 32
    %v1574 = vpop.permute.xlu0 %1573
    %1575 = vrot.lane.b32.xlu0 %v908, 32
    %v1576 = vpop.permute.xlu0 %1575
    %1577 = vrot.lane.b32.xlu0 %v909, 32
    %v1578 = vpop.permute.xlu0 %1577
    %1579 = vrot.lane.b32.xlu0 %v910, 32
    %v1580 = vpop.permute.xlu0 %1579
    %1581 = vrot.lane.b32.xlu0 %v911, 32
    %v1582 = vpop.permute.xlu0 %1581
    %1583 = vrot.lane.b32.xlu0 %v912, 32
    %v1584 = vpop.permute.xlu0 %1583
    %1585 = vrot.lane.b32.xlu0 %v913, 32
    %v1586 = vpop.permute.xlu0 %1585
    %1619 = vrot.lane.b32.xlu0 %v979, 64
    %v1620 = vpop.permute.xlu0 %1619
    %1621 = vrot.lane.b32.xlu0 %v980, 64
    %v1622 = vpop.permute.xlu0 %1621
    %1623 = vrot.lane.b32.xlu0 %v981, 64
    %v1624 = vpop.permute.xlu0 %1623
    %1625 = vrot.lane.b32.xlu0 %v982, 64
    %v1626 = vpop.permute.xlu0 %1625
    %1627 = vrot.lane.b32.xlu0 %v983, 64
    %v1628 = vpop.permute.xlu0 %1627
    %1629 = vrot.lane.b32.xlu0 %v984, 64
    %v1630 = vpop.permute.xlu0 %1629
    %1631 = vrot.lane.b32.xlu0 %v985, 64
    %v1632 = vpop.permute.xlu0 %1631
    %1633 = vrot.lane.b32.xlu0 %v986, 64
    %v1634 = vpop.permute.xlu0 %1633
    %1635 = vrot.lane.b32.xlu0 %v987, 64
    %v1636 = vpop.permute.xlu0 %1635
    %1637 = vrot.lane.b32.xlu0 %v988, 64
    %v1638 = vpop.permute.xlu0 %1637
    %1639 = vrot.lane.b32.xlu0 %v989, 64
    %v1640 = vpop.permute.xlu0 %1639
    %1641 = vrot.lane.b32.xlu0 %v990, 64
    %v1642 = vpop.permute.xlu0 %1641
    %1643 = vrot.lane.b32.xlu0 %v991, 64
    %v1644 = vpop.permute.xlu0 %1643
    %1645 = vrot.lane.b32.xlu0 %v992, 64
    %v1646 = vpop.permute.xlu0 %1645
    %1647 = vrot.lane.b32.xlu0 %v993, 64
    %v1648 = vpop.permute.xlu0 %1647
    %1649 = vrot.lane.b32.xlu0 %v994, 64
    %v1650 = vpop.permute.xlu0 %1649
    %1651 = vrot.lane.b32.xlu0 %v995, 64
    %v1652 = vpop.permute.xlu0 %1651
    %1653 = vrot.lane.b32.xlu0 %v996, 64
    %v1654 = vpop.permute.xlu0 %1653
    %1655 = vrot.lane.b32.xlu0 %v997, 64
    %v1656 = vpop.permute.xlu0 %1655
    %1657 = vrot.lane.b32.xlu0 %v998, 64
    %v1658 = vpop.permute.xlu0 %1657
    %1659 = vrot.lane.b32.xlu0 %v999, 64
    %v1660 = vpop.permute.xlu0 %1659
    %1661 = vrot.lane.b32.xlu0 %v1000, 64
    %v1662 = vpop.permute.xlu0 %1661
    %1663 = vrot.lane.b32.xlu0 %v1001, 64
    %v1664 = vpop.permute.xlu0 %1663
    %1665 = vrot.lane.b32.xlu0 %v1002, 64
    %v1666 = vpop.permute.xlu0 %1665
    %1667 = vrot.lane.b32.xlu0 %v1003, 64
    %v1668 = vpop.permute.xlu0 %1667
    %1669 = vrot.lane.b32.xlu0 %v1004, 64
    %v1670 = vpop.permute.xlu0 %1669
    %1671 = vrot.lane.b32.xlu0 %v1005, 64
    %v1672 = vpop.permute.xlu0 %1671
    %1673 = vrot.lane.b32.xlu0 %v1006, 64
    %v1674 = vpop.permute.xlu0 %1673
    %1675 = vrot.lane.b32.xlu0 %v1007, 64
    %v1676 = vpop.permute.xlu0 %1675
    %1677 = vrot.lane.b32.xlu0 %v1008, 64
    %v1678 = vpop.permute.xlu0 %1677
    %1679 = vrot.lane.b32.xlu0 %v1009, 64
    %v1680 = vpop.permute.xlu0 %1679
    %1681 = vrot.lane.b32.xlu0 %v1010, 64
    %v1682 = vpop.permute.xlu0 %1681
    %1715 = vrot.lane.b32.xlu0 %v1075, 96
    %v1716 = vpop.permute.xlu0 %1715
    %1717 = vrot.lane.b32.xlu0 %v1076, 96
    %v1718 = vpop.permute.xlu0 %1717
    %1719 = vrot.lane.b32.xlu0 %v1077, 96
    %v1720 = vpop.permute.xlu0 %1719
    %1721 = vrot.lane.b32.xlu0 %v1078, 96
    %v1722 = vpop.permute.xlu0 %1721
    %1723 = vrot.lane.b32.xlu0 %v1079, 96
    %v1724 = vpop.permute.xlu0 %1723
    %1725 = vrot.lane.b32.xlu0 %v1080, 96
    %v1726 = vpop.permute.xlu0 %1725
    %1727 = vrot.lane.b32.xlu0 %v1081, 96
    %v1728 = vpop.permute.xlu0 %1727
    %1729 = vrot.lane.b32.xlu0 %v1082, 96
    %v1730 = vpop.permute.xlu0 %1729
    %1731 = vrot.lane.b32.xlu0 %v1083, 96
    %v1732 = vpop.permute.xlu0 %1731
    %1733 = vrot.lane.b32.xlu0 %v1084, 96
    %v1734 = vpop.permute.xlu0 %1733
    %1735 = vrot.lane.b32.xlu0 %v1085, 96
    %v1736 = vpop.permute.xlu0 %1735
    %1737 = vrot.lane.b32.xlu0 %v1086, 96
    %v1738 = vpop.permute.xlu0 %1737
    %1739 = vrot.lane.b32.xlu0 %v1087, 96
    %v1740 = vpop.permute.xlu0 %1739
    %1741 = vrot.lane.b32.xlu0 %v1088, 96
    %v1742 = vpop.permute.xlu0 %1741
    %1743 = vrot.lane.b32.xlu0 %v1089, 96
    %v1744 = vpop.permute.xlu0 %1743
    %1745 = vrot.lane.b32.xlu0 %v1090, 96
    %v1746 = vpop.permute.xlu0 %1745
    %1747 = vrot.lane.b32.xlu0 %v1091, 96
    %v1748 = vpop.permute.xlu0 %1747
    %1749 = vrot.lane.b32.xlu0 %v1092, 96
    %v1750 = vpop.permute.xlu0 %1749
    %1751 = vrot.lane.b32.xlu0 %v1093, 96
    %v1752 = vpop.permute.xlu0 %1751
    %1753 = vrot.lane.b32.xlu0 %v1094, 96
    %v1754 = vpop.permute.xlu0 %1753
    %1755 = vrot.lane.b32.xlu0 %v1095, 96
    %v1756 = vpop.permute.xlu0 %1755
    %1757 = vrot.lane.b32.xlu0 %v1096, 96
    %v1758 = vpop.permute.xlu0 %1757
    %1759 = vrot.lane.b32.xlu0 %v1097, 96
    %v1760 = vpop.permute.xlu0 %1759
    %1761 = vrot.lane.b32.xlu0 %v1098, 96
    %v1762 = vpop.permute.xlu0 %1761
    %1763 = vrot.lane.b32.xlu0 %v1099, 96
    %v1764 = vpop.permute.xlu0 %1763
    %1765 = vrot.lane.b32.xlu0 %v1100, 96
    %v1766 = vpop.permute.xlu0 %1765
    %1767 = vrot.lane.b32.xlu0 %v1101, 96
    %v1768 = vpop.permute.xlu0 %1767
    %1769 = vrot.lane.b32.xlu0 %v1102, 96
    %v1770 = vpop.permute.xlu0 %1769
    %1771 = vrot.lane.b32.xlu0 %v1103, 96
    %v1772 = vpop.permute.xlu0 %1771
    %1773 = vrot.lane.b32.xlu0 %v1104, 96
    %v1774 = vpop.permute.xlu0 %1773
    %1775 = vrot.lane.b32.xlu0 %v1105, 96
    %v1776 = vpop.permute.xlu0 %1775
    %1777 = vrot.lane.b32.xlu0 %v1106, 96
    %v1778 = vpop.permute.xlu0 %1777
    %v1781 = vsel %vm36, %v402, %v1236
    %v1784 = vsel %vm36, %v403, %v1238
    %v1787 = vsel %vm36, %v404, %v1240
    %v1790 = vsel %vm36, %v405, %v1242
    %v1793 = vsel %vm36, %v406, %v1244
    %v1796 = vsel %vm36, %v407, %v1246
    %v1799 = vsel %vm36, %v408, %v1248
    %v1802 = vsel %vm36, %v409, %v1250
    %v1805 = vsel %vm36, %v410, %v1252
    %v1808 = vsel %vm36, %v411, %v1254
    %v1811 = vsel %vm36, %v412, %v1256
    %v1814 = vsel %vm36, %v413, %v1258
    %v1817 = vsel %vm36, %v414, %v1260
    %v1820 = vsel %vm36, %v415, %v1262
    %v1823 = vsel %vm36, %v416, %v1264
    %v1826 = vsel %vm36, %v417, %v1266
    %v1829 = vsel %vm36, %v418, %v1268
    %v1832 = vsel %vm36, %v419, %v1270
    %v1835 = vsel %vm36, %v420, %v1272
    %v1838 = vsel %vm36, %v421, %v1274
    %v1841 = vsel %vm36, %v422, %v1276
    %v1844 = vsel %vm36, %v423, %v1278
    %v1847 = vsel %vm36, %v424, %v1280
    %v1850 = vsel %vm36, %v425, %v1282
    %v1853 = vsel %vm36, %v426, %v1284
    %v1856 = vsel %vm36, %v427, %v1286
    %v1859 = vsel %vm36, %v428, %v1288
    %v1862 = vsel %vm36, %v429, %v1290
    %v1865 = vsel %vm36, %v430, %v1292
    %v1868 = vsel %vm36, %v431, %v1294
    %v1871 = vsel %vm36, %v432, %v1296
    %v1874 = vsel %vm36, %v433, %v1298
    %vm1875 = vcmask 523264
    %v1877 = vsel %vm1875, %v1781, %v1332
    %v1879 = vsel %vm1875, %v1784, %v1334
    %v1881 = vsel %vm1875, %v1787, %v1336
    %v1883 = vsel %vm1875, %v1790, %v1338
    %v1885 = vsel %vm1875, %v1793, %v1340
    %v1887 = vsel %vm1875, %v1796, %v1342
    %v1889 = vsel %vm1875, %v1799, %v1344
    %v1891 = vsel %vm1875, %v1802, %v1346
    %v1893 = vsel %vm1875, %v1805, %v1348
    %v1895 = vsel %vm1875, %v1808, %v1350
    %v1897 = vsel %vm1875, %v1811, %v1352
    %v1899 = vsel %vm1875, %v1814, %v1354
    %v1901 = vsel %vm1875, %v1817, %v1356
    %v1903 = vsel %vm1875, %v1820, %v1358
    %v1905 = vsel %vm1875, %v1823, %v1360
    %v1907 = vsel %vm1875, %v1826, %v1362
    %v1909 = vsel %vm1875, %v1829, %v1364
    %v1911 = vsel %vm1875, %v1832, %v1366
    %v1913 = vsel %vm1875, %v1835, %v1368
    %v1915 = vsel %vm1875, %v1838, %v1370
    %v1917 = vsel %vm1875, %v1841, %v1372
    %v1919 = vsel %vm1875, %v1844, %v1374
    %v1921 = vsel %vm1875, %v1847, %v1376
    %v1923 = vsel %vm1875, %v1850, %v1378
    %v1925 = vsel %vm1875, %v1853, %v1380
    %v1927 = vsel %vm1875, %v1856, %v1382
    %v1929 = vsel %vm1875, %v1859, %v1384
    %v1931 = vsel %vm1875, %v1862, %v1386
    %v1933 = vsel %vm1875, %v1865, %v1388
    %v1935 = vsel %vm1875, %v1868, %v1390
    %v1937 = vsel %vm1875, %v1871, %v1392
    %v1939 = vsel %vm1875, %v1874, %v1394
    %vm1940 = vcmask 785408
    %v1942 = vsel %vm1940, %v1877, %v1428
    %v1945 = vsel %vm1940, %v1879, %v1430
    %v1948 = vsel %vm1940, %v1881, %v1432
    %v1951 = vsel %vm1940, %v1883, %v1434
    %v1954 = vsel %vm1940, %v1885, %v1436
    %v1957 = vsel %vm1940, %v1887, %v1438
    %v1960 = vsel %vm1940, %v1889, %v1440
    %v1963 = vsel %vm1940, %v1891, %v1442
    %v1966 = vsel %vm1940, %v1893, %v1444
    %v1969 = vsel %vm1940, %v1895, %v1446
    %v1972 = vsel %vm1940, %v1897, %v1448
    %v1975 = vsel %vm1940, %v1899, %v1450
    %v1978 = vsel %vm1940, %v1901, %v1452
    %v1981 = vsel %vm1940, %v1903, %v1454
    %v1984 = vsel %vm1940, %v1905, %v1456
    %v1987 = vsel %vm1940, %v1907, %v1458
    %v1990 = vsel %vm1940, %v1909, %v1460
    %v1993 = vsel %vm1940, %v1911, %v1462
    %v1996 = vsel %vm1940, %v1913, %v1464
    %v1999 = vsel %vm1940, %v1915, %v1466
    %v2002 = vsel %vm1940, %v1917, %v1468
    %v2005 = vsel %vm1940, %v1919, %v1470
    %v2008 = vsel %vm1940, %v1921, %v1472
    %v2011 = vsel %vm1940, %v1923, %v1474
    %v2014 = vsel %vm1940, %v1925, %v1476
    %v2017 = vsel %vm1940, %v1927, %v1478
    %v2020 = vsel %vm1940, %v1929, %v1480
    %v2023 = vsel %vm1940, %v1931, %v1482
    %v2026 = vsel %vm1940, %v1933, %v1484
    %v2029 = vsel %vm1940, %v1935, %v1486
    %v2032 = vsel %vm1940, %v1937, %v1488
    %v2035 = vsel %vm1940, %v1939, %v1490
    %v2039 = vsel %vm36, %v786, %v1524
    %v2042 = vsel %vm36, %v787, %v1526
    %v2045 = vsel %vm36, %v788, %v1528
    %v2048 = vsel %vm36, %v789, %v1530
    %v2051 = vsel %vm36, %v790, %v1532
    %v2054 = vsel %vm36, %v791, %v1534
    %v2057 = vsel %vm36, %v792, %v1536
    %v2060 = vsel %vm36, %v793, %v1538
    %v2063 = vsel %vm36, %v794, %v1540
    %v2066 = vsel %vm36, %v795, %v1542
    %v2069 = vsel %vm36, %v796, %v1544
    %v2072 = vsel %vm36, %v797, %v1546
    %v2075 = vsel %vm36, %v798, %v1548
    %v2078 = vsel %vm36, %v799, %v1550
    %v2081 = vsel %vm36, %v800, %v1552
    %v2084 = vsel %vm36, %v801, %v1554
    %v2087 = vsel %vm36, %v802, %v1556
    %v2090 = vsel %vm36, %v803, %v1558
    %v2093 = vsel %vm36, %v804, %v1560
    %v2096 = vsel %vm36, %v805, %v1562
    %v2099 = vsel %vm36, %v806, %v1564
    %v2102 = vsel %vm36, %v807, %v1566
    %v2105 = vsel %vm36, %v808, %v1568
    %v2108 = vsel %vm36, %v809, %v1570
    %v2111 = vsel %vm36, %v810, %v1572
    %v2114 = vsel %vm36, %v811, %v1574
    %v2117 = vsel %vm36, %v812, %v1576
    %v2120 = vsel %vm36, %v813, %v1578
    %v2123 = vsel %vm36, %v814, %v1580
    %v2126 = vsel %vm36, %v815, %v1582
    %v2129 = vsel %vm36, %v816, %v1584
    %v2132 = vsel %vm36, %v817, %v1586
    %v2134 = vsel %vm1875, %v2039, %v1620
    %v2136 = vsel %vm1875, %v2042, %v1622
    %v2138 = vsel %vm1875, %v2045, %v1624
    %v2140 = vsel %vm1875, %v2048, %v1626
    %v2142 = vsel %vm1875, %v2051, %v1628
    %v2144 = vsel %vm1875, %v2054, %v1630
    %v2146 = vsel %vm1875, %v2057, %v1632
    %v2148 = vsel %vm1875, %v2060, %v1634
    %v2150 = vsel %vm1875, %v2063, %v1636
    %v2152 = vsel %vm1875, %v2066, %v1638
    %v2154 = vsel %vm1875, %v2069, %v1640
    %v2156 = vsel %vm1875, %v2072, %v1642
    %v2158 = vsel %vm1875, %v2075, %v1644
    %v2160 = vsel %vm1875, %v2078, %v1646
    %v2162 = vsel %vm1875, %v2081, %v1648
    %v2164 = vsel %vm1875, %v2084, %v1650
    %v2166 = vsel %vm1875, %v2087, %v1652
    %v2168 = vsel %vm1875, %v2090, %v1654
    %v2170 = vsel %vm1875, %v2093, %v1656
    %v2172 = vsel %vm1875, %v2096, %v1658
    %v2174 = vsel %vm1875, %v2099, %v1660
    %v2176 = vsel %vm1875, %v2102, %v1662
    %v2178 = vsel %vm1875, %v2105, %v1664
    %v2180 = vsel %vm1875, %v2108, %v1666
    %v2182 = vsel %vm1875, %v2111, %v1668
    %v2184 = vsel %vm1875, %v2114, %v1670
    %v2186 = vsel %vm1875, %v2117, %v1672
    %v2188 = vsel %vm1875, %v2120, %v1674
    %v2190 = vsel %vm1875, %v2123, %v1676
    %v2192 = vsel %vm1875, %v2126, %v1678
    %v2194 = vsel %vm1875, %v2129, %v1680
    %v2196 = vsel %vm1875, %v2132, %v1682
    %v2198 = vsel %vm1940, %v2134, %v1716
    %v2201 = vsel %vm1940, %v2136, %v1718
    %v2204 = vsel %vm1940, %v2138, %v1720
    %v2207 = vsel %vm1940, %v2140, %v1722
    %v2210 = vsel %vm1940, %v2142, %v1724
    %v2213 = vsel %vm1940, %v2144, %v1726
    %v2216 = vsel %vm1940, %v2146, %v1728
    %v2219 = vsel %vm1940, %v2148, %v1730
    %v2222 = vsel %vm1940, %v2150, %v1732
    %v2225 = vsel %vm1940, %v2152, %v1734
    %v2228 = vsel %vm1940, %v2154, %v1736
    %v2231 = vsel %vm1940, %v2156, %v1738
    %v2234 = vsel %vm1940, %v2158, %v1740
    %v2237 = vsel %vm1940, %v2160, %v1742
    %v2240 = vsel %vm1940, %v2162, %v1744
    %v2243 = vsel %vm1940, %v2164, %v1746
    %v2246 = vsel %vm1940, %v2166, %v1748
    %v2249 = vsel %vm1940, %v2168, %v1750
    %v2252 = vsel %vm1940, %v2170, %v1752
    %v2255 = vsel %vm1940, %v2172, %v1754
    %v2258 = vsel %vm1940, %v2174, %v1756
    %v2261 = vsel %vm1940, %v2176, %v1758
    %v2264 = vsel %vm1940, %v2178, %v1760
    %v2267 = vsel %vm1940, %v2180, %v1762
    %v2270 = vsel %vm1940, %v2182, %v1764
    %v2273 = vsel %vm1940, %v2184, %v1766
    %v2276 = vsel %vm1940, %v2186, %v1768
    %v2279 = vsel %vm1940, %v2188, %v1770
    %v2282 = vsel %vm1940, %v2190, %v1772
    %v2285 = vsel %vm1940, %v2192, %v1774
    %v2288 = vsel %vm1940, %v2194, %v1776
    %v2291 = vsel %vm1940, %v2196, %v1778
    %v2293 = vld [vmem:[%s1] sm:$0xf]
    %v2294 = vld [vmem:[%s1 + $0x4] sm:$0xf]
    %v2295 = vld [vmem:[%s1 + $0x8] sm:$0xf]
    %v2296 = vld [vmem:[%s1 + $0xc] sm:$0xf]
    %v2297 = vld [vmem:[%s1 + $0x10] sm:$0xf]
    %v2298 = vld [vmem:[%s1 + $0x14] sm:$0xf]
    %v2299 = vld [vmem:[%s1 + $0x18] sm:$0xf]
    %v2300 = vld [vmem:[%s1 + $0x1c] sm:$0xf]
    %v2301 = vld [vmem:[%s1 + $0x20] sm:$0xf]
    %v2302 = vld [vmem:[%s1 + $0x24] sm:$0xf]
    %v2303 = vld [vmem:[%s1 + $0x28] sm:$0xf]
    %v2304 = vld [vmem:[%s1 + $0x2c] sm:$0xf]
    %v2305 = vld [vmem:[%s1 + $0x30] sm:$0xf]
    %v2306 = vld [vmem:[%s1 + $0x34] sm:$0xf]
    %v2307 = vld [vmem:[%s1 + $0x38] sm:$0xf]
    %v2308 = vld [vmem:[%s1 + $0x3c] sm:$0xf]
    %v2309 = vld [vmem:[%s1 + $0x40] sm:$0xf]
    %v2310 = vld [vmem:[%s1 + $0x44] sm:$0xf]
    %v2311 = vld [vmem:[%s1 + $0x48] sm:$0xf]
    %v2312 = vld [vmem:[%s1 + $0x4c] sm:$0xf]
    %v2313 = vld [vmem:[%s1 + $0x50] sm:$0xf]
    %v2314 = vld [vmem:[%s1 + $0x54] sm:$0xf]
    %v2315 = vld [vmem:[%s1 + $0x58] sm:$0xf]
    %v2316 = vld [vmem:[%s1 + $0x5c] sm:$0xf]
    %v2317 = vld [vmem:[%s1 + $0x60] sm:$0xf]
    %v2318 = vld [vmem:[%s1 + $0x64] sm:$0xf]
    %v2319 = vld [vmem:[%s1 + $0x68] sm:$0xf]
    %v2320 = vld [vmem:[%s1 + $0x6c] sm:$0xf]
    %v2321 = vld [vmem:[%s1 + $0x70] sm:$0xf]
    %v2322 = vld [vmem:[%s1 + $0x74] sm:$0xf]
    %v2323 = vld [vmem:[%s1 + $0x78] sm:$0xf]
    %v2324 = vld [vmem:[%s1 + $0x7c] sm:$0xf]
    %v2325 = vld [vmem:[%s1 + $0x80] sm:$0xf]
    %v2326 = vld [vmem:[%s1 + $0x84] sm:$0xf]
    %v2327 = vld [vmem:[%s1 + $0x88] sm:$0xf]
    %v2328 = vld [vmem:[%s1 + $0x8c] sm:$0xf]
    %v2329 = vld [vmem:[%s2] sm:$0x1]
    %v2331 = vlaneseq
    %v2332 = vshrl.u32 %v2331, 7
    %v2333 = vsub.s32 0, %v2332
    %v2334 = vrot.slane %v2329, %v2333
    %v2372 = vunpack.c.l.b16 %v2293
    %v2373 = vunpack.c.l.b16 %v2294
    %v2374 = vunpack.c.l.b16 %v2295
    %v2375 = vunpack.c.l.b16 %v2296
    %v2376 = vunpack.c.l.b16 %v2297
    %v2377 = vunpack.c.l.b16 %v2298
    %v2378 = vunpack.c.l.b16 %v2299
    %v2379 = vunpack.c.l.b16 %v2300
    %v2380 = vunpack.c.l.b16 %v2301
    %v2381 = vunpack.c.l.b16 %v2302
    %v2382 = vunpack.c.l.b16 %v2303
    %v2383 = vunpack.c.l.b16 %v2304
    %v2384 = vunpack.c.l.b16 %v2305
    %v2385 = vunpack.c.l.b16 %v2306
    %v2386 = vunpack.c.l.b16 %v2307
    %v2387 = vunpack.c.l.b16 %v2308
    %v2388 = vunpack.c.l.b16 %v2309
    %v2389 = vunpack.c.l.b16 %v2310
    %v2390 = vunpack.c.l.b16 %v2311
    %v2391 = vunpack.c.l.b16 %v2312
    %v2392 = vunpack.c.l.b16 %v2313
    %v2393 = vunpack.c.l.b16 %v2314
    %v2394 = vunpack.c.l.b16 %v2315
    %v2395 = vunpack.c.l.b16 %v2316
    %v2396 = vunpack.c.l.b16 %v2317
    %v2397 = vunpack.c.l.b16 %v2318
    %v2398 = vunpack.c.l.b16 %v2319
    %v2399 = vunpack.c.l.b16 %v2320
    %v2400 = vunpack.c.l.b16 %v2321
    %v2401 = vunpack.c.l.b16 %v2322
    %v2402 = vunpack.c.l.b16 %v2323
    %v2403 = vunpack.c.l.b16 %v2324
    %v2404 = vunpack.c.l.b16 %v2325
    %v2405 = vunpack.c.l.b16 %v2326
    %v2406 = vunpack.c.l.b16 %v2327
    %v2407 = vunpack.c.l.b16 %v2328
    %v2408 = vpack.c.b16 %v2373, %v2372
    %v2409 = vpack.c.b16 %v2375, %v2374
    %v2410 = vpack.c.b16 %v2377, %v2376
    %v2411 = vpack.c.b16 %v2379, %v2378
    %v2412 = vpack.c.b16 %v2381, %v2380
    %v2413 = vpack.c.b16 %v2383, %v2382
    %v2414 = vpack.c.b16 %v2385, %v2384
    %v2415 = vpack.c.b16 %v2387, %v2386
    %v2416 = vpack.c.b16 %v2389, %v2388
    %v2417 = vpack.c.b16 %v2391, %v2390
    %v2418 = vpack.c.b16 %v2393, %v2392
    %v2419 = vpack.c.b16 %v2395, %v2394
    %v2420 = vpack.c.b16 %v2397, %v2396
    %v2421 = vpack.c.b16 %v2399, %v2398
    %v2422 = vpack.c.b16 %v2401, %v2400
    %v2423 = vpack.c.b16 %v2403, %v2402
    %v2424 = vpack.c.b16 %v2405, %v2404
    %v2425 = vpack.c.b16 %v2407, %v2406
    %v2445 = vsel %vm36, %v1171, 0
    %v2448 = vsel %vm36, %v1172, 0
    %v2451 = vsel %vm36, %v1173, 0
    %v2454 = vsel %vm36, %v1174, 0
    %v2457 = vsel %vm36, %v1175, 0
    %v2460 = vsel %vm36, %v1176, 0
    %v2463 = vsel %vm36, %v1177, 0
    %v2466 = vsel %vm36, %v1178, 0
    %v2469 = vsel %vm36, %v1179, 0
    %v2472 = vsel %vm36, %v1180, 0
    %v2475 = vsel %vm36, %v1181, 0
    %v2478 = vsel %vm36, %v1182, 0
    %v2481 = vsel %vm36, %v1183, 0
    %v2484 = vsel %vm36, %v1184, 0
    %v2487 = vsel %vm36, %v1185, 0
    %v2490 = vsel %vm36, %v1186, 0
    %v2493 = vsel %vm36, %v1187, 0
    %v2496 = vsel %vm36, %v1188, 0
    %v2499 = vsel %vm36, %v1189, 0
    %v2502 = vsel %vm36, %v1190, 0
    %v2505 = vsel %vm36, %v1191, 0
    %v2508 = vsel %vm36, %v1192, 0
    %v2511 = vsel %vm36, %v1193, 0
    %v2514 = vsel %vm36, %v1194, 0
    %v2517 = vsel %vm36, %v1195, 0
    %v2520 = vsel %vm36, %v1196, 0
    %v2523 = vsel %vm36, %v1197, 0
    %v2526 = vsel %vm36, %v1198, 0
    %v2529 = vsel %vm36, %v1199, 0
    %v2532 = vsel %vm36, %v1200, 0
    %v2535 = vsel %vm36, %v1201, 0
    %v2538 = vsel %vm36, %v1202, 0
    %2540 = vmatprep.subr.bf16.mxu0 0
    %2541 = vmatpush1.bf16.msra.mxu0 %v2408
    %2542 = vmatprep.subr.bf16.mxu0 0
    %2543 = vmatpush1.bf16.msra.mxu0 %v2409
    %2544 = vmatprep.subr.bf16.mxu0 0
    %2545 = vmatpush1.bf16.msra.mxu0 %v2410
    %2546 = vmatprep.subr.bf16.mxu0 0
    %2547 = vmatpush1.bf16.msra.mxu0 %v2411
    %2548 = vmatprep.subr.bf16.mxu0 0
    %2549 = vmatpush1.bf16.msra.mxu0 %v2412
    %2550 = vmatprep.subr.bf16.mxu0 0
    %2551 = vmatpush1.bf16.msra.mxu0 %v2413
    %2552 = vmatprep.subr.bf16.mxu0 0
    %2553 = vmatpush1.bf16.msra.mxu0 %v2414
    %2554 = vmatprep.subr.bf16.mxu0 0
    %2555 = vmatpush1.bf16.msra.mxu0 %v2415
    %2556 = vmatprep.subr.bf16.mxu0 0
    %2557 = vmatpush1.bf16.msra.mxu0 %v2416
    %2558 = vmatprep.subr.bf16.mxu0 0
    %2559 = vmatpush1.bf16.msra.mxu0 %v2417
    %2560 = vmatprep.subr.bf16.mxu0 0
    %2561 = vmatpush1.bf16.msra.mxu0 %v2418
    %2562 = vmatprep.subr.bf16.mxu0 0
    %2563 = vmatpush1.bf16.msra.mxu0 %v2419
    %2564 = vmatprep.subr.bf16.mxu0 0
    %2565 = vmatpush1.bf16.msra.mxu0 %v2420
    %2566 = vmatprep.subr.bf16.mxu0 0
    %2567 = vmatpush1.bf16.msra.mxu0 %v2421
    %2568 = vmatprep.subr.bf16.mxu0 0
    %2569 = vmatpush1.bf16.msra.mxu0 %v2422
    %2570 = vmatprep.subr.bf16.mxu0 0
    %2571 = vmatpush1.bf16.msra.mxu0 %v2423
    %2572 = vmatprep.mubr.bf16.mxu0 %v2198
    %2573 = vmatmul.mubr.bf16.gmra.mrb[0].mxu0 %v1942
    %v2574 = vpop.f32.mrb[0].mxu0
    %v2575 = vadd.f32 %v2334, %v2574
    %v2576 = vpop.f32.mrb[0].mxu0
    %v2577 = vpop.f32.mrb[0].mxu0
    %v2578 = vadd.f32 %v2334, %v2577
    %v2579 = vpop.f32.mrb[0].mxu0
    %2580 = vmatprep.mubr.bf16.mxu0 %v2201
    %2581 = vmatmul.mubr.bf16.gmra.mrb[0].mxu0 %v1945
    %v2582 = vpop.f32.mrb[0].mxu0
    %v2583 = vadd.f32 %v2334, %v2582
    %v2584 = vpop.f32.mrb[0].mxu0
    %v2585 = vpop.f32.mrb[0].mxu0
    %v2586 = vadd.f32 %v2334, %v2585
    %v2587 = vpop.f32.mrb[0].mxu0
    %2588 = vmatprep.mubr.bf16.mxu0 %v2204
    %2589 = vmatmul.mubr.bf16.gmra.mrb[0].mxu0 %v1948
    %v2590 = vpop.f32.mrb[0].mxu0
    %v2591 = vadd.f32 %v2334, %v2590
    %v2592 = vpop.f32.mrb[0].mxu0
    %v2593 = vpop.f32.mrb[0].mxu0
    %v2594 = vadd.f32 %v2334, %v2593
    %v2595 = vpop.f32.mrb[0].mxu0
    %2596 = vmatprep.mubr.bf16.mxu0 %v2207
    %2597 = vmatmul.mubr.bf16.gmra.mrb[0].mxu0 %v1951
    %v2598 = vpop.f32.mrb[0].mxu0
    %v2599 = vadd.f32 %v2334, %v2598
    %v2600 = vpop.f32.mrb[0].mxu0
    %v2601 = vpop.f32.mrb[0].mxu0
    %v2602 = vadd.f32 %v2334, %v2601
    %v2603 = vpop.f32.mrb[0].mxu0
    %2604 = vmatprep.mubr.bf16.mxu0 %v2210
    %2605 = vmatmul.mubr.bf16.gmra.mrb[0].mxu0 %v1954
    %v2606 = vpop.f32.mrb[0].mxu0
    %v2607 = vadd.f32 %v2334, %v2606
    %v2608 = vpop.f32.mrb[0].mxu0
    %v2609 = vpop.f32.mrb[0].mxu0
    %v2610 = vadd.f32 %v2334, %v2609
    %v2611 = vpop.f32.mrb[0].mxu0
    %2612 = vmatprep.mubr.bf16.mxu0 %v2213
    %2613 = vmatmul.mubr.bf16.gmra.mrb[0].mxu0 %v1957
    %v2614 = vpop.f32.mrb[0].mxu0
    %v2615 = vadd.f32 %v2334, %v2614
    %v2616 = vpop.f32.mrb[0].mxu0
    %v2617 = vpop.f32.mrb[0].mxu0
    %v2618 = vadd.f32 %v2334, %v2617
    %v2619 = vpop.f32.mrb[0].mxu0
    %2620 = vmatprep.mubr.bf16.mxu0 %v2216
    %2621 = vmatmul.mubr.bf16.gmra.mrb[0].mxu0 %v1960
    %v2622 = vpop.f32.mrb[0].mxu0
    %v2623 = vadd.f32 %v2334, %v2622
    %v2624 = vpop.f32.mrb[0].mxu0
    %v2625 = vpop.f32.mrb[0].mxu0
    %v2626 = vadd.f32 %v2334, %v2625
    %v2627 = vpop.f32.mrb[0].mxu0
    %2628 = vmatprep.mubr.bf16.mxu0 %v2219
    %2629 = vmatmul.mubr.bf16.gmra.mrb[0].mxu0 %v1963
    %v2630 = vpop.f32.mrb[0].mxu0
    %v2631 = vadd.f32 %v2334, %v2630
    %v2632 = vpop.f32.mrb[0].mxu0
    %v2633 = vpop.f32.mrb[0].mxu0
    %v2634 = vadd.f32 %v2334, %v2633
    %v2635 = vpop.f32.mrb[0].mxu0
    %2636 = vmatprep.mubr.bf16.mxu0 %v2222
    %2637 = vmatmul.mubr.bf16.gmra.mrb[0].mxu0 %v1966
    %v2638 = vpop.f32.mrb[0].mxu0
    %v2639 = vadd.f32 %v2334, %v2638
    %v2640 = vpop.f32.mrb[0].mxu0
    %v2641 = vpop.f32.mrb[0].mxu0
    %v2642 = vadd.f32 %v2334, %v2641
    %v2643 = vpop.f32.mrb[0].mxu0
    %2644 = vmatprep.mubr.bf16.mxu0 %v2225
    %2645 = vmatmul.mubr.bf16.gmra.mrb[0].mxu0 %v1969
    %v2646 = vpop.f32.mrb[0].mxu0
    %v2647 = vadd.f32 %v2334, %v2646
    %v2648 = vpop.f32.mrb[0].mxu0
    %v2649 = vpop.f32.mrb[0].mxu0
    %v2650 = vadd.f32 %v2334, %v2649
    %v2651 = vpop.f32.mrb[0].mxu0
    %2652 = vmatprep.mubr.bf16.mxu0 %v2228
    %2653 = vmatmul.mubr.bf16.gmra.mrb[0].mxu0 %v1972
    %v2654 = vpop.f32.mrb[0].mxu0
    %v2655 = vadd.f32 %v2334, %v2654
    %v2656 = vpop.f32.mrb[0].mxu0
    %v2657 = vpop.f32.mrb[0].mxu0
    %v2658 = vadd.f32 %v2334, %v2657
    %v2659 = vpop.f32.mrb[0].mxu0
    %2660 = vmatprep.mubr.bf16.mxu0 %v2231
    %2661 = vmatmul.mubr.bf16.gmra.mrb[0].mxu0 %v1975
    %v2662 = vpop.f32.mrb[0].mxu0
    %v2663 = vadd.f32 %v2334, %v2662
    %v2664 = vpop.f32.mrb[0].mxu0
    %v2665 = vpop.f32.mrb[0].mxu0
    %v2666 = vadd.f32 %v2334, %v2665
    %v2667 = vpop.f32.mrb[0].mxu0
    %2668 = vmatprep.mubr.bf16.mxu0 %v2234
    %2669 = vmatmul.mubr.bf16.gmra.mrb[0].mxu0 %v1978
    %v2670 = vpop.f32.mrb[0].mxu0
    %v2671 = vadd.f32 %v2334, %v2670
    %v2672 = vpop.f32.mrb[0].mxu0
    %v2673 = vpop.f32.mrb[0].mxu0
    %v2674 = vadd.f32 %v2334, %v2673
    %v2675 = vpop.f32.mrb[0].mxu0
    %2676 = vmatprep.mubr.bf16.mxu0 %v2237
    %2677 = vmatmul.mubr.bf16.gmra.mrb[0].mxu0 %v1981
    %v2678 = vpop.f32.mrb[0].mxu0
    %v2679 = vadd.f32 %v2334, %v2678
    %v2680 = vpop.f32.mrb[0].mxu0
    %v2681 = vpop.f32.mrb[0].mxu0
    %v2682 = vadd.f32 %v2334, %v2681
    %v2683 = vpop.f32.mrb[0].mxu0
    %2684 = vmatprep.mubr.bf16.mxu0 %v2240
    %2685 = vmatmul.mubr.bf16.gmra.mrb[0].mxu0 %v1984
    %v2686 = vpop.f32.mrb[0].mxu0
    %v2687 = vadd.f32 %v2334, %v2686
    %v2688 = vpop.f32.mrb[0].mxu0
    %v2689 = vpop.f32.mrb[0].mxu0
    %v2690 = vadd.f32 %v2334, %v2689
    %v2691 = vpop.f32.mrb[0].mxu0
    %2692 = vmatprep.mubr.bf16.mxu0 %v2243
    %2693 = vmatmul.mubr.bf16.gmra.mrb[0].mxu0 %v1987
    %v2694 = vpop.f32.mrb[0].mxu0
    %v2695 = vadd.f32 %v2334, %v2694
    %v2696 = vpop.f32.mrb[0].mxu0
    %v2697 = vpop.f32.mrb[0].mxu0
    %v2698 = vadd.f32 %v2334, %v2697
    %v2699 = vpop.f32.mrb[0].mxu0
    %2700 = vmatprep.mubr.bf16.mxu0 %v2246
    %2701 = vmatmul.mubr.bf16.gmra.mrb[0].mxu0 %v1990
    %v2702 = vpop.f32.mrb[0].mxu0
    %v2703 = vadd.f32 %v2334, %v2702
    %v2704 = vpop.f32.mrb[0].mxu0
    %v2705 = vpop.f32.mrb[0].mxu0
    %v2706 = vadd.f32 %v2334, %v2705
    %v2707 = vpop.f32.mrb[0].mxu0
    %2708 = vmatprep.mubr.bf16.mxu0 %v2249
    %2709 = vmatmul.mubr.bf16.gmra.mrb[0].mxu0 %v1993
    %v2710 = vpop.f32.mrb[0].mxu0
    %v2711 = vadd.f32 %v2334, %v2710
    %v2712 = vpop.f32.mrb[0].mxu0
    %v2713 = vpop.f32.mrb[0].mxu0
    %v2714 = vadd.f32 %v2334, %v2713
    %v2715 = vpop.f32.mrb[0].mxu0
    %2716 = vmatprep.mubr.bf16.mxu0 %v2252
    %2717 = vmatmul.mubr.bf16.gmra.mrb[0].mxu0 %v1996
    %v2718 = vpop.f32.mrb[0].mxu0
    %v2719 = vadd.f32 %v2334, %v2718
    %v2720 = vpop.f32.mrb[0].mxu0
    %v2721 = vpop.f32.mrb[0].mxu0
    %v2722 = vadd.f32 %v2334, %v2721
    %v2723 = vpop.f32.mrb[0].mxu0
    %2724 = vmatprep.mubr.bf16.mxu0 %v2255
    %2725 = vmatmul.mubr.bf16.gmra.mrb[0].mxu0 %v1999
    %v2726 = vpop.f32.mrb[0].mxu0
    %v2727 = vadd.f32 %v2334, %v2726
    %v2728 = vpop.f32.mrb[0].mxu0
    %v2729 = vpop.f32.mrb[0].mxu0
    %v2730 = vadd.f32 %v2334, %v2729
    %v2731 = vpop.f32.mrb[0].mxu0
    %2732 = vmatprep.mubr.bf16.mxu0 %v2258
    %2733 = vmatmul.mubr.bf16.gmra.mrb[0].mxu0 %v2002
    %v2734 = vpop.f32.mrb[0].mxu0
    %v2735 = vadd.f32 %v2334, %v2734
    %v2736 = vpop.f32.mrb[0].mxu0
    %v2737 = vpop.f32.mrb[0].mxu0
    %v2738 = vadd.f32 %v2334, %v2737
    %v2739 = vpop.f32.mrb[0].mxu0
    %2740 = vmatprep.mubr.bf16.mxu0 %v2261
    %2741 = vmatmul.mubr.bf16.gmra.mrb[0].mxu0 %v2005
    %v2742 = vpop.f32.mrb[0].mxu0
    %v2743 = vadd.f32 %v2334, %v2742
    %v2744 = vpop.f32.mrb[0].mxu0
    %v2745 = vpop.f32.mrb[0].mxu0
    %v2746 = vadd.f32 %v2334, %v2745
    %v2747 = vpop.f32.mrb[0].mxu0
    %2748 = vmatprep.mubr.bf16.mxu0 %v2264
    %2749 = vmatmul.mubr.bf16.gmra.mrb[0].mxu0 %v2008
    %v2750 = vpop.f32.mrb[0].mxu0
    %v2751 = vadd.f32 %v2334, %v2750
    %v2752 = vpop.f32.mrb[0].mxu0
    %v2753 = vpop.f32.mrb[0].mxu0
    %v2754 = vadd.f32 %v2334, %v2753
    %v2755 = vpop.f32.mrb[0].mxu0
    %2756 = vmatprep.mubr.bf16.mxu0 %v2267
    %2757 = vmatmul.mubr.bf16.gmra.mrb[0].mxu0 %v2011
    %v2758 = vpop.f32.mrb[0].mxu0
    %v2759 = vadd.f32 %v2334, %v2758
    %v2760 = vpop.f32.mrb[0].mxu0
    %v2761 = vpop.f32.mrb[0].mxu0
    %v2762 = vadd.f32 %v2334, %v2761
    %v2763 = vpop.f32.mrb[0].mxu0
    %2764 = vmatprep.mubr.bf16.mxu0 %v2270
    %2765 = vmatmul.mubr.bf16.gmra.mrb[0].mxu0 %v2014
    %v2766 = vpop.f32.mrb[0].mxu0
    %v2767 = vadd.f32 %v2334, %v2766
    %v2768 = vpop.f32.mrb[0].mxu0
    %v2769 = vpop.f32.mrb[0].mxu0
    %v2770 = vadd.f32 %v2334, %v2769
    %v2771 = vpop.f32.mrb[0].mxu0
    %2772 = vmatprep.mubr.bf16.mxu0 %v2273
    %2773 = vmatmul.mubr.bf16.gmra.mrb[0].mxu0 %v2017
    %v2774 = vpop.f32.mrb[0].mxu0
    %v2775 = vadd.f32 %v2334, %v2774
    %v2776 = vpop.f32.mrb[0].mxu0
    %v2777 = vpop.f32.mrb[0].mxu0
    %v2778 = vadd.f32 %v2334, %v2777
    %v2779 = vpop.f32.mrb[0].mxu0
    %2780 = vmatprep.mubr.bf16.mxu0 %v2276
    %2781 = vmatmul.mubr.bf16.gmra.mrb[0].mxu0 %v2020
    %v2782 = vpop.f32.mrb[0].mxu0
    %v2783 = vadd.f32 %v2334, %v2782
    %v2784 = vpop.f32.mrb[0].mxu0
    %v2785 = vpop.f32.mrb[0].mxu0
    %v2786 = vadd.f32 %v2334, %v2785
    %v2787 = vpop.f32.mrb[0].mxu0
    %2788 = vmatprep.mubr.bf16.mxu0 %v2279
    %2789 = vmatmul.mubr.bf16.gmra.mrb[0].mxu0 %v2023
    %v2790 = vpop.f32.mrb[0].mxu0
    %v2791 = vadd.f32 %v2334, %v2790
    %v2792 = vpop.f32.mrb[0].mxu0
    %v2793 = vpop.f32.mrb[0].mxu0
    %v2794 = vadd.f32 %v2334, %v2793
    %v2795 = vpop.f32.mrb[0].mxu0
    %2796 = vmatprep.mubr.bf16.mxu0 %v2282
    %2797 = vmatmul.mubr.bf16.gmra.mrb[0].mxu0 %v2026
    %v2798 = vpop.f32.mrb[0].mxu0
    %v2799 = vadd.f32 %v2334, %v2798
    %v2800 = vpop.f32.mrb[0].mxu0
    %v2801 = vpop.f32.mrb[0].mxu0
    %v2802 = vadd.f32 %v2334, %v2801
    %v2803 = vpop.f32.mrb[0].mxu0
    %2804 = vmatprep.mubr.bf16.mxu0 %v2285
    %2805 = vmatmul.mubr.bf16.gmra.mrb[0].mxu0 %v2029
    %v2806 = vpop.f32.mrb[0].mxu0
    %v2807 = vadd.f32 %v2334, %v2806
    %v2808 = vpop.f32.mrb[0].mxu0
    %v2809 = vpop.f32.mrb[0].mxu0
    %v2810 = vadd.f32 %v2334, %v2809
    %v2811 = vpop.f32.mrb[0].mxu0
    %2812 = vmatprep.mubr.bf16.mxu0 %v2288
    %2813 = vmatmul.mubr.bf16.gmra.mrb[0].mxu0 %v2032
    %v2814 = vpop.f32.mrb[0].mxu0
    %v2815 = vadd.f32 %v2334, %v2814
    %v2816 = vpop.f32.mrb[0].mxu0
    %v2817 = vpop.f32.mrb[0].mxu0
    %v2818 = vadd.f32 %v2334, %v2817
    %v2819 = vpop.f32.mrb[0].mxu0
    %2820 = vmatprep.mubr.bf16.mxu0 %v2291
    %2821 = vmatmul.mubr.bf16.gmra.mrb[0].mxu0 %v2035
    %v2822 = vpop.f32.mrb[0].mxu0
    %v2823 = vadd.f32 %v2334, %v2822
    %v2824 = vpop.f32.mrb[0].mxu0
    %v2825 = vpop.f32.mrb[0].mxu0
    %v2826 = vadd.f32 %v2334, %v2825
    %v2827 = vpop.f32.mrb[0].mxu0
    %2828 = vdwg.mxu0
    %2829 = vmatprep.subr.bf16.mxu0 0
    %2830 = vmatpush1.bf16.msra.mxu0 %v2424
    %2831 = vmatprep.subr.bf16.mxu0 0
    %2832 = vmatpush1.bf16.msra.mxu0 %v2425
    %2833 = vmatprep.subr.bf16.mxu0 0
    %2834 = vmatpush1.bf16.msra.mxu0 0
    %2835 = vmatprep.subr.bf16.mxu0 0
    %2836 = vmatpush1.bf16.msra.mxu0 0
    %2837 = vmatprep.subr.bf16.mxu0 0
    %2838 = vmatpush1.bf16.msra.mxu0 0
    %2839 = vmatprep.subr.bf16.mxu0 0
    %2840 = vmatpush1.bf16.msra.mxu0 0
    %2841 = vmatprep.subr.bf16.mxu0 0
    %2842 = vmatpush1.bf16.msra.mxu0 0
    %2843 = vmatprep.subr.bf16.mxu0 0
    %2844 = vmatpush1.bf16.msra.mxu0 0
    %2845 = vmatprep.subr.bf16.mxu0 0
    %2846 = vmatpush1.bf16.msra.mxu0 0
    %2847 = vmatprep.subr.bf16.mxu0 0
    %2848 = vmatpush1.bf16.msra.mxu0 0
    %2849 = vmatprep.subr.bf16.mxu0 0
    %2850 = vmatpush1.bf16.msra.mxu0 0
    %2851 = vmatprep.subr.bf16.mxu0 0
    %2852 = vmatpush1.bf16.msra.mxu0 0
    %2853 = vmatprep.subr.bf16.mxu0 0
    %2854 = vmatpush1.bf16.msra.mxu0 0
    %2855 = vmatprep.subr.bf16.mxu0 0
    %2856 = vmatpush1.bf16.msra.mxu0 0
    %2857 = vmatprep.subr.bf16.mxu0 0
    %2858 = vmatpush1.bf16.msra.mxu0 0
    %2859 = vmatprep.subr.bf16.mxu0 0
    %2860 = vmatpush1.bf16.msra.mxu0 0
    %2861 = vmatprep.mubr.bf16.mxu0 0
    %2862 = vmatmul.mubr.bf16.gmra.mrb[0].mxu0 %v2445
    %v2863 = vpop.f32.mrb[0].mxu0
    %v2864 = vadd.f32 %v2575, %v2863
    %v2865 = vpop.f32.mrb[0].mxu0
    %v2866 = vpop.f32.mrb[0].mxu0
    %v2867 = vadd.f32 %v2578, %v2866
    %v2868 = vpop.f32.mrb[0].mxu0
    %2869 = vmatprep.mubr.bf16.mxu0 0
    %2870 = vmatmul.mubr.bf16.gmra.mrb[0].mxu0 %v2448
    %v2871 = vpop.f32.mrb[0].mxu0
    %v2872 = vadd.f32 %v2583, %v2871
    %v2873 = vpop.f32.mrb[0].mxu0
    %v2874 = vpop.f32.mrb[0].mxu0
    %v2875 = vadd.f32 %v2586, %v2874
    %v2876 = vpop.f32.mrb[0].mxu0
    %2877 = vmatprep.mubr.bf16.mxu0 0
    %2878 = vmatmul.mubr.bf16.gmra.mrb[0].mxu0 %v2451
    %v2879 = vpop.f32.mrb[0].mxu0
    %v2880 = vadd.f32 %v2591, %v2879
    %v2881 = vpop.f32.mrb[0].mxu0
    %v2882 = vpop.f32.mrb[0].mxu0
    %v2883 = vadd.f32 %v2594, %v2882
    %v2884 = vpop.f32.mrb[0].mxu0
    %2885 = vmatprep.mubr.bf16.mxu0 0
    %2886 = vmatmul.mubr.bf16.gmra.mrb[0].mxu0 %v2454
    %v2887 = vpop.f32.mrb[0].mxu0
    %v2888 = vadd.f32 %v2599, %v2887
    %v2889 = vpop.f32.mrb[0].mxu0
    %v2890 = vpop.f32.mrb[0].mxu0
    %v2891 = vadd.f32 %v2602, %v2890
    %v2892 = vpop.f32.mrb[0].mxu0
    %2893 = vmatprep.mubr.bf16.mxu0 0
    %2894 = vmatmul.mubr.bf16.gmra.mrb[0].mxu0 %v2457
    %v2895 = vpop.f32.mrb[0].mxu0
    %v2896 = vadd.f32 %v2607, %v2895
    %v2897 = vpop.f32.mrb[0].mxu0
    %v2898 = vpop.f32.mrb[0].mxu0
    %v2899 = vadd.f32 %v2610, %v2898
    %v2900 = vpop.f32.mrb[0].mxu0
    %2901 = vmatprep.mubr.bf16.mxu0 0
    %2902 = vmatmul.mubr.bf16.gmra.mrb[0].mxu0 %v2460
    %v2903 = vpop.f32.mrb[0].mxu0
    %v2904 = vadd.f32 %v2615, %v2903
    %v2905 = vpop.f32.mrb[0].mxu0
    %v2906 = vpop.f32.mrb[0].mxu0
    %v2907 = vadd.f32 %v2618, %v2906
    %v2908 = vpop.f32.mrb[0].mxu0
    %2909 = vmatprep.mubr.bf16.mxu0 0
    %2910 = vmatmul.mubr.bf16.gmra.mrb[0].mxu0 %v2463
    %v2911 = vpop.f32.mrb[0].mxu0
    %v2912 = vadd.f32 %v2623, %v2911
    %v2913 = vpop.f32.mrb[0].mxu0
    %v2914 = vpop.f32.mrb[0].mxu0
    %v2915 = vadd.f32 %v2626, %v2914
    %v2916 = vpop.f32.mrb[0].mxu0
    %2917 = vmatprep.mubr.bf16.mxu0 0
    %2918 = vmatmul.mubr.bf16.gmra.mrb[0].mxu0 %v2466
    %v2919 = vpop.f32.mrb[0].mxu0
    %v2920 = vadd.f32 %v2631, %v2919
    %v2921 = vpop.f32.mrb[0].mxu0
    %v2922 = vpop.f32.mrb[0].mxu0
    %v2923 = vadd.f32 %v2634, %v2922
    %v2924 = vpop.f32.mrb[0].mxu0
    %2925 = vmatprep.mubr.bf16.mxu0 0
    %2926 = vmatmul.mubr.bf16.gmra.mrb[0].mxu0 %v2469
    %v2927 = vpop.f32.mrb[0].mxu0
    %v2928 = vadd.f32 %v2639, %v2927
    %v2929 = vpop.f32.mrb[0].mxu0
    %v2930 = vpop.f32.mrb[0].mxu0
    %v2931 = vadd.f32 %v2642, %v2930
    %v2932 = vpop.f32.mrb[0].mxu0
    %2933 = vmatprep.mubr.bf16.mxu0 0
    %2934 = vmatmul.mubr.bf16.gmra.mrb[0].mxu0 %v2472
    %v2935 = vpop.f32.mrb[0].mxu0
    %v2936 = vadd.f32 %v2647, %v2935
    %v2937 = vpop.f32.mrb[0].mxu0
    %v2938 = vpop.f32.mrb[0].mxu0
    %v2939 = vadd.f32 %v2650, %v2938
    %v2940 = vpop.f32.mrb[0].mxu0
    %2941 = vmatprep.mubr.bf16.mxu0 0
    %2942 = vmatmul.mubr.bf16.gmra.mrb[0].mxu0 %v2475
    %v2943 = vpop.f32.mrb[0].mxu0
    %v2944 = vadd.f32 %v2655, %v2943
    %v2945 = vpop.f32.mrb[0].mxu0
    %v2946 = vpop.f32.mrb[0].mxu0
    %v2947 = vadd.f32 %v2658, %v2946
    %v2948 = vpop.f32.mrb[0].mxu0
    %2949 = vmatprep.mubr.bf16.mxu0 0
    %2950 = vmatmul.mubr.bf16.gmra.mrb[0].mxu0 %v2478
    %v2951 = vpop.f32.mrb[0].mxu0
    %v2952 = vadd.f32 %v2663, %v2951
    %v2953 = vpop.f32.mrb[0].mxu0
    %v2954 = vpop.f32.mrb[0].mxu0
    %v2955 = vadd.f32 %v2666, %v2954
    %v2956 = vpop.f32.mrb[0].mxu0
    %2957 = vmatprep.mubr.bf16.mxu0 0
    %2958 = vmatmul.mubr.bf16.gmra.mrb[0].mxu0 %v2481
    %v2959 = vpop.f32.mrb[0].mxu0
    %v2960 = vadd.f32 %v2671, %v2959
    %v2961 = vpop.f32.mrb[0].mxu0
    %v2962 = vpop.f32.mrb[0].mxu0
    %v2963 = vadd.f32 %v2674, %v2962
    %v2964 = vpop.f32.mrb[0].mxu0
    %2965 = vmatprep.mubr.bf16.mxu0 0
    %2966 = vmatmul.mubr.bf16.gmra.mrb[0].mxu0 %v2484
    %v2967 = vpop.f32.mrb[0].mxu0
    %v2968 = vadd.f32 %v2679, %v2967
    %v2969 = vpop.f32.mrb[0].mxu0
    %v2970 = vpop.f32.mrb[0].mxu0
    %v2971 = vadd.f32 %v2682, %v2970
    %v2972 = vpop.f32.mrb[0].mxu0
    %2973 = vmatprep.mubr.bf16.mxu0 0
    %2974 = vmatmul.mubr.bf16.gmra.mrb[0].mxu0 %v2487
    %v2975 = vpop.f32.mrb[0].mxu0
    %v2976 = vadd.f32 %v2687, %v2975
    %v2977 = vpop.f32.mrb[0].mxu0
    %v2978 = vpop.f32.mrb[0].mxu0
    %v2979 = vadd.f32 %v2690, %v2978
    %v2980 = vpop.f32.mrb[0].mxu0
    %2981 = vmatprep.mubr.bf16.mxu0 0
    %2982 = vmatmul.mubr.bf16.gmra.mrb[0].mxu0 %v2490
    %v2983 = vpop.f32.mrb[0].mxu0
    %v2984 = vadd.f32 %v2695, %v2983
    %v2985 = vpop.f32.mrb[0].mxu0
    %v2986 = vpop.f32.mrb[0].mxu0
    %v2987 = vadd.f32 %v2698, %v2986
    %v2988 = vpop.f32.mrb[0].mxu0
    %2989 = vmatprep.mubr.bf16.mxu0 0
    %2990 = vmatmul.mubr.bf16.gmra.mrb[0].mxu0 %v2493
    %v2991 = vpop.f32.mrb[0].mxu0
    %v2992 = vadd.f32 %v2703, %v2991
    %v2993 = vpop.f32.mrb[0].mxu0
    %v2994 = vpop.f32.mrb[0].mxu0
    %v2995 = vadd.f32 %v2706, %v2994
    %v2996 = vpop.f32.mrb[0].mxu0
    %2997 = vmatprep.mubr.bf16.mxu0 0
    %2998 = vmatmul.mubr.bf16.gmra.mrb[0].mxu0 %v2496
    %v2999 = vpop.f32.mrb[0].mxu0
    %v3000 = vadd.f32 %v2711, %v2999
    %v3001 = vpop.f32.mrb[0].mxu0
    %v3002 = vpop.f32.mrb[0].mxu0
    %v3003 = vadd.f32 %v2714, %v3002
    %v3004 = vpop.f32.mrb[0].mxu0
    %3005 = vmatprep.mubr.bf16.mxu0 0
    %3006 = vmatmul.mubr.bf16.gmra.mrb[0].mxu0 %v2499
    %v3007 = vpop.f32.mrb[0].mxu0
    %v3008 = vadd.f32 %v2719, %v3007
    %v3009 = vpop.f32.mrb[0].mxu0
    %v3010 = vpop.f32.mrb[0].mxu0
    %v3011 = vadd.f32 %v2722, %v3010
    %v3012 = vpop.f32.mrb[0].mxu0
    %3013 = vmatprep.mubr.bf16.mxu0 0
    %3014 = vmatmul.mubr.bf16.gmra.mrb[0].mxu0 %v2502
    %v3015 = vpop.f32.mrb[0].mxu0
    %v3016 = vadd.f32 %v2727, %v3015
    %v3017 = vpop.f32.mrb[0].mxu0
    %v3018 = vpop.f32.mrb[0].mxu0
    %v3019 = vadd.f32 %v2730, %v3018
    %v3020 = vpop.f32.mrb[0].mxu0
    %3021 = vmatprep.mubr.bf16.mxu0 0
    %3022 = vmatmul.mubr.bf16.gmra.mrb[0].mxu0 %v2505
    %v3023 = vpop.f32.mrb[0].mxu0
    %v3024 = vadd.f32 %v2735, %v3023
    %v3025 = vpop.f32.mrb[0].mxu0
    %v3026 = vpop.f32.mrb[0].mxu0
    %v3027 = vadd.f32 %v2738, %v3026
    %v3028 = vpop.f32.mrb[0].mxu0
    %3029 = vmatprep.mubr.bf16.mxu0 0
    %3030 = vmatmul.mubr.bf16.gmra.mrb[0].mxu0 %v2508
    %v3031 = vpop.f32.mrb[0].mxu0
    %v3032 = vadd.f32 %v2743, %v3031
    %v3033 = vpop.f32.mrb[0].mxu0
    %v3034 = vpop.f32.mrb[0].mxu0
    %v3035 = vadd.f32 %v2746, %v3034
    %v3036 = vpop.f32.mrb[0].mxu0
    %3037 = vmatprep.mubr.bf16.mxu0 0
    %3038 = vmatmul.mubr.bf16.gmra.mrb[0].mxu0 %v2511
    %v3039 = vpop.f32.mrb[0].mxu0
    %v3040 = vadd.f32 %v2751, %v3039
    %v3041 = vpop.f32.mrb[0].mxu0
    %v3042 = vpop.f32.mrb[0].mxu0
    %v3043 = vadd.f32 %v2754, %v3042
    %v3044 = vpop.f32.mrb[0].mxu0
    %3045 = vmatprep.mubr.bf16.mxu0 0
    %3046 = vmatmul.mubr.bf16.gmra.mrb[0].mxu0 %v2514
    %v3047 = vpop.f32.mrb[0].mxu0
    %v3048 = vadd.f32 %v2759, %v3047
    %v3049 = vpop.f32.mrb[0].mxu0
    %v3050 = vpop.f32.mrb[0].mxu0
    %v3051 = vadd.f32 %v2762, %v3050
    %v3052 = vpop.f32.mrb[0].mxu0
    %3053 = vmatprep.mubr.bf16.mxu0 0
    %3054 = vmatmul.mubr.bf16.gmra.mrb[0].mxu0 %v2517
    %v3055 = vpop.f32.mrb[0].mxu0
    %v3056 = vadd.f32 %v2767, %v3055
    %v3057 = vpop.f32.mrb[0].mxu0
    %v3058 = vpop.f32.mrb[0].mxu0
    %v3059 = vadd.f32 %v2770, %v3058
    %v3060 = vpop.f32.mrb[0].mxu0
    %3061 = vmatprep.mubr.bf16.mxu0 0
    %3062 = vmatmul.mubr.bf16.gmra.mrb[0].mxu0 %v2520
    %v3063 = vpop.f32.mrb[0].mxu0
    %v3064 = vadd.f32 %v2775, %v3063
    %v3065 = vpop.f32.mrb[0].mxu0
    %v3066 = vpop.f32.mrb[0].mxu0
    %v3067 = vadd.f32 %v2778, %v3066
    %v3068 = vpop.f32.mrb[0].mxu0
    %3069 = vmatprep.mubr.bf16.mxu0 0
    %3070 = vmatmul.mubr.bf16.gmra.mrb[0].mxu0 %v2523
    %v3071 = vpop.f32.mrb[0].mxu0
    %v3072 = vadd.f32 %v2783, %v3071
    %v3073 = vpop.f32.mrb[0].mxu0
    %v3074 = vpop.f32.mrb[0].mxu0
    %v3075 = vadd.f32 %v2786, %v3074
    %v3076 = vpop.f32.mrb[0].mxu0
    %3077 = vmatprep.mubr.bf16.mxu0 0
    %3078 = vmatmul.mubr.bf16.gmra.mrb[0].mxu0 %v2526
    %v3079 = vpop.f32.mrb[0].mxu0
    %v3080 = vadd.f32 %v2791, %v3079
    %v3081 = vpop.f32.mrb[0].mxu0
    %v3082 = vpop.f32.mrb[0].mxu0
    %v3083 = vadd.f32 %v2794, %v3082
    %v3084 = vpop.f32.mrb[0].mxu0
    %3085 = vmatprep.mubr.bf16.mxu0 0
    %3086 = vmatmul.mubr.bf16.gmra.mrb[0].mxu0 %v2529
    %v3087 = vpop.f32.mrb[0].mxu0
    %v3088 = vadd.f32 %v2799, %v3087
    %v3089 = vpop.f32.mrb[0].mxu0
    %v3090 = vpop.f32.mrb[0].mxu0
    %v3091 = vadd.f32 %v2802, %v3090
    %v3092 = vpop.f32.mrb[0].mxu0
    %3093 = vmatprep.mubr.bf16.mxu0 0
    %3094 = vmatmul.mubr.bf16.gmra.mrb[0].mxu0 %v2532
    %v3095 = vpop.f32.mrb[0].mxu0
    %v3096 = vadd.f32 %v2807, %v3095
    %v3097 = vpop.f32.mrb[0].mxu0
    %v3098 = vpop.f32.mrb[0].mxu0
    %v3099 = vadd.f32 %v2810, %v3098
    %v3100 = vpop.f32.mrb[0].mxu0
    %3101 = vmatprep.mubr.bf16.mxu0 0
    %3102 = vmatmul.mubr.bf16.gmra.mrb[0].mxu0 %v2535
    %v3103 = vpop.f32.mrb[0].mxu0
    %v3104 = vadd.f32 %v2815, %v3103
    %v3105 = vpop.f32.mrb[0].mxu0
    %v3106 = vpop.f32.mrb[0].mxu0
    %v3107 = vadd.f32 %v2818, %v3106
    %v3108 = vpop.f32.mrb[0].mxu0
    %3109 = vmatprep.mubr.bf16.mxu0 0
    %3110 = vmatmul.mubr.bf16.gmra.mrb[0].mxu0 %v2538
    %v3111 = vpop.f32.mrb[0].mxu0
    %v3112 = vadd.f32 %v2823, %v3111
    %v3113 = vpop.f32.mrb[0].mxu0
    %v3114 = vpop.f32.mrb[0].mxu0
    %v3115 = vadd.f32 %v2826, %v3114
    %v3116 = vpop.f32.mrb[0].mxu0
    %3117 = vdwg.mxu0
    %v3118 = vmax.f32 %v2864, 0.0
    %v3119 = vmax.f32 %v2867, 0.0
    %v3120 = vmax.f32 %v2872, 0.0
    %v3121 = vmax.f32 %v2875, 0.0
    %v3122 = vmax.f32 %v2880, 0.0
    %v3123 = vmax.f32 %v2883, 0.0
    %v3124 = vmax.f32 %v2888, 0.0
    %v3125 = vmax.f32 %v2891, 0.0
    %v3126 = vmax.f32 %v2896, 0.0
    %v3127 = vmax.f32 %v2899, 0.0
    %v3128 = vmax.f32 %v2904, 0.0
    %v3129 = vmax.f32 %v2907, 0.0
    %v3130 = vmax.f32 %v2912, 0.0
    %v3131 = vmax.f32 %v2915, 0.0
    %v3132 = vmax.f32 %v2920, 0.0
    %v3133 = vmax.f32 %v2923, 0.0
    %v3134 = vmax.f32 %v2928, 0.0
    %v3135 = vmax.f32 %v2931, 0.0
    %v3136 = vmax.f32 %v2936, 0.0
    %v3137 = vmax.f32 %v2939, 0.0
    %v3138 = vmax.f32 %v2944, 0.0
    %v3139 = vmax.f32 %v2947, 0.0
    %v3140 = vmax.f32 %v2952, 0.0
    %v3141 = vmax.f32 %v2955, 0.0
    %v3142 = vmax.f32 %v2960, 0.0
    %v3143 = vmax.f32 %v2963, 0.0
    %v3144 = vmax.f32 %v2968, 0.0
    %v3145 = vmax.f32 %v2971, 0.0
    %v3146 = vmax.f32 %v2976, 0.0
    %v3147 = vmax.f32 %v2979, 0.0
    %v3148 = vmax.f32 %v2984, 0.0
    %v3149 = vmax.f32 %v2987, 0.0
    %v3150 = vmax.f32 %v2992, 0.0
    %v3151 = vmax.f32 %v2995, 0.0
    %v3152 = vmax.f32 %v3000, 0.0
    %v3153 = vmax.f32 %v3003, 0.0
    %v3154 = vmax.f32 %v3008, 0.0
    %v3155 = vmax.f32 %v3011, 0.0
    %v3156 = vmax.f32 %v3016, 0.0
    %v3157 = vmax.f32 %v3019, 0.0
    %v3158 = vmax.f32 %v3024, 0.0
    %v3159 = vmax.f32 %v3027, 0.0
    %v3160 = vmax.f32 %v3032, 0.0
    %v3161 = vmax.f32 %v3035, 0.0
    %v3162 = vmax.f32 %v3040, 0.0
    %v3163 = vmax.f32 %v3043, 0.0
    %v3164 = vmax.f32 %v3048, 0.0
    %v3165 = vmax.f32 %v3051, 0.0
    %v3166 = vmax.f32 %v3056, 0.0
    %v3167 = vmax.f32 %v3059, 0.0
    %v3168 = vmax.f32 %v3064, 0.0
    %v3169 = vmax.f32 %v3067, 0.0
    %v3170 = vmax.f32 %v3072, 0.0
    %v3171 = vmax.f32 %v3075, 0.0
    %v3172 = vmax.f32 %v3080, 0.0
    %v3173 = vmax.f32 %v3083, 0.0
    %v3174 = vmax.f32 %v3088, 0.0
    %v3175 = vmax.f32 %v3091, 0.0
    %v3176 = vmax.f32 %v3096, 0.0
    %v3177 = vmax.f32 %v3099, 0.0
    %v3178 = vmax.f32 %v3104, 0.0
    %v3179 = vmax.f32 %v3107, 0.0
    %v3180 = vmax.f32 %v3112, 0.0
    %v3181 = vmax.f32 %v3115, 0.0
    %s3182 = scalar_lea.vmem [#allocation3], 24
    %3183 = vst.msk [vmem:[%s3182 + $0x1] sm:$0xff] %vm36, %v3118
    %3184 = vst.msk [vmem:[%s3182 + $0x9] sm:$0xff] %vm36, %v3119
    %3185 = vst.msk [vmem:[%s3182 + $0x19] sm:$0xff] %vm36, %v3120
    %3186 = vst.msk [vmem:[%s3182 + $0x21] sm:$0xff] %vm36, %v3121
    %3187 = vst.msk [vmem:[%s3182 + $0x31] sm:$0xff] %vm36, %v3122
    %3188 = vst.msk [vmem:[%s3182 + $0x39] sm:$0xff] %vm36, %v3123
    %3189 = vst.msk [vmem:[%s3182 + $0x49] sm:$0xff] %vm36, %v3124
    %3190 = vst.msk [vmem:[%s3182 + $0x51] sm:$0xff] %vm36, %v3125
    %3191 = vst.msk [vmem:[%s3182 + $0x61] sm:$0xff] %vm36, %v3126
    %3192 = vst.msk [vmem:[%s3182 + $0x69] sm:$0xff] %vm36, %v3127
    %3193 = vst.msk [vmem:[%s3182 + $0x79] sm:$0xff] %vm36, %v3128
    %3194 = vst.msk [vmem:[%s3182 + $0x81] sm:$0xff] %vm36, %v3129
    %3195 = vst.msk [vmem:[%s3182 + $0x91] sm:$0xff] %vm36, %v3130
    %3196 = vst.msk [vmem:[%s3182 + $0x99] sm:$0xff] %vm36, %v3131
    %3197 = vst.msk [vmem:[%s3182 + $0xa9] sm:$0xff] %vm36, %v3132
    %3198 = vst.msk [vmem:[%s3182 + $0xb1] sm:$0xff] %vm36, %v3133
    %3199 = vst.msk [vmem:[%s3182 + $0xc1] sm:$0xff] %vm36, %v3134
    %3200 = vst.msk [vmem:[%s3182 + $0xc9] sm:$0xff] %vm36, %v3135
    %3201 = vst.msk [vmem:[%s3182 + $0xd9] sm:$0xff] %vm36, %v3136
    %3202 = vst.msk [vmem:[%s3182 + $0xe1] sm:$0xff] %vm36, %v3137
    %3203 = vst.msk [vmem:[%s3182 + $0xf1] sm:$0xff] %vm36, %v3138
    %3204 = vst.msk [vmem:[%s3182 + $0xf9] sm:$0xff] %vm36, %v3139
    %3205 = vst.msk [vmem:[%s3182 + $0x109] sm:$0xff] %vm36, %v3140
    %3206 = vst.msk [vmem:[%s3182 + $0x111] sm:$0xff] %vm36, %v3141
    %3207 = vst.msk [vmem:[%s3182 + $0x121] sm:$0xff] %vm36, %v3142
    %3208 = vst.msk [vmem:[%s3182 + $0x129] sm:$0xff] %vm36, %v3143
    %3209 = vst.msk [vmem:[%s3182 + $0x139] sm:$0xff] %vm36, %v3144
    %3210 = vst.msk [vmem:[%s3182 + $0x141] sm:$0xff] %vm36, %v3145
    %3211 = vst.msk [vmem:[%s3182 + $0x151] sm:$0xff] %vm36, %v3146
    %3212 = vst.msk [vmem:[%s3182 + $0x159] sm:$0xff] %vm36, %v3147
    %3213 = vst.msk [vmem:[%s3182 + $0x169] sm:$0xff] %vm36, %v3148
    %3214 = vst.msk [vmem:[%s3182 + $0x171] sm:$0xff] %vm36, %v3149
    %3215 = vst.msk [vmem:[%s3182 + $0x1b1] sm:$0xff] %vm36, %v3150
    %3216 = vst.msk [vmem:[%s3182 + $0x1b9] sm:$0xff] %vm36, %v3151
    %3217 = vst.msk [vmem:[%s3182 + $0x1c9] sm:$0xff] %vm36, %v3152
    %3218 = vst.msk [vmem:[%s3182 + $0x1d1] sm:$0xff] %vm36, %v3153
    %3219 = vst.msk [vmem:[%s3182 + $0x1e1] sm:$0xff] %vm36, %v3154
    %3220 = vst.msk [vmem:[%s3182 + $0x1e9] sm:$0xff] %vm36, %v3155
    %3221 = vst.msk [vmem:[%s3182 + $0x1f9] sm:$0xff] %vm36, %v3156
    %3222 = vst.msk [vmem:[%s3182 + $0x201] sm:$0xff] %vm36, %v3157
    %3223 = vst.msk [vmem:[%s3182 + $0x211] sm:$0xff] %vm36, %v3158
    %3224 = vst.msk [vmem:[%s3182 + $0x219] sm:$0xff] %vm36, %v3159
    %3225 = vst.msk [vmem:[%s3182 + $0x229] sm:$0xff] %vm36, %v3160
    %3226 = vst.msk [vmem:[%s3182 + $0x231] sm:$0xff] %vm36, %v3161
    %3227 = vst.msk [vmem:[%s3182 + $0x241] sm:$0xff] %vm36, %v3162
    %3228 = vst.msk [vmem:[%s3182 + $0x249] sm:$0xff] %vm36, %v3163
    %3229 = vst.msk [vmem:[%s3182 + $0x259] sm:$0xff] %vm36, %v3164
    %3230 = vst.msk [vmem:[%s3182 + $0x261] sm:$0xff] %vm36, %v3165
    %3231 = vst.msk [vmem:[%s3182 + $0x271] sm:$0xff] %vm36, %v3166
    %3232 = vst.msk [vmem:[%s3182 + $0x279] sm:$0xff] %vm36, %v3167
    %3233 = vst.msk [vmem:[%s3182 + $0x289] sm:$0xff] %vm36, %v3168
    %3234 = vst.msk [vmem:[%s3182 + $0x291] sm:$0xff] %vm36, %v3169
    %3235 = vst.msk [vmem:[%s3182 + $0x2a1] sm:$0xff] %vm36, %v3170
    %3236 = vst.msk [vmem:[%s3182 + $0x2a9] sm:$0xff] %vm36, %v3171
    %3237 = vst.msk [vmem:[%s3182 + $0x2b9] sm:$0xff] %vm36, %v3172
    %3238 = vst.msk [vmem:[%s3182 + $0x2c1] sm:$0xff] %vm36, %v3173
    %3239 = vst.msk [vmem:[%s3182 + $0x2d1] sm:$0xff] %vm36, %v3174
    %3240 = vst.msk [vmem:[%s3182 + $0x2d9] sm:$0xff] %vm36, %v3175
    %3241 = vst.msk [vmem:[%s3182 + $0x2e9] sm:$0xff] %vm36, %v3176
    %3242 = vst.msk [vmem:[%s3182 + $0x2f1] sm:$0xff] %vm36, %v3177
    %3243 = vst.msk [vmem:[%s3182 + $0x301] sm:$0xff] %vm36, %v3178
    %3244 = vst.msk [vmem:[%s3182 + $0x309] sm:$0xff] %vm36, %v3179
    %3245 = vst.msk [vmem:[%s3182 + $0x319] sm:$0xff] %vm36, %v3180
    %3246 = vst.msk [vmem:[%s3182 + $0x321] sm:$0xff] %vm36, %v3181
    %v3247 = vld [vmem:[#allocation3] sm:$0xff]
    %v3248 = vld [vmem:[#allocation3 + $0x8] sm:$0xff]
    %v3249 = vld [vmem:[#allocation3 + $0x18] sm:$0xff]
    %v3250 = vld [vmem:[#allocation3 + $0x20] sm:$0xff]
    %v3251 = vld [vmem:[#allocation3 + $0x30] sm:$0xff]
    %v3252 = vld [vmem:[#allocation3 + $0x38] sm:$0xff]
    %v3253 = vld [vmem:[#allocation3 + $0x48] sm:$0xff]
    %v3254 = vld [vmem:[#allocation3 + $0x50] sm:$0xff]
    %v3255 = vld [vmem:[#allocation3 + $0x60] sm:$0xff]
    %v3256 = vld [vmem:[#allocation3 + $0x68] sm:$0xff]
    %v3257 = vld [vmem:[#allocation3 + $0x78] sm:$0xff]
    %v3258 = vld [vmem:[#allocation3 + $0x80] sm:$0xff]
    %v3259 = vld [vmem:[#allocation3 + $0x90] sm:$0xff]
    %v3260 = vld [vmem:[#allocation3 + $0x98] sm:$0xff]
    %v3261 = vld [vmem:[#allocation3 + $0xa8] sm:$0xff]
    %v3262 = vld [vmem:[#allocation3 + $0xb0] sm:$0xff]
    %v3263 = vld [vmem:[#allocation3 + $0xc0] sm:$0xff]
    %v3264 = vld [vmem:[#allocation3 + $0xc8] sm:$0xff]
    %v3265 = vld [vmem:[#allocation3 + $0xd8] sm:$0xff]
    %v3266 = vld [vmem:[#allocation3 + $0xe0] sm:$0xff]
    %v3267 = vld [vmem:[#allocation3 + $0xf0] sm:$0xff]
    %v3268 = vld [vmem:[#allocation3 + $0xf8] sm:$0xff]
    %v3269 = vld [vmem:[#allocation3 + $0x108] sm:$0xff]
    %v3270 = vld [vmem:[#allocation3 + $0x110] sm:$0xff]
    %v3271 = vld [vmem:[#allocation3 + $0x120] sm:$0xff]
    %v3272 = vld [vmem:[#allocation3 + $0x128] sm:$0xff]
    %v3273 = vld [vmem:[#allocation3 + $0x138] sm:$0xff]
    %v3274 = vld [vmem:[#allocation3 + $0x140] sm:$0xff]
    %v3275 = vld [vmem:[#allocation3 + $0x150] sm:$0xff]
    %v3276 = vld [vmem:[#allocation3 + $0x158] sm:$0xff]
    %v3277 = vld [vmem:[#allocation3 + $0x168] sm:$0xff]
    %v3278 = vld [vmem:[#allocation3 + $0x170] sm:$0xff]
    %v3279 = vld [vmem:[#allocation3 + $0x1b0] sm:$0xff]
    %v3280 = vld [vmem:[#allocation3 + $0x1b8] sm:$0xff]
    %v3281 = vld [vmem:[#allocation3 + $0x1c8] sm:$0xff]
    %v3282 = vld [vmem:[#allocation3 + $0x1d0] sm:$0xff]
    %v3283 = vld [vmem:[#allocation3 + $0x1e0] sm:$0xff]
    %v3284 = vld [vmem:[#allocation3 + $0x1e8] sm:$0xff]
    %v3285 = vld [vmem:[#allocation3 + $0x1f8] sm:$0xff]
    %v3286 = vld [vmem:[#allocation3 + $0x200] sm:$0xff]
    %v3287 = vld [vmem:[#allocation3 + $0x210] sm:$0xff]
    %v3288 = vld [vmem:[#allocation3 + $0x218] sm:$0xff]
    %v3289 = vld [vmem:[#allocation3 + $0x228] sm:$0xff]
    %v3290 = vld [vmem:[#allocation3 + $0x230] sm:$0xff]
    %v3291 = vld [vmem:[#allocation3 + $0x240] sm:$0xff]
    %v3292 = vld [vmem:[#allocation3 + $0x248] sm:$0xff]
    %v3293 = vld [vmem:[#allocation3 + $0x258] sm:$0xff]
    %v3294 = vld [vmem:[#allocation3 + $0x260] sm:$0xff]
    %v3295 = vld [vmem:[#allocation3 + $0x270] sm:$0xff]
    %v3296 = vld [vmem:[#allocation3 + $0x278] sm:$0xff]
    %v3297 = vld [vmem:[#allocation3 + $0x288] sm:$0xff]
    %v3298 = vld [vmem:[#allocation3 + $0x290] sm:$0xff]
    %v3299 = vld [vmem:[#allocation3 + $0x2a0] sm:$0xff]
    %v3300 = vld [vmem:[#allocation3 + $0x2a8] sm:$0xff]
    %v3301 = vld [vmem:[#allocation3 + $0x2b8] sm:$0xff]
    %v3302 = vld [vmem:[#allocation3 + $0x2c0] sm:$0xff]
    %v3303 = vld [vmem:[#allocation3 + $0x2d0] sm:$0xff]
    %v3304 = vld [vmem:[#allocation3 + $0x2d8] sm:$0xff]
    %v3305 = vld [vmem:[#allocation3 + $0x2e8] sm:$0xff]
    %v3306 = vld [vmem:[#allocation3 + $0x2f0] sm:$0xff]
    %v3307 = vld [vmem:[#allocation3 + $0x300] sm:$0xff]
    %v3308 = vld [vmem:[#allocation3 + $0x308] sm:$0xff]
    %v3309 = vld [vmem:[#allocation3 + $0x318] sm:$0xff]
    %v3310 = vld [vmem:[#allocation3 + $0x320] sm:$0xff]
    %v3311 = vpack.c.bf16 %v3248, %v3247
    %v3312 = vpack.c.bf16 %v3250, %v3249
    %v3313 = vpack.c.bf16 %v3252, %v3251
    %v3314 = vpack.c.bf16 %v3254, %v3253
    %v3315 = vpack.c.bf16 %v3256, %v3255
    %v3316 = vpack.c.bf16 %v3258, %v3257
    %v3317 = vpack.c.bf16 %v3260, %v3259
    %v3318 = vpack.c.bf16 %v3262, %v3261
    %v3319 = vpack.c.bf16 %v3264, %v3263
    %v3320 = vpack.c.bf16 %v3266, %v3265
    %v3321 = vpack.c.bf16 %v3268, %v3267
    %v3322 = vpack.c.bf16 %v3270, %v3269
    %v3323 = vpack.c.bf16 %v3272, %v3271
    %v3324 = vpack.c.bf16 %v3274, %v3273
    %v3325 = vpack.c.bf16 %v3276, %v3275
    %v3326 = vpack.c.bf16 %v3278, %v3277
    %v3327 = vpack.c.bf16 %v3280, %v3279
    %v3328 = vpack.c.bf16 %v3282, %v3281
    %v3329 = vpack.c.bf16 %v3284, %v3283
    %v3330 = vpack.c.bf16 %v3286, %v3285
    %v3331 = vpack.c.bf16 %v3288, %v3287
    %v3332 = vpack.c.bf16 %v3290, %v3289
    %v3333 = vpack.c.bf16 %v3292, %v3291
    %v3334 = vpack.c.bf16 %v3294, %v3293
    %v3335 = vpack.c.bf16 %v3296, %v3295
    %v3336 = vpack.c.bf16 %v3298, %v3297
    %v3337 = vpack.c.bf16 %v3300, %v3299
    %v3338 = vpack.c.bf16 %v3302, %v3301
    %v3339 = vpack.c.bf16 %v3304, %v3303
    %v3340 = vpack.c.bf16 %v3306, %v3305
    %v3341 = vpack.c.bf16 %v3308, %v3307
    %v3342 = vpack.c.bf16 %v3310, %v3309
    %v3343 = vld [vmem:[#allocation3 + $0x1] sm:$0xff]
    %v3344 = vld [vmem:[#allocation3 + $0x9] sm:$0xff]
    %v3345 = vld [vmem:[#allocation3 + $0x19] sm:$0xff]
    %v3346 = vld [vmem:[#allocation3 + $0x21] sm:$0xff]
    %v3347 = vld [vmem:[#allocation3 + $0x31] sm:$0xff]
    %v3348 = vld [vmem:[#allocation3 + $0x39] sm:$0xff]
    %v3349 = vld [vmem:[#allocation3 + $0x49] sm:$0xff]
    %v3350 = vld [vmem:[#allocation3 + $0x51] sm:$0xff]
    %v3351 = vld [vmem:[#allocation3 + $0x61] sm:$0xff]
    %v3352 = vld [vmem:[#allocation3 + $0x69] sm:$0xff]
    %v3353 = vld [vmem:[#allocation3 + $0x79] sm:$0xff]
    %v3354 = vld [vmem:[#allocation3 + $0x81] sm:$0xff]
    %v3355 = vld [vmem:[#allocation3 + $0x91] sm:$0xff]
    %v3356 = vld [vmem:[#allocation3 + $0x99] sm:$0xff]
    %v3357 = vld [vmem:[#allocation3 + $0xa9] sm:$0xff]
    %v3358 = vld [vmem:[#allocation3 + $0xb1] sm:$0xff]
    %v3359 = vld [vmem:[#allocation3 + $0xc1] sm:$0xff]
    %v3360 = vld [vmem:[#allocation3 + $0xc9] sm:$0xff]
    %v3361 = vld [vmem:[#allocation3 + $0xd9] sm:$0xff]
    %v3362 = vld [vmem:[#allocation3 + $0xe1] sm:$0xff]
    %v3363 = vld [vmem:[#allocation3 + $0xf1] sm:$0xff]
    %v3364 = vld [vmem:[#allocation3 + $0xf9] sm:$0xff]
    %v3365 = vld [vmem:[#allocation3 + $0x109] sm:$0xff]
    %v3366 = vld [vmem:[#allocation3 + $0x111] sm:$0xff]
    %v3367 = vld [vmem:[#allocation3 + $0x121] sm:$0xff]
    %v3368 = vld [vmem:[#allocation3 + $0x129] sm:$0xff]
    %v3369 = vld [vmem:[#allocation3 + $0x139] sm:$0xff]
    %v3370 = vld [vmem:[#allocation3 + $0x141] sm:$0xff]
    %v3371 = vld [vmem:[#allocation3 + $0x151] sm:$0xff]
    %v3372 = vld [vmem:[#allocation3 + $0x159] sm:$0xff]
    %v3373 = vld [vmem:[#allocation3 + $0x169] sm:$0xff]
    %v3374 = vld [vmem:[#allocation3 + $0x171] sm:$0xff]
    %v3375 = vld [vmem:[#allocation3 + $0x1b1] sm:$0xff]
    %v3376 = vld [vmem:[#allocation3 + $0x1b9] sm:$0xff]
    %v3377 = vld [vmem:[#allocation3 + $0x1c9] sm:$0xff]
    %v3378 = vld [vmem:[#allocation3 + $0x1d1] sm:$0xff]
    %v3379 = vld [vmem:[#allocation3 + $0x1e1] sm:$0xff]
    %v3380 = vld [vmem:[#allocation3 + $0x1e9] sm:$0xff]
    %v3381 = vld [vmem:[#allocation3 + $0x1f9] sm:$0xff]
    %v3382 = vld [vmem:[#allocation3 + $0x201] sm:$0xff]
    %v3383 = vld [vmem:[#allocation3 + $0x211] sm:$0xff]
    %v3384 = vld [vmem:[#allocation3 + $0x219] sm:$0xff]
    %v3385 = vld [vmem:[#allocation3 + $0x229] sm:$0xff]
    %v3386 = vld [vmem:[#allocation3 + $0x231] sm:$0xff]
    %v3387 = vld [vmem:[#allocation3 + $0x241] sm:$0xff]
    %v3388 = vld [vmem:[#allocation3 + $0x249] sm:$0xff]
    %v3389 = vld [vmem:[#allocation3 + $0x259] sm:$0xff]
    %v3390 = vld [vmem:[#allocation3 + $0x261] sm:$0xff]
    %v3391 = vld [vmem:[#allocation3 + $0x271] sm:$0xff]
    %v3392 = vld [vmem:[#allocation3 + $0x279] sm:$0xff]
    %v3393 = vld [vmem:[#allocation3 + $0x289] sm:$0xff]
    %v3394 = vld [vmem:[#allocation3 + $0x291] sm:$0xff]
    %v3395 = vld [vmem:[#allocation3 + $0x2a1] sm:$0xff]
    %v3396 = vld [vmem:[#allocation3 + $0x2a9] sm:$0xff]
    %v3397 = vld [vmem:[#allocation3 + $0x2b9] sm:$0xff]
    %v3398 = vld [vmem:[#allocation3 + $0x2c1] sm:$0xff]
    %v3399 = vld [vmem:[#allocation3 + $0x2d1] sm:$0xff]
    %v3400 = vld [vmem:[#allocation3 + $0x2d9] sm:$0xff]
    %v3401 = vld [vmem:[#allocation3 + $0x2e9] sm:$0xff]
    %v3402 = vld [vmem:[#allocation3 + $0x2f1] sm:$0xff]
    %v3403 = vld [vmem:[#allocation3 + $0x301] sm:$0xff]
    %v3404 = vld [vmem:[#allocation3 + $0x309] sm:$0xff]
    %v3405 = vld [vmem:[#allocation3 + $0x319] sm:$0xff]
    %v3406 = vld [vmem:[#allocation3 + $0x321] sm:$0xff]
    %v3407 = vpack.c.bf16 %v3344, %v3343
    %v3408 = vpack.c.bf16 %v3346, %v3345
    %v3409 = vpack.c.bf16 %v3348, %v3347
    %v3410 = vpack.c.bf16 %v3350, %v3349
    %v3411 = vpack.c.bf16 %v3352, %v3351
    %v3412 = vpack.c.bf16 %v3354, %v3353
    %v3413 = vpack.c.bf16 %v3356, %v3355
    %v3414 = vpack.c.bf16 %v3358, %v3357
    %v3415 = vpack.c.bf16 %v3360, %v3359
    %v3416 = vpack.c.bf16 %v3362, %v3361
    %v3417 = vpack.c.bf16 %v3364, %v3363
    %v3418 = vpack.c.bf16 %v3366, %v3365
    %v3419 = vpack.c.bf16 %v3368, %v3367
    %v3420 = vpack.c.bf16 %v3370, %v3369
    %v3421 = vpack.c.bf16 %v3372, %v3371
    %v3422 = vpack.c.bf16 %v3374, %v3373
    %v3423 = vpack.c.bf16 %v3376, %v3375
    %v3424 = vpack.c.bf16 %v3378, %v3377
    %v3425 = vpack.c.bf16 %v3380, %v3379
    %v3426 = vpack.c.bf16 %v3382, %v3381
    %v3427 = vpack.c.bf16 %v3384, %v3383
    %v3428 = vpack.c.bf16 %v3386, %v3385
    %v3429 = vpack.c.bf16 %v3388, %v3387
    %v3430 = vpack.c.bf16 %v3390, %v3389
    %v3431 = vpack.c.bf16 %v3392, %v3391
    %v3432 = vpack.c.bf16 %v3394, %v3393
    %v3433 = vpack.c.bf16 %v3396, %v3395
    %v3434 = vpack.c.bf16 %v3398, %v3397
    %v3435 = vpack.c.bf16 %v3400, %v3399
    %v3436 = vpack.c.bf16 %v3402, %v3401
    %v3437 = vpack.c.bf16 %v3404, %v3403
    %v3438 = vpack.c.bf16 %v3406, %v3405
    %v3439 = vld [vmem:[#allocation3 + $0x2] sm:$0xff]
    %v3440 = vld [vmem:[#allocation3 + $0xa] sm:$0xff]
    %v3441 = vld [vmem:[#allocation3 + $0x1a] sm:$0xff]
    %v3442 = vld [vmem:[#allocation3 + $0x22] sm:$0xff]
    %v3443 = vld [vmem:[#allocation3 + $0x32] sm:$0xff]
    %v3444 = vld [vmem:[#allocation3 + $0x3a] sm:$0xff]
    %v3445 = vld [vmem:[#allocation3 + $0x4a] sm:$0xff]
    %v3446 = vld [vmem:[#allocation3 + $0x52] sm:$0xff]
    %v3447 = vld [vmem:[#allocation3 + $0x62] sm:$0xff]
    %v3448 = vld [vmem:[#allocation3 + $0x6a] sm:$0xff]
    %v3449 = vld [vmem:[#allocation3 + $0x7a] sm:$0xff]
    %v3450 = vld [vmem:[#allocation3 + $0x82] sm:$0xff]
    %v3451 = vld [vmem:[#allocation3 + $0x92] sm:$0xff]
    %v3452 = vld [vmem:[#allocation3 + $0x9a] sm:$0xff]
    %v3453 = vld [vmem:[#allocation3 + $0xaa] sm:$0xff]
    %v3454 = vld [vmem:[#allocation3 + $0xb2] sm:$0xff]
    %v3455 = vld [vmem:[#allocation3 + $0xc2] sm:$0xff]
    %v3456 = vld [vmem:[#allocation3 + $0xca] sm:$0xff]
    %v3457 = vld [vmem:[#allocation3 + $0xda] sm:$0xff]
    %v3458 = vld [vmem:[#allocation3 + $0xe2] sm:$0xff]
    %v3459 = vld [vmem:[#allocation3 + $0xf2] sm:$0xff]
    %v3460 = vld [vmem:[#allocation3 + $0xfa] sm:$0xff]
    %v3461 = vld [vmem:[#allocation3 + $0x10a] sm:$0xff]
    %v3462 = vld [vmem:[#allocation3 + $0x112] sm:$0xff]
    %v3463 = vld [vmem:[#allocation3 + $0x122] sm:$0xff]
    %v3464 = vld [vmem:[#allocation3 + $0x12a] sm:$0xff]
    %v3465 = vld [vmem:[#allocation3 + $0x13a] sm:$0xff]
    %v3466 = vld [vmem:[#allocation3 + $0x142] sm:$0xff]
    %v3467 = vld [vmem:[#allocation3 + $0x152] sm:$0xff]
    %v3468 = vld [vmem:[#allocation3 + $0x15a] sm:$0xff]
    %v3469 = vld [vmem:[#allocation3 + $0x16a] sm:$0xff]
    %v3470 = vld [vmem:[#allocation3 + $0x172] sm:$0xff]
    %v3471 = vld [vmem:[#allocation3 + $0x1b2] sm:$0xff]
    %v3472 = vld [vmem:[#allocation3 + $0x1ba] sm:$0xff]
    %v3473 = vld [vmem:[#allocation3 + $0x1ca] sm:$0xff]
    %v3474 = vld [vmem:[#allocation3 + $0x1d2] sm:$0xff]
    %v3475 = vld [vmem:[#allocation3 + $0x1e2] sm:$0xff]
    %v3476 = vld [vmem:[#allocation3 + $0x1ea] sm:$0xff]
    %v3477 = vld [vmem:[#allocation3 + $0x1fa] sm:$0xff]
    %v3478 = vld [vmem:[#allocation3 + $0x202] sm:$0xff]
    %v3479 = vld [vmem:[#allocation3 + $0x212] sm:$0xff]
    %v3480 = vld [vmem:[#allocation3 + $0x21a] sm:$0xff]
    %v3481 = vld [vmem:[#allocation3 + $0x22a] sm:$0xff]
    %v3482 = vld [vmem:[#allocation3 + $0x232] sm:$0xff]
    %v3483 = vld [vmem:[#allocation3 + $0x242] sm:$0xff]
    %v3484 = vld [vmem:[#allocation3 + $0x24a] sm:$0xff]
    %v3485 = vld [vmem:[#allocation3 + $0x25a] sm:$0xff]
    %v3486 = vld [vmem:[#allocation3 + $0x262] sm:$0xff]
    %v3487 = vld [vmem:[#allocation3 + $0x272] sm:$0xff]
    %v3488 = vld [vmem:[#allocation3 + $0x27a] sm:$0xff]
    %v3489 = vld [vmem:[#allocation3 + $0x28a] sm:$0xff]
    %v3490 = vld [vmem:[#allocation3 + $0x292] sm:$0xff]
    %v3491 = vld [vmem:[#allocation3 + $0x2a2] sm:$0xff]
    %v3492 = vld [vmem:[#allocation3 + $0x2aa] sm:$0xff]
    %v3493 = vld [vmem:[#allocation3 + $0x2ba] sm:$0xff]
    %v3494 = vld [vmem:[#allocation3 + $0x2c2] sm:$0xff]
    %v3495 = vld [vmem:[#allocation3 + $0x2d2] sm:$0xff]
    %v3496 = vld [vmem:[#allocation3 + $0x2da] sm:$0xff]
    %v3497 = vld [vmem:[#allocation3 + $0x2ea] sm:$0xff]
    %v3498 = vld [vmem:[#allocation3 + $0x2f2] sm:$0xff]
    %v3499 = vld [vmem:[#allocation3 + $0x302] sm:$0xff]
    %v3500 = vld [vmem:[#allocation3 + $0x30a] sm:$0xff]
    %v3501 = vld [vmem:[#allocation3 + $0x31a] sm:$0xff]
    %v3502 = vld [vmem:[#allocation3 + $0x322] sm:$0xff]
    %v3503 = vpack.c.bf16 %v3440, %v3439
    %v3504 = vpack.c.bf16 %v3442, %v3441
    %v3505 = vpack.c.bf16 %v3444, %v3443
    %v3506 = vpack.c.bf16 %v3446, %v3445
    %v3507 = vpack.c.bf16 %v3448, %v3447
    %v3508 = vpack.c.bf16 %v3450, %v3449
    %v3509 = vpack.c.bf16 %v3452, %v3451
    %v3510 = vpack.c.bf16 %v3454, %v3453
    %v3511 = vpack.c.bf16 %v3456, %v3455
    %v3512 = vpack.c.bf16 %v3458, %v3457
    %v3513 = vpack.c.bf16 %v3460, %v3459
    %v3514 = vpack.c.bf16 %v3462, %v3461
    %v3515 = vpack.c.bf16 %v3464, %v3463
    %v3516 = vpack.c.bf16 %v3466, %v3465
    %v3517 = vpack.c.bf16 %v3468, %v3467
    %v3518 = vpack.c.bf16 %v3470, %v3469
    %v3519 = vpack.c.bf16 %v3472, %v3471
    %v3520 = vpack.c.bf16 %v3474, %v3473
    %v3521 = vpack.c.bf16 %v3476, %v3475
    %v3522 = vpack.c.bf16 %v3478, %v3477
    %v3523 = vpack.c.bf16 %v3480, %v3479
    %v3524 = vpack.c.bf16 %v3482, %v3481
    %v3525 = vpack.c.bf16 %v3484, %v3483
    %v3526 = vpack.c.bf16 %v3486, %v3485
    %v3527 = vpack.c.bf16 %v3488, %v3487
    %v3528 = vpack.c.bf16 %v3490, %v3489
    %v3529 = vpack.c.bf16 %v3492, %v3491
    %v3530 = vpack.c.bf16 %v3494, %v3493
    %v3531 = vpack.c.bf16 %v3496, %v3495
    %v3532 = vpack.c.bf16 %v3498, %v3497
    %v3533 = vpack.c.bf16 %v3500, %v3499
    %v3534 = vpack.c.bf16 %v3502, %v3501
    %v3535 = vld [vmem:[%s3182] sm:$0xff]
    %v3536 = vld [vmem:[%s3182 + $0x8] sm:$0xff]
    %v3537 = vld [vmem:[%s3182 + $0x18] sm:$0xff]
    %v3538 = vld [vmem:[%s3182 + $0x20] sm:$0xff]
    %v3539 = vld [vmem:[%s3182 + $0x30] sm:$0xff]
    %v3540 = vld [vmem:[%s3182 + $0x38] sm:$0xff]
    %v3541 = vld [vmem:[%s3182 + $0x48] sm:$0xff]
    %v3542 = vld [vmem:[%s3182 + $0x50] sm:$0xff]
    %v3543 = vld [vmem:[%s3182 + $0x60] sm:$0xff]
    %v3544 = vld [vmem:[%s3182 + $0x68] sm:$0xff]
    %v3545 = vld [vmem:[%s3182 + $0x78] sm:$0xff]
    %v3546 = vld [vmem:[%s3182 + $0x80] sm:$0xff]
    %v3547 = vld [vmem:[%s3182 + $0x90] sm:$0xff]
    %v3548 = vld [vmem:[%s3182 + $0x98] sm:$0xff]
    %v3549 = vld [vmem:[%s3182 + $0xa8] sm:$0xff]
    %v3550 = vld [vmem:[%s3182 + $0xb0] sm:$0xff]
    %v3551 = vld [vmem:[%s3182 + $0xc0] sm:$0xff]
    %v3552 = vld [vmem:[%s3182 + $0xc8] sm:$0xff]
    %v3553 = vld [vmem:[%s3182 + $0xd8] sm:$0xff]
    %v3554 = vld [vmem:[%s3182 + $0xe0] sm:$0xff]
    %v3555 = vld [vmem:[%s3182 + $0xf0] sm:$0xff]
    %v3556 = vld [vmem:[%s3182 + $0xf8] sm:$0xff]
    %v3557 = vld [vmem:[%s3182 + $0x108] sm:$0xff]
    %v3558 = vld [vmem:[%s3182 + $0x110] sm:$0xff]
    %v3559 = vld [vmem:[%s3182 + $0x120] sm:$0xff]
    %v3560 = vld [vmem:[%s3182 + $0x128] sm:$0xff]
    %v3561 = vld [vmem:[%s3182 + $0x138] sm:$0xff]
    %v3562 = vld [vmem:[%s3182 + $0x140] sm:$0xff]
    %v3563 = vld [vmem:[%s3182 + $0x150] sm:$0xff]
    %v3564 = vld [vmem:[%s3182 + $0x158] sm:$0xff]
    %v3565 = vld [vmem:[%s3182 + $0x168] sm:$0xff]
    %v3566 = vld [vmem:[%s3182 + $0x170] sm:$0xff]
    %v3567 = vld [vmem:[%s3182 + $0x1b0] sm:$0xff]
    %v3568 = vld [vmem:[%s3182 + $0x1b8] sm:$0xff]
    %v3569 = vld [vmem:[%s3182 + $0x1c8] sm:$0xff]
    %v3570 = vld [vmem:[%s3182 + $0x1d0] sm:$0xff]
    %v3571 = vld [vmem:[%s3182 + $0x1e0] sm:$0xff]
    %v3572 = vld [vmem:[%s3182 + $0x1e8] sm:$0xff]
    %v3573 = vld [vmem:[%s3182 + $0x1f8] sm:$0xff]
    %v3574 = vld [vmem:[%s3182 + $0x200] sm:$0xff]
    %v3575 = vld [vmem:[%s3182 + $0x210] sm:$0xff]
    %v3576 = vld [vmem:[%s3182 + $0x218] sm:$0xff]
    %v3577 = vld [vmem:[%s3182 + $0x228] sm:$0xff]
    %v3578 = vld [vmem:[%s3182 + $0x230] sm:$0xff]
    %v3579 = vld [vmem:[%s3182 + $0x240] sm:$0xff]
    %v3580 = vld [vmem:[%s3182 + $0x248] sm:$0xff]
    %v3581 = vld [vmem:[%s3182 + $0x258] sm:$0xff]
    %v3582 = vld [vmem:[%s3182 + $0x260] sm:$0xff]
    %v3583 = vld [vmem:[%s3182 + $0x270] sm:$0xff]
    %v3584 = vld [vmem:[%s3182 + $0x278] sm:$0xff]
    %v3585 = vld [vmem:[%s3182 + $0x288] sm:$0xff]
    %v3586 = vld [vmem:[%s3182 + $0x290] sm:$0xff]
    %v3587 = vld [vmem:[%s3182 + $0x2a0] sm:$0xff]
    %v3588 = vld [vmem:[%s3182 + $0x2a8] sm:$0xff]
    %v3589 = vld [vmem:[%s3182 + $0x2b8] sm:$0xff]
    %v3590 = vld [vmem:[%s3182 + $0x2c0] sm:$0xff]
    %v3591 = vld [vmem:[%s3182 + $0x2d0] sm:$0xff]
    %v3592 = vld [vmem:[%s3182 + $0x2d8] sm:$0xff]
    %v3593 = vld [vmem:[%s3182 + $0x2e8] sm:$0xff]
    %v3594 = vld [vmem:[%s3182 + $0x2f0] sm:$0xff]
    %v3595 = vld [vmem:[%s3182 + $0x300] sm:$0xff]
    %v3596 = vld [vmem:[%s3182 + $0x308] sm:$0xff]
    %v3597 = vld [vmem:[%s3182 + $0x318] sm:$0xff]
    %v3598 = vld [vmem:[%s3182 + $0x320] sm:$0xff]
    %v3599 = vpack.c.bf16 %v3536, %v3535
    %v3600 = vpack.c.bf16 %v3538, %v3537
    %v3601 = vpack.c.bf16 %v3540, %v3539
    %v3602 = vpack.c.bf16 %v3542, %v3541
    %v3603 = vpack.c.bf16 %v3544, %v3543
    %v3604 = vpack.c.bf16 %v3546, %v3545
    %v3605 = vpack.c.bf16 %v3548, %v3547
    %v3606 = vpack.c.bf16 %v3550, %v3549
    %v3607 = vpack.c.bf16 %v3552, %v3551
    %v3608 = vpack.c.bf16 %v3554, %v3553
    %v3609 = vpack.c.bf16 %v3556, %v3555
    %v3610 = vpack.c.bf16 %v3558, %v3557
    %v3611 = vpack.c.bf16 %v3560, %v3559
    %v3612 = vpack.c.bf16 %v3562, %v3561
    %v3613 = vpack.c.bf16 %v3564, %v3563
    %v3614 = vpack.c.bf16 %v3566, %v3565
    %v3615 = vpack.c.bf16 %v3568, %v3567
    %v3616 = vpack.c.bf16 %v3570, %v3569
    %v3617 = vpack.c.bf16 %v3572, %v3571
    %v3618 = vpack.c.bf16 %v3574, %v3573
    %v3619 = vpack.c.bf16 %v3576, %v3575
    %v3620 = vpack.c.bf16 %v3578, %v3577
    %v3621 = vpack.c.bf16 %v3580, %v3579
    %v3622 = vpack.c.bf16 %v3582, %v3581
    %v3623 = vpack.c.bf16 %v3584, %v3583
    %v3624 = vpack.c.bf16 %v3586, %v3585
    %v3625 = vpack.c.bf16 %v3588, %v3587
    %v3626 = vpack.c.bf16 %v3590, %v3589
    %v3627 = vpack.c.bf16 %v3592, %v3591
    %v3628 = vpack.c.bf16 %v3594, %v3593
    %v3629 = vpack.c.bf16 %v3596, %v3595
    %v3630 = vpack.c.bf16 %v3598, %v3597
    %v3631 = vld [vmem:[%s3182 + $0x1] sm:$0xff]
    %v3632 = vld [vmem:[%s3182 + $0x9] sm:$0xff]
    %v3633 = vld [vmem:[%s3182 + $0x19] sm:$0xff]
    %v3634 = vld [vmem:[%s3182 + $0x21] sm:$0xff]
    %v3635 = vld [vmem:[%s3182 + $0x31] sm:$0xff]
    %v3636 = vld [vmem:[%s3182 + $0x39] sm:$0xff]
    %v3637 = vld [vmem:[%s3182 + $0x49] sm:$0xff]
    %v3638 = vld [vmem:[%s3182 + $0x51] sm:$0xff]
    %v3639 = vld [vmem:[%s3182 + $0x61] sm:$0xff]
    %v3640 = vld [vmem:[%s3182 + $0x69] sm:$0xff]
    %v3641 = vld [vmem:[%s3182 + $0x79] sm:$0xff]
    %v3642 = vld [vmem:[%s3182 + $0x81] sm:$0xff]
    %v3643 = vld [vmem:[%s3182 + $0x91] sm:$0xff]
    %v3644 = vld [vmem:[%s3182 + $0x99] sm:$0xff]
    %v3645 = vld [vmem:[%s3182 + $0xa9] sm:$0xff]
    %v3646 = vld [vmem:[%s3182 + $0xb1] sm:$0xff]
    %v3647 = vld [vmem:[%s3182 + $0xc1] sm:$0xff]
    %v3648 = vld [vmem:[%s3182 + $0xc9] sm:$0xff]
    %v3649 = vld [vmem:[%s3182 + $0xd9] sm:$0xff]
    %v3650 = vld [vmem:[%s3182 + $0xe1] sm:$0xff]
    %v3651 = vld [vmem:[%s3182 + $0xf1] sm:$0xff]
    %v3652 = vld [vmem:[%s3182 + $0xf9] sm:$0xff]
    %v3653 = vld [vmem:[%s3182 + $0x109] sm:$0xff]
    %v3654 = vld [vmem:[%s3182 + $0x111] sm:$0xff]
    %v3655 = vld [vmem:[%s3182 + $0x121] sm:$0xff]
    %v3656 = vld [vmem:[%s3182 + $0x129] sm:$0xff]
    %v3657 = vld [vmem:[%s3182 + $0x139] sm:$0xff]
    %v3658 = vld [vmem:[%s3182 + $0x141] sm:$0xff]
    %v3659 = vld [vmem:[%s3182 + $0x151] sm:$0xff]
    %v3660 = vld [vmem:[%s3182 + $0x159] sm:$0xff]
    %v3661 = vld [vmem:[%s3182 + $0x169] sm:$0xff]
    %v3662 = vld [vmem:[%s3182 + $0x171] sm:$0xff]
    %v3663 = vld [vmem:[%s3182 + $0x1b1] sm:$0xff]
    %v3664 = vld [vmem:[%s3182 + $0x1b9] sm:$0xff]
    %v3665 = vld [vmem:[%s3182 + $0x1c9] sm:$0xff]
    %v3666 = vld [vmem:[%s3182 + $0x1d1] sm:$0xff]
    %v3667 = vld [vmem:[%s3182 + $0x1e1] sm:$0xff]
    %v3668 = vld [vmem:[%s3182 + $0x1e9] sm:$0xff]
    %v3669 = vld [vmem:[%s3182 + $0x1f9] sm:$0xff]
    %v3670 = vld [vmem:[%s3182 + $0x201] sm:$0xff]
    %v3671 = vld [vmem:[%s3182 + $0x211] sm:$0xff]
    %v3672 = vld [vmem:[%s3182 + $0x219] sm:$0xff]
    %v3673 = vld [vmem:[%s3182 + $0x229] sm:$0xff]
    %v3674 = vld [vmem:[%s3182 + $0x231] sm:$0xff]
    %v3675 = vld [vmem:[%s3182 + $0x241] sm:$0xff]
    %v3676 = vld [vmem:[%s3182 + $0x249] sm:$0xff]
    %v3677 = vld [vmem:[%s3182 + $0x259] sm:$0xff]
    %v3678 = vld [vmem:[%s3182 + $0x261] sm:$0xff]
    %v3679 = vld [vmem:[%s3182 + $0x271] sm:$0xff]
    %v3680 = vld [vmem:[%s3182 + $0x279] sm:$0xff]
    %v3681 = vld [vmem:[%s3182 + $0x289] sm:$0xff]
    %v3682 = vld [vmem:[%s3182 + $0x291] sm:$0xff]
    %v3683 = vld [vmem:[%s3182 + $0x2a1] sm:$0xff]
    %v3684 = vld [vmem:[%s3182 + $0x2a9] sm:$0xff]
    %v3685 = vld [vmem:[%s3182 + $0x2b9] sm:$0xff]
    %v3686 = vld [vmem:[%s3182 + $0x2c1] sm:$0xff]
    %v3687 = vld [vmem:[%s3182 + $0x2d1] sm:$0xff]
    %v3688 = vld [vmem:[%s3182 + $0x2d9] sm:$0xff]
    %v3689 = vld [vmem:[%s3182 + $0x2e9] sm:$0xff]
    %v3690 = vld [vmem:[%s3182 + $0x2f1] sm:$0xff]
    %v3691 = vld [vmem:[%s3182 + $0x301] sm:$0xff]
    %v3692 = vld [vmem:[%s3182 + $0x309] sm:$0xff]
    %v3693 = vld [vmem:[%s3182 + $0x319] sm:$0xff]
    %v3694 = vld [vmem:[%s3182 + $0x321] sm:$0xff]
    %v3695 = vpack.c.bf16 %v3632, %v3631
    %v3696 = vpack.c.bf16 %v3634, %v3633
    %v3697 = vpack.c.bf16 %v3636, %v3635
    %v3698 = vpack.c.bf16 %v3638, %v3637
    %v3699 = vpack.c.bf16 %v3640, %v3639
    %v3700 = vpack.c.bf16 %v3642, %v3641
    %v3701 = vpack.c.bf16 %v3644, %v3643
    %v3702 = vpack.c.bf16 %v3646, %v3645
    %v3703 = vpack.c.bf16 %v3648, %v3647
    %v3704 = vpack.c.bf16 %v3650, %v3649
    %v3705 = vpack.c.bf16 %v3652, %v3651
    %v3706 = vpack.c.bf16 %v3654, %v3653
    %v3707 = vpack.c.bf16 %v3656, %v3655
    %v3708 = vpack.c.bf16 %v3658, %v3657
    %v3709 = vpack.c.bf16 %v3660, %v3659
    %v3710 = vpack.c.bf16 %v3662, %v3661
    %v3711 = vpack.c.bf16 %v3664, %v3663
    %v3712 = vpack.c.bf16 %v3666, %v3665
    %v3713 = vpack.c.bf16 %v3668, %v3667
    %v3714 = vpack.c.bf16 %v3670, %v3669
    %v3715 = vpack.c.bf16 %v3672, %v3671
    %v3716 = vpack.c.bf16 %v3674, %v3673
    %v3717 = vpack.c.bf16 %v3676, %v3675
    %v3718 = vpack.c.bf16 %v3678, %v3677
    %v3719 = vpack.c.bf16 %v3680, %v3679
    %v3720 = vpack.c.bf16 %v3682, %v3681
    %v3721 = vpack.c.bf16 %v3684, %v3683
    %v3722 = vpack.c.bf16 %v3686, %v3685
    %v3723 = vpack.c.bf16 %v3688, %v3687
    %v3724 = vpack.c.bf16 %v3690, %v3689
    %v3725 = vpack.c.bf16 %v3692, %v3691
    %v3726 = vpack.c.bf16 %v3694, %v3693
    %v3727 = vld [vmem:[%s3182 + $0x2] sm:$0xff]
    %v3728 = vld [vmem:[%s3182 + $0xa] sm:$0xff]
    %v3729 = vld [vmem:[%s3182 + $0x1a] sm:$0xff]
    %v3730 = vld [vmem:[%s3182 + $0x22] sm:$0xff]
    %v3731 = vld [vmem:[%s3182 + $0x32] sm:$0xff]
    %v3732 = vld [vmem:[%s3182 + $0x3a] sm:$0xff]
    %v3733 = vld [vmem:[%s3182 + $0x4a] sm:$0xff]
    %v3734 = vld [vmem:[%s3182 + $0x52] sm:$0xff]
    %v3735 = vld [vmem:[%s3182 + $0x62] sm:$0xff]
    %v3736 = vld [vmem:[%s3182 + $0x6a] sm:$0xff]
    %v3737 = vld [vmem:[%s3182 + $0x7a] sm:$0xff]
    %v3738 = vld [vmem:[%s3182 + $0x82] sm:$0xff]
    %v3739 = vld [vmem:[%s3182 + $0x92] sm:$0xff]
    %v3740 = vld [vmem:[%s3182 + $0x9a] sm:$0xff]
    %v3741 = vld [vmem:[%s3182 + $0xaa] sm:$0xff]
    %v3742 = vld [vmem:[%s3182 + $0xb2] sm:$0xff]
    %v3743 = vld [vmem:[%s3182 + $0xc2] sm:$0xff]
    %v3744 = vld [vmem:[%s3182 + $0xca] sm:$0xff]
    %v3745 = vld [vmem:[%s3182 + $0xda] sm:$0xff]
    %v3746 = vld [vmem:[%s3182 + $0xe2] sm:$0xff]
    %v3747 = vld [vmem:[%s3182 + $0xf2] sm:$0xff]
    %v3748 = vld [vmem:[%s3182 + $0xfa] sm:$0xff]
    %v3749 = vld [vmem:[%s3182 + $0x10a] sm:$0xff]
    %v3750 = vld [vmem:[%s3182 + $0x112] sm:$0xff]
    %v3751 = vld [vmem:[%s3182 + $0x122] sm:$0xff]
    %v3752 = vld [vmem:[%s3182 + $0x12a] sm:$0xff]
    %v3753 = vld [vmem:[%s3182 + $0x13a] sm:$0xff]
    %v3754 = vld [vmem:[%s3182 + $0x142] sm:$0xff]
    %v3755 = vld [vmem:[%s3182 + $0x152] sm:$0xff]
    %v3756 = vld [vmem:[%s3182 + $0x15a] sm:$0xff]
    %v3757 = vld [vmem:[%s3182 + $0x16a] sm:$0xff]
    %v3758 = vld [vmem:[%s3182 + $0x172] sm:$0xff]
    %v3759 = vld [vmem:[%s3182 + $0x1b2] sm:$0xff]
    %v3760 = vld [vmem:[%s3182 + $0x1ba] sm:$0xff]
    %v3761 = vld [vmem:[%s3182 + $0x1ca] sm:$0xff]
    %v3762 = vld [vmem:[%s3182 + $0x1d2] sm:$0xff]
    %v3763 = vld [vmem:[%s3182 + $0x1e2] sm:$0xff]
    %v3764 = vld [vmem:[%s3182 + $0x1ea] sm:$0xff]
    %v3765 = vld [vmem:[%s3182 + $0x1fa] sm:$0xff]
    %v3766 = vld [vmem:[%s3182 + $0x202] sm:$0xff]
    %v3767 = vld [vmem:[%s3182 + $0x212] sm:$0xff]
    %v3768 = vld [vmem:[%s3182 + $0x21a] sm:$0xff]
    %v3769 = vld [vmem:[%s3182 + $0x22a] sm:$0xff]
    %v3770 = vld [vmem:[%s3182 + $0x232] sm:$0xff]
    %v3771 = vld [vmem:[%s3182 + $0x242] sm:$0xff]
    %v3772 = vld [vmem:[%s3182 + $0x24a] sm:$0xff]
    %v3773 = vld [vmem:[%s3182 + $0x25a] sm:$0xff]
    %v3774 = vld [vmem:[%s3182 + $0x262] sm:$0xff]
    %v3775 = vld [vmem:[%s3182 + $0x272] sm:$0xff]
    %v3776 = vld [vmem:[%s3182 + $0x27a] sm:$0xff]
    %v3777 = vld [vmem:[%s3182 + $0x28a] sm:$0xff]
    %v3778 = vld [vmem:[%s3182 + $0x292] sm:$0xff]
    %v3779 = vld [vmem:[%s3182 + $0x2a2] sm:$0xff]
    %v3780 = vld [vmem:[%s3182 + $0x2aa] sm:$0xff]
    %v3781 = vld [vmem:[%s3182 + $0x2ba] sm:$0xff]
    %v3782 = vld [vmem:[%s3182 + $0x2c2] sm:$0xff]
    %v3783 = vld [vmem:[%s3182 + $0x2d2] sm:$0xff]
    %v3784 = vld [vmem:[%s3182 + $0x2da] sm:$0xff]
    %v3785 = vld [vmem:[%s3182 + $0x2ea] sm:$0xff]
    %v3786 = vld [vmem:[%s3182 + $0x2f2] sm:$0xff]
    %v3787 = vld [vmem:[%s3182 + $0x302] sm:$0xff]
    %v3788 = vld [vmem:[%s3182 + $0x30a] sm:$0xff]
    %v3789 = vld [vmem:[%s3182 + $0x31a] sm:$0xff]
    %v3790 = vld [vmem:[%s3182 + $0x322] sm:$0xff]
    %v3791 = vpack.c.bf16 %v3728, %v3727
    %v3792 = vpack.c.bf16 %v3730, %v3729
    %v3793 = vpack.c.bf16 %v3732, %v3731
    %v3794 = vpack.c.bf16 %v3734, %v3733
    %v3795 = vpack.c.bf16 %v3736, %v3735
    %v3796 = vpack.c.bf16 %v3738, %v3737
    %v3797 = vpack.c.bf16 %v3740, %v3739
    %v3798 = vpack.c.bf16 %v3742, %v3741
    %v3799 = vpack.c.bf16 %v3744, %v3743
    %v3800 = vpack.c.bf16 %v3746, %v3745
    %v3801 = vpack.c.bf16 %v3748, %v3747
    %v3802 = vpack.c.bf16 %v3750, %v3749
    %v3803 = vpack.c.bf16 %v3752, %v3751
    %v3804 = vpack.c.bf16 %v3754, %v3753
    %v3805 = vpack.c.bf16 %v3756, %v3755
    %v3806 = vpack.c.bf16 %v3758, %v3757
    %v3807 = vpack.c.bf16 %v3760, %v3759
    %v3808 = vpack.c.bf16 %v3762, %v3761
    %v3809 = vpack.c.bf16 %v3764, %v3763
    %v3810 = vpack.c.bf16 %v3766, %v3765
    %v3811 = vpack.c.bf16 %v3768, %v3767
    %v3812 = vpack.c.bf16 %v3770, %v3769
    %v3813 = vpack.c.bf16 %v3772, %v3771
    %v3814 = vpack.c.bf16 %v3774, %v3773
    %v3815 = vpack.c.bf16 %v3776, %v3775
    %v3816 = vpack.c.bf16 %v3778, %v3777
    %v3817 = vpack.c.bf16 %v3780, %v3779
    %v3818 = vpack.c.bf16 %v3782, %v3781
    %v3819 = vpack.c.bf16 %v3784, %v3783
    %v3820 = vpack.c.bf16 %v3786, %v3785
    %v3821 = vpack.c.bf16 %v3788, %v3787
    %v3822 = vpack.c.bf16 %v3790, %v3789
    %s3823 = scalar_lea.vmem [#allocation3], 48
    %v3824 = vld [vmem:[%s3823] sm:$0xff]
    %v3825 = vld [vmem:[%s3823 + $0x8] sm:$0xff]
    %v3826 = vld [vmem:[%s3823 + $0x18] sm:$0xff]
    %v3827 = vld [vmem:[%s3823 + $0x20] sm:$0xff]
    %v3828 = vld [vmem:[%s3823 + $0x30] sm:$0xff]
    %v3829 = vld [vmem:[%s3823 + $0x38] sm:$0xff]
    %v3830 = vld [vmem:[%s3823 + $0x48] sm:$0xff]
    %v3831 = vld [vmem:[%s3823 + $0x50] sm:$0xff]
    %v3832 = vld [vmem:[%s3823 + $0x60] sm:$0xff]
    %v3833 = vld [vmem:[%s3823 + $0x68] sm:$0xff]
    %v3834 = vld [vmem:[%s3823 + $0x78] sm:$0xff]
    %v3835 = vld [vmem:[%s3823 + $0x80] sm:$0xff]
    %v3836 = vld [vmem:[%s3823 + $0x90] sm:$0xff]
    %v3837 = vld [vmem:[%s3823 + $0x98] sm:$0xff]
    %v3838 = vld [vmem:[%s3823 + $0xa8] sm:$0xff]
    %v3839 = vld [vmem:[%s3823 + $0xb0] sm:$0xff]
    %v3840 = vld [vmem:[%s3823 + $0xc0] sm:$0xff]
    %v3841 = vld [vmem:[%s3823 + $0xc8] sm:$0xff]
    %v3842 = vld [vmem:[%s3823 + $0xd8] sm:$0xff]
    %v3843 = vld [vmem:[%s3823 + $0xe0] sm:$0xff]
    %v3844 = vld [vmem:[%s3823 + $0xf0] sm:$0xff]
    %v3845 = vld [vmem:[%s3823 + $0xf8] sm:$0xff]
    %v3846 = vld [vmem:[%s3823 + $0x108] sm:$0xff]
    %v3847 = vld [vmem:[%s3823 + $0x110] sm:$0xff]
    %v3848 = vld [vmem:[%s3823 + $0x120] sm:$0xff]
    %v3849 = vld [vmem:[%s3823 + $0x128] sm:$0xff]
    %v3850 = vld [vmem:[%s3823 + $0x138] sm:$0xff]
    %v3851 = vld [vmem:[%s3823 + $0x140] sm:$0xff]
    %v3852 = vld [vmem:[%s3823 + $0x150] sm:$0xff]
    %v3853 = vld [vmem:[%s3823 + $0x158] sm:$0xff]
    %v3854 = vld [vmem:[%s3823 + $0x168] sm:$0xff]
    %v3855 = vld [vmem:[%s3823 + $0x170] sm:$0xff]
    %v3856 = vld [vmem:[%s3823 + $0x1b0] sm:$0xff]
    %v3857 = vld [vmem:[%s3823 + $0x1b8] sm:$0xff]
    %v3858 = vld [vmem:[%s3823 + $0x1c8] sm:$0xff]
    %v3859 = vld [vmem:[%s3823 + $0x1d0] sm:$0xff]
    %v3860 = vld [vmem:[%s3823 + $0x1e0] sm:$0xff]
    %v3861 = vld [vmem:[%s3823 + $0x1e8] sm:$0xff]
    %v3862 = vld [vmem:[%s3823 + $0x1f8] sm:$0xff]
    %v3863 = vld [vmem:[%s3823 + $0x200] sm:$0xff]
    %v3864 = vld [vmem:[%s3823 + $0x210] sm:$0xff]
    %v3865 = vld [vmem:[%s3823 + $0x218] sm:$0xff]
    %v3866 = vld [vmem:[%s3823 + $0x228] sm:$0xff]
    %v3867 = vld [vmem:[%s3823 + $0x230] sm:$0xff]
    %v3868 = vld [vmem:[%s3823 + $0x240] sm:$0xff]
    %v3869 = vld [vmem:[%s3823 + $0x248] sm:$0xff]
    %v3870 = vld [vmem:[%s3823 + $0x258] sm:$0xff]
    %v3871 = vld [vmem:[%s3823 + $0x260] sm:$0xff]
    %v3872 = vld [vmem:[%s3823 + $0x270] sm:$0xff]
    %v3873 = vld [vmem:[%s3823 + $0x278] sm:$0xff]
    %v3874 = vld [vmem:[%s3823 + $0x288] sm:$0xff]
    %v3875 = vld [vmem:[%s3823 + $0x290] sm:$0xff]
    %v3876 = vld [vmem:[%s3823 + $0x2a0] sm:$0xff]
    %v3877 = vld [vmem:[%s3823 + $0x2a8] sm:$0xff]
    %v3878 = vld [vmem:[%s3823 + $0x2b8] sm:$0xff]
    %v3879 = vld [vmem:[%s3823 + $0x2c0] sm:$0xff]
    %v3880 = vld [vmem:[%s3823 + $0x2d0] sm:$0xff]
    %v3881 = vld [vmem:[%s3823 + $0x2d8] sm:$0xff]
    %v3882 = vld [vmem:[%s3823 + $0x2e8] sm:$0xff]
    %v3883 = vld [vmem:[%s3823 + $0x2f0] sm:$0xff]
    %v3884 = vld [vmem:[%s3823 + $0x300] sm:$0xff]
    %v3885 = vld [vmem:[%s3823 + $0x308] sm:$0xff]
    %v3886 = vld [vmem:[%s3823 + $0x318] sm:$0xff]
    %v3887 = vld [vmem:[%s3823 + $0x320] sm:$0xff]
    %v3888 = vpack.c.bf16 %v3825, %v3824
    %v3889 = vpack.c.bf16 %v3827, %v3826
    %v3890 = vpack.c.bf16 %v3829, %v3828
    %v3891 = vpack.c.bf16 %v3831, %v3830
    %v3892 = vpack.c.bf16 %v3833, %v3832
    %v3893 = vpack.c.bf16 %v3835, %v3834
    %v3894 = vpack.c.bf16 %v3837, %v3836
    %v3895 = vpack.c.bf16 %v3839, %v3838
    %v3896 = vpack.c.bf16 %v3841, %v3840
    %v3897 = vpack.c.bf16 %v3843, %v3842
    %v3898 = vpack.c.bf16 %v3845, %v3844
    %v3899 = vpack.c.bf16 %v3847, %v3846
    %v3900 = vpack.c.bf16 %v3849, %v3848
    %v3901 = vpack.c.bf16 %v3851, %v3850
    %v3902 = vpack.c.bf16 %v3853, %v3852
    %v3903 = vpack.c.bf16 %v3855, %v3854
    %v3904 = vpack.c.bf16 %v3857, %v3856
    %v3905 = vpack.c.bf16 %v3859, %v3858
    %v3906 = vpack.c.bf16 %v3861, %v3860
    %v3907 = vpack.c.bf16 %v3863, %v3862
    %v3908 = vpack.c.bf16 %v3865, %v3864
    %v3909 = vpack.c.bf16 %v3867, %v3866
    %v3910 = vpack.c.bf16 %v3869, %v3868
    %v3911 = vpack.c.bf16 %v3871, %v3870
    %v3912 = vpack.c.bf16 %v3873, %v3872
    %v3913 = vpack.c.bf16 %v3875, %v3874
    %v3914 = vpack.c.bf16 %v3877, %v3876
    %v3915 = vpack.c.bf16 %v3879, %v3878
    %v3916 = vpack.c.bf16 %v3881, %v3880
    %v3917 = vpack.c.bf16 %v3883, %v3882
    %v3918 = vpack.c.bf16 %v3885, %v3884
    %v3919 = vpack.c.bf16 %v3887, %v3886
    %v3920 = vld [vmem:[%s3823 + $0x1] sm:$0xff]
    %v3921 = vld [vmem:[%s3823 + $0x9] sm:$0xff]
    %v3922 = vld [vmem:[%s3823 + $0x19] sm:$0xff]
    %v3923 = vld [vmem:[%s3823 + $0x21] sm:$0xff]
    %v3924 = vld [vmem:[%s3823 + $0x31] sm:$0xff]
    %v3925 = vld [vmem:[%s3823 + $0x39] sm:$0xff]
    %v3926 = vld [vmem:[%s3823 + $0x49] sm:$0xff]
    %v3927 = vld [vmem:[%s3823 + $0x51] sm:$0xff]
    %v3928 = vld [vmem:[%s3823 + $0x61] sm:$0xff]
    %v3929 = vld [vmem:[%s3823 + $0x69] sm:$0xff]
    %v3930 = vld [vmem:[%s3823 + $0x79] sm:$0xff]
    %v3931 = vld [vmem:[%s3823 + $0x81] sm:$0xff]
    %v3932 = vld [vmem:[%s3823 + $0x91] sm:$0xff]
    %v3933 = vld [vmem:[%s3823 + $0x99] sm:$0xff]
    %v3934 = vld [vmem:[%s3823 + $0xa9] sm:$0xff]
    %v3935 = vld [vmem:[%s3823 + $0xb1] sm:$0xff]
    %v3936 = vld [vmem:[%s3823 + $0xc1] sm:$0xff]
    %v3937 = vld [vmem:[%s3823 + $0xc9] sm:$0xff]
    %v3938 = vld [vmem:[%s3823 + $0xd9] sm:$0xff]
    %v3939 = vld [vmem:[%s3823 + $0xe1] sm:$0xff]
    %v3940 = vld [vmem:[%s3823 + $0xf1] sm:$0xff]
    %v3941 = vld [vmem:[%s3823 + $0xf9] sm:$0xff]
    %v3942 = vld [vmem:[%s3823 + $0x109] sm:$0xff]
    %v3943 = vld [vmem:[%s3823 + $0x111] sm:$0xff]
    %v3944 = vld [vmem:[%s3823 + $0x121] sm:$0xff]
    %v3945 = vld [vmem:[%s3823 + $0x129] sm:$0xff]
    %v3946 = vld [vmem:[%s3823 + $0x139] sm:$0xff]
    %v3947 = vld [vmem:[%s3823 + $0x141] sm:$0xff]
    %v3948 = vld [vmem:[%s3823 + $0x151] sm:$0xff]
    %v3949 = vld [vmem:[%s3823 + $0x159] sm:$0xff]
    %v3950 = vld [vmem:[%s3823 + $0x169] sm:$0xff]
    %v3951 = vld [vmem:[%s3823 + $0x171] sm:$0xff]
    %v3952 = vld [vmem:[%s3823 + $0x1b1] sm:$0xff]
    %v3953 = vld [vmem:[%s3823 + $0x1b9] sm:$0xff]
    %v3954 = vld [vmem:[%s3823 + $0x1c9] sm:$0xff]
    %v3955 = vld [vmem:[%s3823 + $0x1d1] sm:$0xff]
    %v3956 = vld [vmem:[%s3823 + $0x1e1] sm:$0xff]
    %v3957 = vld [vmem:[%s3823 + $0x1e9] sm:$0xff]
    %v3958 = vld [vmem:[%s3823 + $0x1f9] sm:$0xff]
    %v3959 = vld [vmem:[%s3823 + $0x201] sm:$0xff]
    %v3960 = vld [vmem:[%s3823 + $0x211] sm:$0xff]
    %v3961 = vld [vmem:[%s3823 + $0x219] sm:$0xff]
    %v3962 = vld [vmem:[%s3823 + $0x229] sm:$0xff]
    %v3963 = vld [vmem:[%s3823 + $0x231] sm:$0xff]
    %v3964 = vld [vmem:[%s3823 + $0x241] sm:$0xff]
    %v3965 = vld [vmem:[%s3823 + $0x249] sm:$0xff]
    %v3966 = vld [vmem:[%s3823 + $0x259] sm:$0xff]
    %v3967 = vld [vmem:[%s3823 + $0x261] sm:$0xff]
    %v3968 = vld [vmem:[%s3823 + $0x271] sm:$0xff]
    %v3969 = vld [vmem:[%s3823 + $0x279] sm:$0xff]
    %v3970 = vld [vmem:[%s3823 + $0x289] sm:$0xff]
    %v3971 = vld [vmem:[%s3823 + $0x291] sm:$0xff]
    %v3972 = vld [vmem:[%s3823 + $0x2a1] sm:$0xff]
    %v3973 = vld [vmem:[%s3823 + $0x2a9] sm:$0xff]
    %v3974 = vld [vmem:[%s3823 + $0x2b9] sm:$0xff]
    %v3975 = vld [vmem:[%s3823 + $0x2c1] sm:$0xff]
    %v3976 = vld [vmem:[%s3823 + $0x2d1] sm:$0xff]
    %v3977 = vld [vmem:[%s3823 + $0x2d9] sm:$0xff]
    %v3978 = vld [vmem:[%s3823 + $0x2e9] sm:$0xff]
    %v3979 = vld [vmem:[%s3823 + $0x2f1] sm:$0xff]
    %v3980 = vld [vmem:[%s3823 + $0x301] sm:$0xff]
    %v3981 = vld [vmem:[%s3823 + $0x309] sm:$0xff]
    %v3982 = vld [vmem:[%s3823 + $0x319] sm:$0xff]
    %v3983 = vld [vmem:[%s3823 + $0x321] sm:$0xff]
    %v3984 = vpack.c.bf16 %v3921, %v3920
    %v3985 = vpack.c.bf16 %v3923, %v3922
    %v3986 = vpack.c.bf16 %v3925, %v3924
    %v3987 = vpack.c.bf16 %v3927, %v3926
    %v3988 = vpack.c.bf16 %v3929, %v3928
    %v3989 = vpack.c.bf16 %v3931, %v3930
    %v3990 = vpack.c.bf16 %v3933, %v3932
    %v3991 = vpack.c.bf16 %v3935, %v3934
    %v3992 = vpack.c.bf16 %v3937, %v3936
    %v3993 = vpack.c.bf16 %v3939, %v3938
    %v3994 = vpack.c.bf16 %v3941, %v3940
    %v3995 = vpack.c.bf16 %v3943, %v3942
    %v3996 = vpack.c.bf16 %v3945, %v3944
    %v3997 = vpack.c.bf16 %v3947, %v3946
    %v3998 = vpack.c.bf16 %v3949, %v3948
    %v3999 = vpack.c.bf16 %v3951, %v3950
    %v4000 = vpack.c.bf16 %v3953, %v3952
    %v4001 = vpack.c.bf16 %v3955, %v3954
    %v4002 = vpack.c.bf16 %v3957, %v3956
    %v4003 = vpack.c.bf16 %v3959, %v3958
    %v4004 = vpack.c.bf16 %v3961, %v3960
    %v4005 = vpack.c.bf16 %v3963, %v3962
    %v4006 = vpack.c.bf16 %v3965, %v3964
    %v4007 = vpack.c.bf16 %v3967, %v3966
    %v4008 = vpack.c.bf16 %v3969, %v3968
    %v4009 = vpack.c.bf16 %v3971, %v3970
    %v4010 = vpack.c.bf16 %v3973, %v3972
    %v4011 = vpack.c.bf16 %v3975, %v3974
    %v4012 = vpack.c.bf16 %v3977, %v3976
    %v4013 = vpack.c.bf16 %v3979, %v3978
    %v4014 = vpack.c.bf16 %v3981, %v3980
    %v4015 = vpack.c.bf16 %v3983, %v3982
    %v4016 = vld [vmem:[%s3823 + $0x2] sm:$0xff]
    %v4017 = vld [vmem:[%s3823 + $0xa] sm:$0xff]
    %v4018 = vld [vmem:[%s3823 + $0x1a] sm:$0xff]
    %v4019 = vld [vmem:[%s3823 + $0x22] sm:$0xff]
    %v4020 = vld [vmem:[%s3823 + $0x32] sm:$0xff]
    %v4021 = vld [vmem:[%s3823 + $0x3a] sm:$0xff]
    %v4022 = vld [vmem:[%s3823 + $0x4a] sm:$0xff]
    %v4023 = vld [vmem:[%s3823 + $0x52] sm:$0xff]
    %v4024 = vld [vmem:[%s3823 + $0x62] sm:$0xff]
    %v4025 = vld [vmem:[%s3823 + $0x6a] sm:$0xff]
    %v4026 = vld [vmem:[%s3823 + $0x7a] sm:$0xff]
    %v4027 = vld [vmem:[%s3823 + $0x82] sm:$0xff]
    %v4028 = vld [vmem:[%s3823 + $0x92] sm:$0xff]
    %v4029 = vld [vmem:[%s3823 + $0x9a] sm:$0xff]
    %v4030 = vld [vmem:[%s3823 + $0xaa] sm:$0xff]
    %v4031 = vld [vmem:[%s3823 + $0xb2] sm:$0xff]
    %v4032 = vld [vmem:[%s3823 + $0xc2] sm:$0xff]
    %v4033 = vld [vmem:[%s3823 + $0xca] sm:$0xff]
    %v4034 = vld [vmem:[%s3823 + $0xda] sm:$0xff]
    %v4035 = vld [vmem:[%s3823 + $0xe2] sm:$0xff]
    %v4036 = vld [vmem:[%s3823 + $0xf2] sm:$0xff]
    %v4037 = vld [vmem:[%s3823 + $0xfa] sm:$0xff]
    %v4038 = vld [vmem:[%s3823 + $0x10a] sm:$0xff]
    %v4039 = vld [vmem:[%s3823 + $0x112] sm:$0xff]
    %v4040 = vld [vmem:[%s3823 + $0x122] sm:$0xff]
    %v4041 = vld [vmem:[%s3823 + $0x12a] sm:$0xff]
    %v4042 = vld [vmem:[%s3823 + $0x13a] sm:$0xff]
    %v4043 = vld [vmem:[%s3823 + $0x142] sm:$0xff]
    %v4044 = vld [vmem:[%s3823 + $0x152] sm:$0xff]
    %v4045 = vld [vmem:[%s3823 + $0x15a] sm:$0xff]
    %v4046 = vld [vmem:[%s3823 + $0x16a] sm:$0xff]
    %v4047 = vld [vmem:[%s3823 + $0x172] sm:$0xff]
    %v4048 = vld [vmem:[%s3823 + $0x1b2] sm:$0xff]
    %v4049 = vld [vmem:[%s3823 + $0x1ba] sm:$0xff]
    %v4050 = vld [vmem:[%s3823 + $0x1ca] sm:$0xff]
    %v4051 = vld [vmem:[%s3823 + $0x1d2] sm:$0xff]
    %v4052 = vld [vmem:[%s3823 + $0x1e2] sm:$0xff]
    %v4053 = vld [vmem:[%s3823 + $0x1ea] sm:$0xff]
    %v4054 = vld [vmem:[%s3823 + $0x1fa] sm:$0xff]
    %v4055 = vld [vmem:[%s3823 + $0x202] sm:$0xff]
    %v4056 = vld [vmem:[%s3823 + $0x212] sm:$0xff]
    %v4057 = vld [vmem:[%s3823 + $0x21a] sm:$0xff]
    %v4058 = vld [vmem:[%s3823 + $0x22a] sm:$0xff]
    %v4059 = vld [vmem:[%s3823 + $0x232] sm:$0xff]
    %v4060 = vld [vmem:[%s3823 + $0x242] sm:$0xff]
    %v4061 = vld [vmem:[%s3823 + $0x24a] sm:$0xff]
    %v4062 = vld [vmem:[%s3823 + $0x25a] sm:$0xff]
    %v4063 = vld [vmem:[%s3823 + $0x262] sm:$0xff]
    %v4064 = vld [vmem:[%s3823 + $0x272] sm:$0xff]
    %v4065 = vld [vmem:[%s3823 + $0x27a] sm:$0xff]
    %v4066 = vld [vmem:[%s3823 + $0x28a] sm:$0xff]
    %v4067 = vld [vmem:[%s3823 + $0x292] sm:$0xff]
    %v4068 = vld [vmem:[%s3823 + $0x2a2] sm:$0xff]
    %v4069 = vld [vmem:[%s3823 + $0x2aa] sm:$0xff]
    %v4070 = vld [vmem:[%s3823 + $0x2ba] sm:$0xff]
    %v4071 = vld [vmem:[%s3823 + $0x2c2] sm:$0xff]
    %v4072 = vld [vmem:[%s3823 + $0x2d2] sm:$0xff]
    %v4073 = vld [vmem:[%s3823 + $0x2da] sm:$0xff]
    %v4074 = vld [vmem:[%s3823 + $0x2ea] sm:$0xff]
    %v4075 = vld [vmem:[%s3823 + $0x2f2] sm:$0xff]
    %v4076 = vld [vmem:[%s3823 + $0x302] sm:$0xff]
    %v4077 = vld [vmem:[%s3823 + $0x30a] sm:$0xff]
    %v4078 = vld [vmem:[%s3823 + $0x31a] sm:$0xff]
    %v4079 = vld [vmem:[%s3823 + $0x322] sm:$0xff]
    %v4080 = vpack.c.bf16 %v4017, %v4016
    %v4081 = vpack.c.bf16 %v4019, %v4018
    %v4082 = vpack.c.bf16 %v4021, %v4020
    %v4083 = vpack.c.bf16 %v4023, %v4022
    %v4084 = vpack.c.bf16 %v4025, %v4024
    %v4085 = vpack.c.bf16 %v4027, %v4026
    %v4086 = vpack.c.bf16 %v4029, %v4028
    %v4087 = vpack.c.bf16 %v4031, %v4030
    %v4088 = vpack.c.bf16 %v4033, %v4032
    %v4089 = vpack.c.bf16 %v4035, %v4034
    %v4090 = vpack.c.bf16 %v4037, %v4036
    %v4091 = vpack.c.bf16 %v4039, %v4038
    %v4092 = vpack.c.bf16 %v4041, %v4040
    %v4093 = vpack.c.bf16 %v4043, %v4042
    %v4094 = vpack.c.bf16 %v4045, %v4044
    %v4095 = vpack.c.bf16 %v4047, %v4046
    %v4096 = vpack.c.bf16 %v4049, %v4048
    %v4097 = vpack.c.bf16 %v4051, %v4050
    %v4098 = vpack.c.bf16 %v4053, %v4052
    %v4099 = vpack.c.bf16 %v4055, %v4054
    %v4100 = vpack.c.bf16 %v4057, %v4056
    %v4101 = vpack.c.bf16 %v4059, %v4058
    %v4102 = vpack.c.bf16 %v4061, %v4060
    %v4103 = vpack.c.bf16 %v4063, %v4062
    %v4104 = vpack.c.bf16 %v4065, %v4064
    %v4105 = vpack.c.bf16 %v4067, %v4066
    %v4106 = vpack.c.bf16 %v4069, %v4068
    %v4107 = vpack.c.bf16 %v4071, %v4070
    %v4108 = vpack.c.bf16 %v4073, %v4072
    %v4109 = vpack.c.bf16 %v4075, %v4074
    %v4110 = vpack.c.bf16 %v4077, %v4076
    %v4111 = vpack.c.bf16 %v4079, %v4078
    %4144 = vrot.lane.b32.xlu0 %v3407, 32
    %v4145 = vpop.permute.xlu0 %4144
    %4146 = vrot.lane.b32.xlu0 %v3408, 32
    %v4147 = vpop.permute.xlu0 %4146
    %4148 = vrot.lane.b32.xlu0 %v3409, 32
    %v4149 = vpop.permute.xlu0 %4148
    %4150 = vrot.lane.b32.xlu0 %v3410, 32
    %v4151 = vpop.permute.xlu0 %4150
    %4152 = vrot.lane.b32.xlu0 %v3411, 32
    %v4153 = vpop.permute.xlu0 %4152
    %4154 = vrot.lane.b32.xlu0 %v3412, 32
    %v4155 = vpop.permute.xlu0 %4154
    %4156 = vrot.lane.b32.xlu0 %v3413, 32
    %v4157 = vpop.permute.xlu0 %4156
    %4158 = vrot.lane.b32.xlu0 %v3414, 32
    %v4159 = vpop.permute.xlu0 %4158
    %4160 = vrot.lane.b32.xlu0 %v3415, 32
    %v4161 = vpop.permute.xlu0 %4160
    %4162 = vrot.lane.b32.xlu0 %v3416, 32
    %v4163 = vpop.permute.xlu0 %4162
    %4164 = vrot.lane.b32.xlu0 %v3417, 32
    %v4165 = vpop.permute.xlu0 %4164
    %4166 = vrot.lane.b32.xlu0 %v3418, 32
    %v4167 = vpop.permute.xlu0 %4166
    %4168 = vrot.lane.b32.xlu0 %v3419, 32
    %v4169 = vpop.permute.xlu0 %4168
    %4170 = vrot.lane.b32.xlu0 %v3420, 32
    %v4171 = vpop.permute.xlu0 %4170
    %4172 = vrot.lane.b32.xlu0 %v3421, 32
    %v4173 = vpop.permute.xlu0 %4172
    %4174 = vrot.lane.b32.xlu0 %v3422, 32
    %v4175 = vpop.permute.xlu0 %4174
    %4176 = vrot.lane.b32.xlu0 %v3423, 32
    %v4177 = vpop.permute.xlu0 %4176
    %4178 = vrot.lane.b32.xlu0 %v3424, 32
    %v4179 = vpop.permute.xlu0 %4178
    %4180 = vrot.lane.b32.xlu0 %v3425, 32
    %v4181 = vpop.permute.xlu0 %4180
    %4182 = vrot.lane.b32.xlu0 %v3426, 32
    %v4183 = vpop.permute.xlu0 %4182
    %4184 = vrot.lane.b32.xlu0 %v3427, 32
    %v4185 = vpop.permute.xlu0 %4184
    %4186 = vrot.lane.b32.xlu0 %v3428, 32
    %v4187 = vpop.permute.xlu0 %4186
    %4188 = vrot.lane.b32.xlu0 %v3429, 32
    %v4189 = vpop.permute.xlu0 %4188
    %4190 = vrot.lane.b32.xlu0 %v3430, 32
    %v4191 = vpop.permute.xlu0 %4190
    %4192 = vrot.lane.b32.xlu0 %v3431, 32
    %v4193 = vpop.permute.xlu0 %4192
    %4194 = vrot.lane.b32.xlu0 %v3432, 32
    %v4195 = vpop.permute.xlu0 %4194
    %4196 = vrot.lane.b32.xlu0 %v3433, 32
    %v4197 = vpop.permute.xlu0 %4196
    %4198 = vrot.lane.b32.xlu0 %v3434, 32
    %v4199 = vpop.permute.xlu0 %4198
    %4200 = vrot.lane.b32.xlu0 %v3435, 32
    %v4201 = vpop.permute.xlu0 %4200
    %4202 = vrot.lane.b32.xlu0 %v3436, 32
    %v4203 = vpop.permute.xlu0 %4202
    %4204 = vrot.lane.b32.xlu0 %v3437, 32
    %v4205 = vpop.permute.xlu0 %4204
    %4206 = vrot.lane.b32.xlu0 %v3438, 32
    %v4207 = vpop.permute.xlu0 %4206
    %4240 = vrot.lane.b32.xlu0 %v3503, 64
    %v4241 = vpop.permute.xlu0 %4240
    %4242 = vrot.lane.b32.xlu0 %v3504, 64
    %v4243 = vpop.permute.xlu0 %4242
    %4244 = vrot.lane.b32.xlu0 %v3505, 64
    %v4245 = vpop.permute.xlu0 %4244
    %4246 = vrot.lane.b32.xlu0 %v3506, 64
    %v4247 = vpop.permute.xlu0 %4246
    %4248 = vrot.lane.b32.xlu0 %v3507, 64
    %v4249 = vpop.permute.xlu0 %4248
    %4250 = vrot.lane.b32.xlu0 %v3508, 64
    %v4251 = vpop.permute.xlu0 %4250
    %4252 = vrot.lane.b32.xlu0 %v3509, 64
    %v4253 = vpop.permute.xlu0 %4252
    %4254 = vrot.lane.b32.xlu0 %v3510, 64
    %v4255 = vpop.permute.xlu0 %4254
    %4256 = vrot.lane.b32.xlu0 %v3511, 64
    %v4257 = vpop.permute.xlu0 %4256
    %4258 = vrot.lane.b32.xlu0 %v3512, 64
    %v4259 = vpop.permute.xlu0 %4258
    %4260 = vrot.lane.b32.xlu0 %v3513, 64
    %v4261 = vpop.permute.xlu0 %4260
    %4262 = vrot.lane.b32.xlu0 %v3514, 64
    %v4263 = vpop.permute.xlu0 %4262
    %4264 = vrot.lane.b32.xlu0 %v3515, 64
    %v4265 = vpop.permute.xlu0 %4264
    %4266 = vrot.lane.b32.xlu0 %v3516, 64
    %v4267 = vpop.permute.xlu0 %4266
    %4268 = vrot.lane.b32.xlu0 %v3517, 64
    %v4269 = vpop.permute.xlu0 %4268
    %4270 = vrot.lane.b32.xlu0 %v3518, 64
    %v4271 = vpop.permute.xlu0 %4270
    %4272 = vrot.lane.b32.xlu0 %v3519, 64
    %v4273 = vpop.permute.xlu0 %4272
    %4274 = vrot.lane.b32.xlu0 %v3520, 64
    %v4275 = vpop.permute.xlu0 %4274
    %4276 = vrot.lane.b32.xlu0 %v3521, 64
    %v4277 = vpop.permute.xlu0 %4276
    %4278 = vrot.lane.b32.xlu0 %v3522, 64
    %v4279 = vpop.permute.xlu0 %4278
    %4280 = vrot.lane.b32.xlu0 %v3523, 64
    %v4281 = vpop.permute.xlu0 %4280
    %4282 = vrot.lane.b32.xlu0 %v3524, 64
    %v4283 = vpop.permute.xlu0 %4282
    %4284 = vrot.lane.b32.xlu0 %v3525, 64
    %v4285 = vpop.permute.xlu0 %4284
    %4286 = vrot.lane.b32.xlu0 %v3526, 64
    %v4287 = vpop.permute.xlu0 %4286
    %4288 = vrot.lane.b32.xlu0 %v3527, 64
    %v4289 = vpop.permute.xlu0 %4288
    %4290 = vrot.lane.b32.xlu0 %v3528, 64
    %v4291 = vpop.permute.xlu0 %4290
    %4292 = vrot.lane.b32.xlu0 %v3529, 64
    %v4293 = vpop.permute.xlu0 %4292
    %4294 = vrot.lane.b32.xlu0 %v3530, 64
    %v4295 = vpop.permute.xlu0 %4294
    %4296 = vrot.lane.b32.xlu0 %v3531, 64
    %v4297 = vpop.permute.xlu0 %4296
    %4298 = vrot.lane.b32.xlu0 %v3532, 64
    %v4299 = vpop.permute.xlu0 %4298
    %4300 = vrot.lane.b32.xlu0 %v3533, 64
    %v4301 = vpop.permute.xlu0 %4300
    %4302 = vrot.lane.b32.xlu0 %v3534, 64
    %v4303 = vpop.permute.xlu0 %4302
    %4336 = vrot.lane.b32.xlu0 %v3599, 96
    %v4337 = vpop.permute.xlu0 %4336
    %4338 = vrot.lane.b32.xlu0 %v3600, 96
    %v4339 = vpop.permute.xlu0 %4338
    %4340 = vrot.lane.b32.xlu0 %v3601, 96
    %v4341 = vpop.permute.xlu0 %4340
    %4342 = vrot.lane.b32.xlu0 %v3602, 96
    %v4343 = vpop.permute.xlu0 %4342
    %4344 = vrot.lane.b32.xlu0 %v3603, 96
    %v4345 = vpop.permute.xlu0 %4344
    %4346 = vrot.lane.b32.xlu0 %v3604, 96
    %v4347 = vpop.permute.xlu0 %4346
    %4348 = vrot.lane.b32.xlu0 %v3605, 96
    %v4349 = vpop.permute.xlu0 %4348
    %4350 = vrot.lane.b32.xlu0 %v3606, 96
    %v4351 = vpop.permute.xlu0 %4350
    %4352 = vrot.lane.b32.xlu0 %v3607, 96
    %v4353 = vpop.permute.xlu0 %4352
    %4354 = vrot.lane.b32.xlu0 %v3608, 96
    %v4355 = vpop.permute.xlu0 %4354
    %4356 = vrot.lane.b32.xlu0 %v3609, 96
    %v4357 = vpop.permute.xlu0 %4356
    %4358 = vrot.lane.b32.xlu0 %v3610, 96
    %v4359 = vpop.permute.xlu0 %4358
    %4360 = vrot.lane.b32.xlu0 %v3611, 96
    %v4361 = vpop.permute.xlu0 %4360
    %4362 = vrot.lane.b32.xlu0 %v3612, 96
    %v4363 = vpop.permute.xlu0 %4362
    %4364 = vrot.lane.b32.xlu0 %v3613, 96
    %v4365 = vpop.permute.xlu0 %4364
    %4366 = vrot.lane.b32.xlu0 %v3614, 96
    %v4367 = vpop.permute.xlu0 %4366
    %4368 = vrot.lane.b32.xlu0 %v3615, 96
    %v4369 = vpop.permute.xlu0 %4368
    %4370 = vrot.lane.b32.xlu0 %v3616, 96
    %v4371 = vpop.permute.xlu0 %4370
    %4372 = vrot.lane.b32.xlu0 %v3617, 96
    %v4373 = vpop.permute.xlu0 %4372
    %4374 = vrot.lane.b32.xlu0 %v3618, 96
    %v4375 = vpop.permute.xlu0 %4374
    %4376 = vrot.lane.b32.xlu0 %v3619, 96
    %v4377 = vpop.permute.xlu0 %4376
    %4378 = vrot.lane.b32.xlu0 %v3620, 96
    %v4379 = vpop.permute.xlu0 %4378
    %4380 = vrot.lane.b32.xlu0 %v3621, 96
    %v4381 = vpop.permute.xlu0 %4380
    %4382 = vrot.lane.b32.xlu0 %v3622, 96
    %v4383 = vpop.permute.xlu0 %4382
    %4384 = vrot.lane.b32.xlu0 %v3623, 96
    %v4385 = vpop.permute.xlu0 %4384
    %4386 = vrot.lane.b32.xlu0 %v3624, 96
    %v4387 = vpop.permute.xlu0 %4386
    %4388 = vrot.lane.b32.xlu0 %v3625, 96
    %v4389 = vpop.permute.xlu0 %4388
    %4390 = vrot.lane.b32.xlu0 %v3626, 96
    %v4391 = vpop.permute.xlu0 %4390
    %4392 = vrot.lane.b32.xlu0 %v3627, 96
    %v4393 = vpop.permute.xlu0 %4392
    %4394 = vrot.lane.b32.xlu0 %v3628, 96
    %v4395 = vpop.permute.xlu0 %4394
    %4396 = vrot.lane.b32.xlu0 %v3629, 96
    %v4397 = vpop.permute.xlu0 %4396
    %4398 = vrot.lane.b32.xlu0 %v3630, 96
    %v4399 = vpop.permute.xlu0 %4398
    %4432 = vrot.lane.b32.xlu0 %v3791, 32
    %v4433 = vpop.permute.xlu0 %4432
    %4434 = vrot.lane.b32.xlu0 %v3792, 32
    %v4435 = vpop.permute.xlu0 %4434
    %4436 = vrot.lane.b32.xlu0 %v3793, 32
    %v4437 = vpop.permute.xlu0 %4436
    %4438 = vrot.lane.b32.xlu0 %v3794, 32
    %v4439 = vpop.permute.xlu0 %4438
    %4440 = vrot.lane.b32.xlu0 %v3795, 32
    %v4441 = vpop.permute.xlu0 %4440
    %4442 = vrot.lane.b32.xlu0 %v3796, 32
    %v4443 = vpop.permute.xlu0 %4442
    %4444 = vrot.lane.b32.xlu0 %v3797, 32
    %v4445 = vpop.permute.xlu0 %4444
    %4446 = vrot.lane.b32.xlu0 %v3798, 32
    %v4447 = vpop.permute.xlu0 %4446
    %4448 = vrot.lane.b32.xlu0 %v3799, 32
    %v4449 = vpop.permute.xlu0 %4448
    %4450 = vrot.lane.b32.xlu0 %v3800, 32
    %v4451 = vpop.permute.xlu0 %4450
    %4452 = vrot.lane.b32.xlu0 %v3801, 32
    %v4453 = vpop.permute.xlu0 %4452
    %4454 = vrot.lane.b32.xlu0 %v3802, 32
    %v4455 = vpop.permute.xlu0 %4454
    %4456 = vrot.lane.b32.xlu0 %v3803, 32
    %v4457 = vpop.permute.xlu0 %4456
    %4458 = vrot.lane.b32.xlu0 %v3804, 32
    %v4459 = vpop.permute.xlu0 %4458
    %4460 = vrot.lane.b32.xlu0 %v3805, 32
    %v4461 = vpop.permute.xlu0 %4460
    %4462 = vrot.lane.b32.xlu0 %v3806, 32
    %v4463 = vpop.permute.xlu0 %4462
    %4464 = vrot.lane.b32.xlu0 %v3807, 32
    %v4465 = vpop.permute.xlu0 %4464
    %4466 = vrot.lane.b32.xlu0 %v3808, 32
    %v4467 = vpop.permute.xlu0 %4466
    %4468 = vrot.lane.b32.xlu0 %v3809, 32
    %v4469 = vpop.permute.xlu0 %4468
    %4470 = vrot.lane.b32.xlu0 %v3810, 32
    %v4471 = vpop.permute.xlu0 %4470
    %4472 = vrot.lane.b32.xlu0 %v3811, 32
    %v4473 = vpop.permute.xlu0 %4472
    %4474 = vrot.lane.b32.xlu0 %v3812, 32
    %v4475 = vpop.permute.xlu0 %4474
    %4476 = vrot.lane.b32.xlu0 %v3813, 32
    %v4477 = vpop.permute.xlu0 %4476
    %4478 = vrot.lane.b32.xlu0 %v3814, 32
    %v4479 = vpop.permute.xlu0 %4478
    %4480 = vrot.lane.b32.xlu0 %v3815, 32
    %v4481 = vpop.permute.xlu0 %4480
    %4482 = vrot.lane.b32.xlu0 %v3816, 32
    %v4483 = vpop.permute.xlu0 %4482
    %4484 = vrot.lane.b32.xlu0 %v3817, 32
    %v4485 = vpop.permute.xlu0 %4484
    %4486 = vrot.lane.b32.xlu0 %v3818, 32
    %v4487 = vpop.permute.xlu0 %4486
    %4488 = vrot.lane.b32.xlu0 %v3819, 32
    %v4489 = vpop.permute.xlu0 %4488
    %4490 = vrot.lane.b32.xlu0 %v3820, 32
    %v4491 = vpop.permute.xlu0 %4490
    %4492 = vrot.lane.b32.xlu0 %v3821, 32
    %v4493 = vpop.permute.xlu0 %4492
    %4494 = vrot.lane.b32.xlu0 %v3822, 32
    %v4495 = vpop.permute.xlu0 %4494
    %4528 = vrot.lane.b32.xlu0 %v3888, 64
    %v4529 = vpop.permute.xlu0 %4528
    %4530 = vrot.lane.b32.xlu0 %v3889, 64
    %v4531 = vpop.permute.xlu0 %4530
    %4532 = vrot.lane.b32.xlu0 %v3890, 64
    %v4533 = vpop.permute.xlu0 %4532
    %4534 = vrot.lane.b32.xlu0 %v3891, 64
    %v4535 = vpop.permute.xlu0 %4534
    %4536 = vrot.lane.b32.xlu0 %v3892, 64
    %v4537 = vpop.permute.xlu0 %4536
    %4538 = vrot.lane.b32.xlu0 %v3893, 64
    %v4539 = vpop.permute.xlu0 %4538
    %4540 = vrot.lane.b32.xlu0 %v3894, 64
    %v4541 = vpop.permute.xlu0 %4540
    %4542 = vrot.lane.b32.xlu0 %v3895, 64
    %v4543 = vpop.permute.xlu0 %4542
    %4544 = vrot.lane.b32.xlu0 %v3896, 64
    %v4545 = vpop.permute.xlu0 %4544
    %4546 = vrot.lane.b32.xlu0 %v3897, 64
    %v4547 = vpop.permute.xlu0 %4546
    %4548 = vrot.lane.b32.xlu0 %v3898, 64
    %v4549 = vpop.permute.xlu0 %4548
    %4550 = vrot.lane.b32.xlu0 %v3899, 64
    %v4551 = vpop.permute.xlu0 %4550
    %4552 = vrot.lane.b32.xlu0 %v3900, 64
    %v4553 = vpop.permute.xlu0 %4552
    %4554 = vrot.lane.b32.xlu0 %v3901, 64
    %v4555 = vpop.permute.xlu0 %4554
    %4556 = vrot.lane.b32.xlu0 %v3902, 64
    %v4557 = vpop.permute.xlu0 %4556
    %4558 = vrot.lane.b32.xlu0 %v3903, 64
    %v4559 = vpop.permute.xlu0 %4558
    %4560 = vrot.lane.b32.xlu0 %v3904, 64
    %v4561 = vpop.permute.xlu0 %4560
    %4562 = vrot.lane.b32.xlu0 %v3905, 64
    %v4563 = vpop.permute.xlu0 %4562
    %4564 = vrot.lane.b32.xlu0 %v3906, 64
    %v4565 = vpop.permute.xlu0 %4564
    %4566 = vrot.lane.b32.xlu0 %v3907, 64
    %v4567 = vpop.permute.xlu0 %4566
    %4568 = vrot.lane.b32.xlu0 %v3908, 64
    %v4569 = vpop.permute.xlu0 %4568
    %4570 = vrot.lane.b32.xlu0 %v3909, 64
    %v4571 = vpop.permute.xlu0 %4570
    %4572 = vrot.lane.b32.xlu0 %v3910, 64
    %v4573 = vpop.permute.xlu0 %4572
    %4574 = vrot.lane.b32.xlu0 %v3911, 64
    %v4575 = vpop.permute.xlu0 %4574
    %4576 = vrot.lane.b32.xlu0 %v3912, 64
    %v4577 = vpop.permute.xlu0 %4576
    %4578 = vrot.lane.b32.xlu0 %v3913, 64
    %v4579 = vpop.permute.xlu0 %4578
    %4580 = vrot.lane.b32.xlu0 %v3914, 64
    %v4581 = vpop.permute.xlu0 %4580
    %4582 = vrot.lane.b32.xlu0 %v3915, 64
    %v4583 = vpop.permute.xlu0 %4582
    %4584 = vrot.lane.b32.xlu0 %v3916, 64
    %v4585 = vpop.permute.xlu0 %4584
    %4586 = vrot.lane.b32.xlu0 %v3917, 64
    %v4587 = vpop.permute.xlu0 %4586
    %4588 = vrot.lane.b32.xlu0 %v3918, 64
    %v4589 = vpop.permute.xlu0 %4588
    %4590 = vrot.lane.b32.xlu0 %v3919, 64
    %v4591 = vpop.permute.xlu0 %4590
    %4624 = vrot.lane.b32.xlu0 %v3984, 96
    %v4625 = vpop.permute.xlu0 %4624
    %4626 = vrot.lane.b32.xlu0 %v3985, 96
    %v4627 = vpop.permute.xlu0 %4626
    %4628 = vrot.lane.b32.xlu0 %v3986, 96
    %v4629 = vpop.permute.xlu0 %4628
    %4630 = vrot.lane.b32.xlu0 %v3987, 96
    %v4631 = vpop.permute.xlu0 %4630
    %4632 = vrot.lane.b32.xlu0 %v3988, 96
    %v4633 = vpop.permute.xlu0 %4632
    %4634 = vrot.lane.b32.xlu0 %v3989, 96
    %v4635 = vpop.permute.xlu0 %4634
    %4636 = vrot.lane.b32.xlu0 %v3990, 96
    %v4637 = vpop.permute.xlu0 %4636
    %4638 = vrot.lane.b32.xlu0 %v3991, 96
    %v4639 = vpop.permute.xlu0 %4638
    %4640 = vrot.lane.b32.xlu0 %v3992, 96
    %v4641 = vpop.permute.xlu0 %4640
    %4642 = vrot.lane.b32.xlu0 %v3993, 96
    %v4643 = vpop.permute.xlu0 %4642
    %4644 = vrot.lane.b32.xlu0 %v3994, 96
    %v4645 = vpop.permute.xlu0 %4644
    %4646 = vrot.lane.b32.xlu0 %v3995, 96
    %v4647 = vpop.permute.xlu0 %4646
    %4648 = vrot.lane.b32.xlu0 %v3996, 96
    %v4649 = vpop.permute.xlu0 %4648
    %4650 = vrot.lane.b32.xlu0 %v3997, 96
    %v4651 = vpop.permute.xlu0 %4650
    %4652 = vrot.lane.b32.xlu0 %v3998, 96
    %v4653 = vpop.permute.xlu0 %4652
    %4654 = vrot.lane.b32.xlu0 %v3999, 96
    %v4655 = vpop.permute.xlu0 %4654
    %4656 = vrot.lane.b32.xlu0 %v4000, 96
    %v4657 = vpop.permute.xlu0 %4656
    %4658 = vrot.lane.b32.xlu0 %v4001, 96
    %v4659 = vpop.permute.xlu0 %4658
    %4660 = vrot.lane.b32.xlu0 %v4002, 96
    %v4661 = vpop.permute.xlu0 %4660
    %4662 = vrot.lane.b32.xlu0 %v4003, 96
    %v4663 = vpop.permute.xlu0 %4662
    %4664 = vrot.lane.b32.xlu0 %v4004, 96
    %v4665 = vpop.permute.xlu0 %4664
    %4666 = vrot.lane.b32.xlu0 %v4005, 96
    %v4667 = vpop.permute.xlu0 %4666
    %4668 = vrot.lane.b32.xlu0 %v4006, 96
    %v4669 = vpop.permute.xlu0 %4668
    %4670 = vrot.lane.b32.xlu0 %v4007, 96
    %v4671 = vpop.permute.xlu0 %4670
    %4672 = vrot.lane.b32.xlu0 %v4008, 96
    %v4673 = vpop.permute.xlu0 %4672
    %4674 = vrot.lane.b32.xlu0 %v4009, 96
    %v4675 = vpop.permute.xlu0 %4674
    %4676 = vrot.lane.b32.xlu0 %v4010, 96
    %v4677 = vpop.permute.xlu0 %4676
    %4678 = vrot.lane.b32.xlu0 %v4011, 96
    %v4679 = vpop.permute.xlu0 %4678
    %4680 = vrot.lane.b32.xlu0 %v4012, 96
    %v4681 = vpop.permute.xlu0 %4680
    %4682 = vrot.lane.b32.xlu0 %v4013, 96
    %v4683 = vpop.permute.xlu0 %4682
    %4684 = vrot.lane.b32.xlu0 %v4014, 96
    %v4685 = vpop.permute.xlu0 %4684
    %4686 = vrot.lane.b32.xlu0 %v4015, 96
    %v4687 = vpop.permute.xlu0 %4686
    %v4690 = vsel %vm36, %v3311, %v4145
    %v4693 = vsel %vm36, %v3312, %v4147
    %v4696 = vsel %vm36, %v3313, %v4149
    %v4699 = vsel %vm36, %v3314, %v4151
    %v4702 = vsel %vm36, %v3315, %v4153
    %v4705 = vsel %vm36, %v3316, %v4155
    %v4708 = vsel %vm36, %v3317, %v4157
    %v4711 = vsel %vm36, %v3318, %v4159
    %v4714 = vsel %vm36, %v3319, %v4161
    %v4717 = vsel %vm36, %v3320, %v4163
    %v4720 = vsel %vm36, %v3321, %v4165
    %v4723 = vsel %vm36, %v3322, %v4167
    %v4726 = vsel %vm36, %v3323, %v4169
    %v4729 = vsel %vm36, %v3324, %v4171
    %v4732 = vsel %vm36, %v3325, %v4173
    %v4735 = vsel %vm36, %v3326, %v4175
    %v4738 = vsel %vm36, %v3327, %v4177
    %v4741 = vsel %vm36, %v3328, %v4179
    %v4744 = vsel %vm36, %v3329, %v4181
    %v4747 = vsel %vm36, %v3330, %v4183
    %v4750 = vsel %vm36, %v3331, %v4185
    %v4753 = vsel %vm36, %v3332, %v4187
    %v4756 = vsel %vm36, %v3333, %v4189
    %v4759 = vsel %vm36, %v3334, %v4191
    %v4762 = vsel %vm36, %v3335, %v4193
    %v4765 = vsel %vm36, %v3336, %v4195
    %v4768 = vsel %vm36, %v3337, %v4197
    %v4771 = vsel %vm36, %v3338, %v4199
    %v4774 = vsel %vm36, %v3339, %v4201
    %v4777 = vsel %vm36, %v3340, %v4203
    %v4780 = vsel %vm36, %v3341, %v4205
    %v4783 = vsel %vm36, %v3342, %v4207
    %v4785 = vsel %vm1875, %v4690, %v4241
    %v4787 = vsel %vm1875, %v4693, %v4243
    %v4789 = vsel %vm1875, %v4696, %v4245
    %v4791 = vsel %vm1875, %v4699, %v4247
    %v4793 = vsel %vm1875, %v4702, %v4249
    %v4795 = vsel %vm1875, %v4705, %v4251
    %v4797 = vsel %vm1875, %v4708, %v4253
    %v4799 = vsel %vm1875, %v4711, %v4255
    %v4801 = vsel %vm1875, %v4714, %v4257
    %v4803 = vsel %vm1875, %v4717, %v4259
    %v4805 = vsel %vm1875, %v4720, %v4261
    %v4807 = vsel %vm1875, %v4723, %v4263
    %v4809 = vsel %vm1875, %v4726, %v4265
    %v4811 = vsel %vm1875, %v4729, %v4267
    %v4813 = vsel %vm1875, %v4732, %v4269
    %v4815 = vsel %vm1875, %v4735, %v4271
    %v4817 = vsel %vm1875, %v4738, %v4273
    %v4819 = vsel %vm1875, %v4741, %v4275
    %v4821 = vsel %vm1875, %v4744, %v4277
    %v4823 = vsel %vm1875, %v4747, %v4279
    %v4825 = vsel %vm1875, %v4750, %v4281
    %v4827 = vsel %vm1875, %v4753, %v4283
    %v4829 = vsel %vm1875, %v4756, %v4285
    %v4831 = vsel %vm1875, %v4759, %v4287
    %v4833 = vsel %vm1875, %v4762, %v4289
    %v4835 = vsel %vm1875, %v4765, %v4291
    %v4837 = vsel %vm1875, %v4768, %v4293
    %v4839 = vsel %vm1875, %v4771, %v4295
    %v4841 = vsel %vm1875, %v4774, %v4297
    %v4843 = vsel %vm1875, %v4777, %v4299
    %v4845 = vsel %vm1875, %v4780, %v4301
    %v4847 = vsel %vm1875, %v4783, %v4303
    %v4849 = vsel %vm1940, %v4785, %v4337
    %v4852 = vsel %vm1940, %v4787, %v4339
    %v4855 = vsel %vm1940, %v4789, %v4341
    %v4858 = vsel %vm1940, %v4791, %v4343
    %v4861 = vsel %vm1940, %v4793, %v4345
    %v4864 = vsel %vm1940, %v4795, %v4347
    %v4867 = vsel %vm1940, %v4797, %v4349
    %v4870 = vsel %vm1940, %v4799, %v4351
    %v4873 = vsel %vm1940, %v4801, %v4353
    %v4876 = vsel %vm1940, %v4803, %v4355
    %v4879 = vsel %vm1940, %v4805, %v4357
    %v4882 = vsel %vm1940, %v4807, %v4359
    %v4885 = vsel %vm1940, %v4809, %v4361
    %v4888 = vsel %vm1940, %v4811, %v4363
    %v4891 = vsel %vm1940, %v4813, %v4365
    %v4894 = vsel %vm1940, %v4815, %v4367
    %v4897 = vsel %vm1940, %v4817, %v4369
    %v4900 = vsel %vm1940, %v4819, %v4371
    %v4903 = vsel %vm1940, %v4821, %v4373
    %v4906 = vsel %vm1940, %v4823, %v4375
    %v4909 = vsel %vm1940, %v4825, %v4377
    %v4912 = vsel %vm1940, %v4827, %v4379
    %v4915 = vsel %vm1940, %v4829, %v4381
    %v4918 = vsel %vm1940, %v4831, %v4383
    %v4921 = vsel %vm1940, %v4833, %v4385
    %v4924 = vsel %vm1940, %v4835, %v4387
    %v4927 = vsel %vm1940, %v4837, %v4389
    %v4930 = vsel %vm1940, %v4839, %v4391
    %v4933 = vsel %vm1940, %v4841, %v4393
    %v4936 = vsel %vm1940, %v4843, %v4395
    %v4939 = vsel %vm1940, %v4845, %v4397
    %v4942 = vsel %vm1940, %v4847, %v4399
    %v4946 = vsel %vm36, %v3695, %v4433
    %v4949 = vsel %vm36, %v3696, %v4435
    %v4952 = vsel %vm36, %v3697, %v4437
    %v4955 = vsel %vm36, %v3698, %v4439
    %v4958 = vsel %vm36, %v3699, %v4441
    %v4961 = vsel %vm36, %v3700, %v4443
    %v4964 = vsel %vm36, %v3701, %v4445
    %v4967 = vsel %vm36, %v3702, %v4447
    %v4970 = vsel %vm36, %v3703, %v4449
    %v4973 = vsel %vm36, %v3704, %v4451
    %v4976 = vsel %vm36, %v3705, %v4453
    %v4979 = vsel %vm36, %v3706, %v4455
    %v4982 = vsel %vm36, %v3707, %v4457
    %v4985 = vsel %vm36, %v3708, %v4459
    %v4988 = vsel %vm36, %v3709, %v4461
    %v4991 = vsel %vm36, %v3710, %v4463
    %v4994 = vsel %vm36, %v3711, %v4465
    %v4997 = vsel %vm36, %v3712, %v4467
    %v5000 = vsel %vm36, %v3713, %v4469
    %v5003 = vsel %vm36, %v3714, %v4471
    %v5006 = vsel %vm36, %v3715, %v4473
    %v5009 = vsel %vm36, %v3716, %v4475
    %v5012 = vsel %vm36, %v3717, %v4477
    %v5015 = vsel %vm36, %v3718, %v4479
    %v5018 = vsel %vm36, %v3719, %v4481
    %v5021 = vsel %vm36, %v3720, %v4483
    %v5024 = vsel %vm36, %v3721, %v4485
    %v5027 = vsel %vm36, %v3722, %v4487
    %v5030 = vsel %vm36, %v3723, %v4489
    %v5033 = vsel %vm36, %v3724, %v4491
    %v5036 = vsel %vm36, %v3725, %v4493
    %v5039 = vsel %vm36, %v3726, %v4495
    %v5041 = vsel %vm1875, %v4946, %v4529
    %v5043 = vsel %vm1875, %v4949, %v4531
    %v5045 = vsel %vm1875, %v4952, %v4533
    %v5047 = vsel %vm1875, %v4955, %v4535
    %v5049 = vsel %vm1875, %v4958, %v4537
    %v5051 = vsel %vm1875, %v4961, %v4539
    %v5053 = vsel %vm1875, %v4964, %v4541
    %v5055 = vsel %vm1875, %v4967, %v4543
    %v5057 = vsel %vm1875, %v4970, %v4545
    %v5059 = vsel %vm1875, %v4973, %v4547
    %v5061 = vsel %vm1875, %v4976, %v4549
    %v5063 = vsel %vm1875, %v4979, %v4551
    %v5065 = vsel %vm1875, %v4982, %v4553
    %v5067 = vsel %vm1875, %v4985, %v4555
    %v5069 = vsel %vm1875, %v4988, %v4557
    %v5071 = vsel %vm1875, %v4991, %v4559
    %v5073 = vsel %vm1875, %v4994, %v4561
    %v5075 = vsel %vm1875, %v4997, %v4563
    %v5077 = vsel %vm1875, %v5000, %v4565
    %v5079 = vsel %vm1875, %v5003, %v4567
    %v5081 = vsel %vm1875, %v5006, %v4569
    %v5083 = vsel %vm1875, %v5009, %v4571
    %v5085 = vsel %vm1875, %v5012, %v4573
    %v5087 = vsel %vm1875, %v5015, %v4575
    %v5089 = vsel %vm1875, %v5018, %v4577
    %v5091 = vsel %vm1875, %v5021, %v4579
    %v5093 = vsel %vm1875, %v5024, %v4581
    %v5095 = vsel %vm1875, %v5027, %v4583
    %v5097 = vsel %vm1875, %v5030, %v4585
    %v5099 = vsel %vm1875, %v5033, %v4587
    %v5101 = vsel %vm1875, %v5036, %v4589
    %v5103 = vsel %vm1875, %v5039, %v4591
    %v5105 = vsel %vm1940, %v5041, %v4625
    %v5108 = vsel %vm1940, %v5043, %v4627
    %v5111 = vsel %vm1940, %v5045, %v4629
    %v5114 = vsel %vm1940, %v5047, %v4631
    %v5117 = vsel %vm1940, %v5049, %v4633
    %v5120 = vsel %vm1940, %v5051, %v4635
    %v5123 = vsel %vm1940, %v5053, %v4637
    %v5126 = vsel %vm1940, %v5055, %v4639
    %v5129 = vsel %vm1940, %v5057, %v4641
    %v5132 = vsel %vm1940, %v5059, %v4643
    %v5135 = vsel %vm1940, %v5061, %v4645
    %v5138 = vsel %vm1940, %v5063, %v4647
    %v5141 = vsel %vm1940, %v5065, %v4649
    %v5144 = vsel %vm1940, %v5067, %v4651
    %v5147 = vsel %vm1940, %v5069, %v4653
    %v5150 = vsel %vm1940, %v5071, %v4655
    %v5153 = vsel %vm1940, %v5073, %v4657
    %v5156 = vsel %vm1940, %v5075, %v4659
    %v5159 = vsel %vm1940, %v5077, %v4661
    %v5162 = vsel %vm1940, %v5079, %v4663
    %v5165 = vsel %vm1940, %v5081, %v4665
    %v5168 = vsel %vm1940, %v5083, %v4667
    %v5171 = vsel %vm1940, %v5085, %v4669
    %v5174 = vsel %vm1940, %v5087, %v4671
    %v5177 = vsel %vm1940, %v5089, %v4673
    %v5180 = vsel %vm1940, %v5091, %v4675
    %v5183 = vsel %vm1940, %v5093, %v4677
    %v5186 = vsel %vm1940, %v5095, %v4679
    %v5189 = vsel %vm1940, %v5097, %v4681
    %v5192 = vsel %vm1940, %v5099, %v4683
    %v5195 = vsel %vm1940, %v5101, %v4685
    %v5198 = vsel %vm1940, %v5103, %v4687
    %v5200 = vld [vmem:[%s3] sm:$0xf]
    %v5201 = vld [vmem:[%s3 + $0x4] sm:$0xf]
    %v5202 = vld [vmem:[%s3 + $0x8] sm:$0xf]
    %v5203 = vld [vmem:[%s3 + $0xc] sm:$0xf]
    %v5204 = vld [vmem:[%s3 + $0x10] sm:$0xf]
    %v5205 = vld [vmem:[%s3 + $0x14] sm:$0xf]
    %v5206 = vld [vmem:[%s3 + $0x18] sm:$0xf]
    %v5207 = vld [vmem:[%s3 + $0x1c] sm:$0xf]
    %v5208 = vld [vmem:[%s3 + $0x20] sm:$0xf]
    %v5209 = vld [vmem:[%s3 + $0x24] sm:$0xf]
    %v5210 = vld [vmem:[%s3 + $0x28] sm:$0xf]
    %v5211 = vld [vmem:[%s3 + $0x2c] sm:$0xf]
    %v5212 = vld [vmem:[%s3 + $0x30] sm:$0xf]
    %v5213 = vld [vmem:[%s3 + $0x34] sm:$0xf]
    %v5214 = vld [vmem:[%s3 + $0x38] sm:$0xf]
    %v5215 = vld [vmem:[%s3 + $0x3c] sm:$0xf]
    %v5216 = vld [vmem:[%s3 + $0x40] sm:$0xf]
    %v5217 = vld [vmem:[%s3 + $0x44] sm:$0xf]
    %v5218 = vld [vmem:[%s3 + $0x48] sm:$0xf]
    %v5219 = vld [vmem:[%s3 + $0x4c] sm:$0xf]
    %v5220 = vld [vmem:[%s3 + $0x50] sm:$0xf]
    %v5221 = vld [vmem:[%s3 + $0x54] sm:$0xf]
    %v5222 = vld [vmem:[%s3 + $0x58] sm:$0xf]
    %v5223 = vld [vmem:[%s3 + $0x5c] sm:$0xf]
    %v5224 = vld [vmem:[%s3 + $0x60] sm:$0xf]
    %v5225 = vld [vmem:[%s3 + $0x64] sm:$0xf]
    %v5226 = vld [vmem:[%s3 + $0x68] sm:$0xf]
    %v5227 = vld [vmem:[%s3 + $0x6c] sm:$0xf]
    %v5228 = vld [vmem:[%s3 + $0x70] sm:$0xf]
    %v5229 = vld [vmem:[%s3 + $0x74] sm:$0xf]
    %v5230 = vld [vmem:[%s3 + $0x78] sm:$0xf]
    %v5231 = vld [vmem:[%s3 + $0x7c] sm:$0xf]
    %v5232 = vld [vmem:[%s3 + $0x80] sm:$0xf]
    %v5233 = vld [vmem:[%s3 + $0x84] sm:$0xf]
    %v5234 = vld [vmem:[%s3 + $0x88] sm:$0xf]
    %v5235 = vld [vmem:[%s3 + $0x8c] sm:$0xf]
    %v5236 = vld [vmem:[%s4] sm:$0x1]
    %v5238 = vlaneseq
    %v5239 = vshrl.u32 %v5238, 7
    %v5240 = vsub.s32 0, %v5239
    %v5241 = vrot.slane %v5236, %v5240
    %v5279 = vunpack.c.l.b16 %v5200
    %v5280 = vunpack.c.l.b16 %v5201
    %v5281 = vunpack.c.l.b16 %v5202
    %v5282 = vunpack.c.l.b16 %v5203
    %v5283 = vunpack.c.l.b16 %v5204
    %v5284 = vunpack.c.l.b16 %v5205
    %v5285 = vunpack.c.l.b16 %v5206
    %v5286 = vunpack.c.l.b16 %v5207
    %v5287 = vunpack.c.l.b16 %v5208
    %v5288 = vunpack.c.l.b16 %v5209
    %v5289 = vunpack.c.l.b16 %v5210
    %v5290 = vunpack.c.l.b16 %v5211
    %v5291 = vunpack.c.l.b16 %v5212
    %v5292 = vunpack.c.l.b16 %v5213
    %v5293 = vunpack.c.l.b16 %v5214
    %v5294 = vunpack.c.l.b16 %v5215
    %v5295 = vunpack.c.l.b16 %v5216
    %v5296 = vunpack.c.l.b16 %v5217
    %v5297 = vunpack.c.l.b16 %v5218
    %v5298 = vunpack.c.l.b16 %v5219
    %v5299 = vunpack.c.l.b16 %v5220
    %v5300 = vunpack.c.l.b16 %v5221
    %v5301 = vunpack.c.l.b16 %v5222
    %v5302 = vunpack.c.l.b16 %v5223
    %v5303 = vunpack.c.l.b16 %v5224
    %v5304 = vunpack.c.l.b16 %v5225
    %v5305 = vunpack.c.l.b16 %v5226
    %v5306 = vunpack.c.l.b16 %v5227
    %v5307 = vunpack.c.l.b16 %v5228
    %v5308 = vunpack.c.l.b16 %v5229
    %v5309 = vunpack.c.l.b16 %v5230
    %v5310 = vunpack.c.l.b16 %v5231
    %v5311 = vunpack.c.l.b16 %v5232
    %v5312 = vunpack.c.l.b16 %v5233
    %v5313 = vunpack.c.l.b16 %v5234
    %v5314 = vunpack.c.l.b16 %v5235
    %v5315 = vpack.c.b16 %v5280, %v5279
    %v5316 = vpack.c.b16 %v5282, %v5281
    %v5317 = vpack.c.b16 %v5284, %v5283
    %v5318 = vpack.c.b16 %v5286, %v5285
    %v5319 = vpack.c.b16 %v5288, %v5287
    %v5320 = vpack.c.b16 %v5290, %v5289
    %v5321 = vpack.c.b16 %v5292, %v5291
    %v5322 = vpack.c.b16 %v5294, %v5293
    %v5323 = vpack.c.b16 %v5296, %v5295
    %v5324 = vpack.c.b16 %v5298, %v5297
    %v5325 = vpack.c.b16 %v5300, %v5299
    %v5326 = vpack.c.b16 %v5302, %v5301
    %v5327 = vpack.c.b16 %v5304, %v5303
    %v5328 = vpack.c.b16 %v5306, %v5305
    %v5329 = vpack.c.b16 %v5308, %v5307
    %v5330 = vpack.c.b16 %v5310, %v5309
    %v5331 = vpack.c.b16 %v5312, %v5311
    %v5332 = vpack.c.b16 %v5314, %v5313
    %v5352 = vsel %vm36, %v4080, 0
    %v5355 = vsel %vm36, %v4081, 0
    %v5358 = vsel %vm36, %v4082, 0
    %v5361 = vsel %vm36, %v4083, 0
    %v5364 = vsel %vm36, %v4084, 0
    %v5367 = vsel %vm36, %v4085, 0
    %v5370 = vsel %vm36, %v4086, 0
    %v5373 = vsel %vm36, %v4087, 0
    %v5376 = vsel %vm36, %v4088, 0
    %v5379 = vsel %vm36, %v4089, 0
    %v5382 = vsel %vm36, %v4090, 0
    %v5385 = vsel %vm36, %v4091, 0
    %v5388 = vsel %vm36, %v4092, 0
    %v5391 = vsel %vm36, %v4093, 0
    %v5394 = vsel %vm36, %v4094, 0
    %v5397 = vsel %vm36, %v4095, 0
    %v5400 = vsel %vm36, %v4096, 0
    %v5403 = vsel %vm36, %v4097, 0
    %v5406 = vsel %vm36, %v4098, 0
    %v5409 = vsel %vm36, %v4099, 0
    %v5412 = vsel %vm36, %v4100, 0
    %v5415 = vsel %vm36, %v4101, 0
    %v5418 = vsel %vm36, %v4102, 0
    %v5421 = vsel %vm36, %v4103, 0
    %v5424 = vsel %vm36, %v4104, 0
    %v5427 = vsel %vm36, %v4105, 0
    %v5430 = vsel %vm36, %v4106, 0
    %v5433 = vsel %vm36, %v4107, 0
    %v5436 = vsel %vm36, %v4108, 0
    %v5439 = vsel %vm36, %v4109, 0
    %v5442 = vsel %vm36, %v4110, 0
    %v5445 = vsel %vm36, %v4111, 0
    %5447 = vmatprep.subr.bf16.mxu0 0
    %5448 = vmatpush1.bf16.msra.mxu0 %v5315
    %5449 = vmatprep.subr.bf16.mxu0 0
    %5450 = vmatpush1.bf16.msra.mxu0 %v5316
    %5451 = vmatprep.subr.bf16.mxu0 0
    %5452 = vmatpush1.bf16.msra.mxu0 %v5317
    %5453 = vmatprep.subr.bf16.mxu0 0
    %5454 = vmatpush1.bf16.msra.mxu0 %v5318
    %5455 = vmatprep.subr.bf16.mxu0 0
    %5456 = vmatpush1.bf16.msra.mxu0 %v5319
    %5457 = vmatprep.subr.bf16.mxu0 0
    %5458 = vmatpush1.bf16.msra.mxu0 %v5320
    %5459 = vmatprep.subr.bf16.mxu0 0
    %5460 = vmatpush1.bf16.msra.mxu0 %v5321
    %5461 = vmatprep.subr.bf16.mxu0 0
    %5462 = vmatpush1.bf16.msra.mxu0 %v5322
    %5463 = vmatprep.subr.bf16.mxu0 0
    %5464 = vmatpush1.bf16.msra.mxu0 %v5323
    %5465 = vmatprep.subr.bf16.mxu0 0
    %5466 = vmatpush1.bf16.msra.mxu0 %v5324
    %5467 = vmatprep.subr.bf16.mxu0 0
    %5468 = vmatpush1.bf16.msra.mxu0 %v5325
    %5469 = vmatprep.subr.bf16.mxu0 0
    %5470 = vmatpush1.bf16.msra.mxu0 %v5326
    %5471 = vmatprep.subr.bf16.mxu0 0
    %5472 = vmatpush1.bf16.msra.mxu0 %v5327
    %5473 = vmatprep.subr.bf16.mxu0 0
    %5474 = vmatpush1.bf16.msra.mxu0 %v5328
    %5475 = vmatprep.subr.bf16.mxu0 0
    %5476 = vmatpush1.bf16.msra.mxu0 %v5329
    %5477 = vmatprep.subr.bf16.mxu0 0
    %5478 = vmatpush1.bf16.msra.mxu0 %v5330
    %5479 = vmatprep.mubr.bf16.mxu0 %v5105
    %5480 = vmatmul.mubr.bf16.gmra.mrb[0].mxu0 %v4849
    %v5481 = vpop.f32.mrb[0].mxu0
    %v5482 = vadd.f32 %v5241, %v5481
    %v5483 = vpop.f32.mrb[0].mxu0
    %v5484 = vpop.f32.mrb[0].mxu0
    %v5485 = vadd.f32 %v5241, %v5484
    %v5486 = vpop.f32.mrb[0].mxu0
    %5487 = vmatprep.mubr.bf16.mxu0 %v5108
    %5488 = vmatmul.mubr.bf16.gmra.mrb[0].mxu0 %v4852
    %v5489 = vpop.f32.mrb[0].mxu0
    %v5490 = vadd.f32 %v5241, %v5489
    %v5491 = vpop.f32.mrb[0].mxu0
    %v5492 = vpop.f32.mrb[0].mxu0
    %v5493 = vadd.f32 %v5241, %v5492
    %v5494 = vpop.f32.mrb[0].mxu0
    %5495 = vmatprep.mubr.bf16.mxu0 %v5111
    %5496 = vmatmul.mubr.bf16.gmra.mrb[0].mxu0 %v4855
    %v5497 = vpop.f32.mrb[0].mxu0
    %v5498 = vadd.f32 %v5241, %v5497
    %v5499 = vpop.f32.mrb[0].mxu0
    %v5500 = vpop.f32.mrb[0].mxu0
    %v5501 = vadd.f32 %v5241, %v5500
    %v5502 = vpop.f32.mrb[0].mxu0
    %5503 = vmatprep.mubr.bf16.mxu0 %v5114
    %5504 = vmatmul.mubr.bf16.gmra.mrb[0].mxu0 %v4858
    %v5505 = vpop.f32.mrb[0].mxu0
    %v5506 = vadd.f32 %v5241, %v5505
    %v5507 = vpop.f32.mrb[0].mxu0
    %v5508 = vpop.f32.mrb[0].mxu0
    %v5509 = vadd.f32 %v5241, %v5508
    %v5510 = vpop.f32.mrb[0].mxu0
    %5511 = vmatprep.mubr.bf16.mxu0 %v5117
    %5512 = vmatmul.mubr.bf16.gmra.mrb[0].mxu0 %v4861
    %v5513 = vpop.f32.mrb[0].mxu0
    %v5514 = vadd.f32 %v5241, %v5513
    %v5515 = vpop.f32.mrb[0].mxu0
    %v5516 = vpop.f32.mrb[0].mxu0
    %v5517 = vadd.f32 %v5241, %v5516
    %v5518 = vpop.f32.mrb[0].mxu0
    %5519 = vmatprep.mubr.bf16.mxu0 %v5120
    %5520 = vmatmul.mubr.bf16.gmra.mrb[0].mxu0 %v4864
    %v5521 = vpop.f32.mrb[0].mxu0
    %v5522 = vadd.f32 %v5241, %v5521
    %v5523 = vpop.f32.mrb[0].mxu0
    %v5524 = vpop.f32.mrb[0].mxu0
    %v5525 = vadd.f32 %v5241, %v5524
    %v5526 = vpop.f32.mrb[0].mxu0
    %5527 = vmatprep.mubr.bf16.mxu0 %v5123
    %5528 = vmatmul.mubr.bf16.gmra.mrb[0].mxu0 %v4867
    %v5529 = vpop.f32.mrb[0].mxu0
    %v5530 = vadd.f32 %v5241, %v5529
    %v5531 = vpop.f32.mrb[0].mxu0
    %v5532 = vpop.f32.mrb[0].mxu0
    %v5533 = vadd.f32 %v5241, %v5532
    %v5534 = vpop.f32.mrb[0].mxu0
    %5535 = vmatprep.mubr.bf16.mxu0 %v5126
    %5536 = vmatmul.mubr.bf16.gmra.mrb[0].mxu0 %v4870
    %v5537 = vpop.f32.mrb[0].mxu0
    %v5538 = vadd.f32 %v5241, %v5537
    %v5539 = vpop.f32.mrb[0].mxu0
    %v5540 = vpop.f32.mrb[0].mxu0
    %v5541 = vadd.f32 %v5241, %v5540
    %v5542 = vpop.f32.mrb[0].mxu0
    %5543 = vmatprep.mubr.bf16.mxu0 %v5129
    %5544 = vmatmul.mubr.bf16.gmra.mrb[0].mxu0 %v4873
    %v5545 = vpop.f32.mrb[0].mxu0
    %v5546 = vadd.f32 %v5241, %v5545
    %v5547 = vpop.f32.mrb[0].mxu0
    %v5548 = vpop.f32.mrb[0].mxu0
    %v5549 = vadd.f32 %v5241, %v5548
    %v5550 = vpop.f32.mrb[0].mxu0
    %5551 = vmatprep.mubr.bf16.mxu0 %v5132
    %5552 = vmatmul.mubr.bf16.gmra.mrb[0].mxu0 %v4876
    %v5553 = vpop.f32.mrb[0].mxu0
    %v5554 = vadd.f32 %v5241, %v5553
    %v5555 = vpop.f32.mrb[0].mxu0
    %v5556 = vpop.f32.mrb[0].mxu0
    %v5557 = vadd.f32 %v5241, %v5556
    %v5558 = vpop.f32.mrb[0].mxu0
    %5559 = vmatprep.mubr.bf16.mxu0 %v5135
    %5560 = vmatmul.mubr.bf16.gmra.mrb[0].mxu0 %v4879
    %v5561 = vpop.f32.mrb[0].mxu0
    %v5562 = vadd.f32 %v5241, %v5561
    %v5563 = vpop.f32.mrb[0].mxu0
    %v5564 = vpop.f32.mrb[0].mxu0
    %v5565 = vadd.f32 %v5241, %v5564
    %v5566 = vpop.f32.mrb[0].mxu0
    %5567 = vmatprep.mubr.bf16.mxu0 %v5138
    %5568 = vmatmul.mubr.bf16.gmra.mrb[0].mxu0 %v4882
    %v5569 = vpop.f32.mrb[0].mxu0
    %v5570 = vadd.f32 %v5241, %v5569
    %v5571 = vpop.f32.mrb[0].mxu0
    %v5572 = vpop.f32.mrb[0].mxu0
    %v5573 = vadd.f32 %v5241, %v5572
    %v5574 = vpop.f32.mrb[0].mxu0
    %5575 = vmatprep.mubr.bf16.mxu0 %v5141
    %5576 = vmatmul.mubr.bf16.gmra.mrb[0].mxu0 %v4885
    %v5577 = vpop.f32.mrb[0].mxu0
    %v5578 = vadd.f32 %v5241, %v5577
    %v5579 = vpop.f32.mrb[0].mxu0
    %v5580 = vpop.f32.mrb[0].mxu0
    %v5581 = vadd.f32 %v5241, %v5580
    %v5582 = vpop.f32.mrb[0].mxu0
    %5583 = vmatprep.mubr.bf16.mxu0 %v5144
    %5584 = vmatmul.mubr.bf16.gmra.mrb[0].mxu0 %v4888
    %v5585 = vpop.f32.mrb[0].mxu0
    %v5586 = vadd.f32 %v5241, %v5585
    %v5587 = vpop.f32.mrb[0].mxu0
    %v5588 = vpop.f32.mrb[0].mxu0
    %v5589 = vadd.f32 %v5241, %v5588
    %v5590 = vpop.f32.mrb[0].mxu0
    %5591 = vmatprep.mubr.bf16.mxu0 %v5147
    %5592 = vmatmul.mubr.bf16.gmra.mrb[0].mxu0 %v4891
    %v5593 = vpop.f32.mrb[0].mxu0
    %v5594 = vadd.f32 %v5241, %v5593
    %v5595 = vpop.f32.mrb[0].mxu0
    %v5596 = vpop.f32.mrb[0].mxu0
    %v5597 = vadd.f32 %v5241, %v5596
    %v5598 = vpop.f32.mrb[0].mxu0
    %5599 = vmatprep.mubr.bf16.mxu0 %v5150
    %5600 = vmatmul.mubr.bf16.gmra.mrb[0].mxu0 %v4894
    %v5601 = vpop.f32.mrb[0].mxu0
    %v5602 = vadd.f32 %v5241, %v5601
    %v5603 = vpop.f32.mrb[0].mxu0
    %v5604 = vpop.f32.mrb[0].mxu0
    %v5605 = vadd.f32 %v5241, %v5604
    %v5606 = vpop.f32.mrb[0].mxu0
    %5607 = vmatprep.mubr.bf16.mxu0 %v5153
    %5608 = vmatmul.mubr.bf16.gmra.mrb[0].mxu0 %v4897
    %v5609 = vpop.f32.mrb[0].mxu0
    %v5610 = vadd.f32 %v5241, %v5609
    %v5611 = vpop.f32.mrb[0].mxu0
    %v5612 = vpop.f32.mrb[0].mxu0
    %v5613 = vadd.f32 %v5241, %v5612
    %v5614 = vpop.f32.mrb[0].mxu0
    %5615 = vmatprep.mubr.bf16.mxu0 %v5156
    %5616 = vmatmul.mubr.bf16.gmra.mrb[0].mxu0 %v4900
    %v5617 = vpop.f32.mrb[0].mxu0
    %v5618 = vadd.f32 %v5241, %v5617
    %v5619 = vpop.f32.mrb[0].mxu0
    %v5620 = vpop.f32.mrb[0].mxu0
    %v5621 = vadd.f32 %v5241, %v5620
    %v5622 = vpop.f32.mrb[0].mxu0
    %5623 = vmatprep.mubr.bf16.mxu0 %v5159
    %5624 = vmatmul.mubr.bf16.gmra.mrb[0].mxu0 %v4903
    %v5625 = vpop.f32.mrb[0].mxu0
    %v5626 = vadd.f32 %v5241, %v5625
    %v5627 = vpop.f32.mrb[0].mxu0
    %v5628 = vpop.f32.mrb[0].mxu0
    %v5629 = vadd.f32 %v5241, %v5628
    %v5630 = vpop.f32.mrb[0].mxu0
    %5631 = vmatprep.mubr.bf16.mxu0 %v5162
    %5632 = vmatmul.mubr.bf16.gmra.mrb[0].mxu0 %v4906
    %v5633 = vpop.f32.mrb[0].mxu0
    %v5634 = vadd.f32 %v5241, %v5633
    %v5635 = vpop.f32.mrb[0].mxu0
    %v5636 = vpop.f32.mrb[0].mxu0
    %v5637 = vadd.f32 %v5241, %v5636
    %v5638 = vpop.f32.mrb[0].mxu0
    %5639 = vmatprep.mubr.bf16.mxu0 %v5165
    %5640 = vmatmul.mubr.bf16.gmra.mrb[0].mxu0 %v4909
    %v5641 = vpop.f32.mrb[0].mxu0
    %v5642 = vadd.f32 %v5241, %v5641
    %v5643 = vpop.f32.mrb[0].mxu0
    %v5644 = vpop.f32.mrb[0].mxu0
    %v5645 = vadd.f32 %v5241, %v5644
    %v5646 = vpop.f32.mrb[0].mxu0
    %5647 = vmatprep.mubr.bf16.mxu0 %v5168
    %5648 = vmatmul.mubr.bf16.gmra.mrb[0].mxu0 %v4912
    %v5649 = vpop.f32.mrb[0].mxu0
    %v5650 = vadd.f32 %v5241, %v5649
    %v5651 = vpop.f32.mrb[0].mxu0
    %v5652 = vpop.f32.mrb[0].mxu0
    %v5653 = vadd.f32 %v5241, %v5652
    %v5654 = vpop.f32.mrb[0].mxu0
    %5655 = vmatprep.mubr.bf16.mxu0 %v5171
    %5656 = vmatmul.mubr.bf16.gmra.mrb[0].mxu0 %v4915
    %v5657 = vpop.f32.mrb[0].mxu0
    %v5658 = vadd.f32 %v5241, %v5657
    %v5659 = vpop.f32.mrb[0].mxu0
    %v5660 = vpop.f32.mrb[0].mxu0
    %v5661 = vadd.f32 %v5241, %v5660
    %v5662 = vpop.f32.mrb[0].mxu0
    %5663 = vmatprep.mubr.bf16.mxu0 %v5174
    %5664 = vmatmul.mubr.bf16.gmra.mrb[0].mxu0 %v4918
    %v5665 = vpop.f32.mrb[0].mxu0
    %v5666 = vadd.f32 %v5241, %v5665
    %v5667 = vpop.f32.mrb[0].mxu0
    %v5668 = vpop.f32.mrb[0].mxu0
    %v5669 = vadd.f32 %v5241, %v5668
    %v5670 = vpop.f32.mrb[0].mxu0
    %5671 = vmatprep.mubr.bf16.mxu0 %v5177
    %5672 = vmatmul.mubr.bf16.gmra.mrb[0].mxu0 %v4921
    %v5673 = vpop.f32.mrb[0].mxu0
    %v5674 = vadd.f32 %v5241, %v5673
    %v5675 = vpop.f32.mrb[0].mxu0
    %v5676 = vpop.f32.mrb[0].mxu0
    %v5677 = vadd.f32 %v5241, %v5676
    %v5678 = vpop.f32.mrb[0].mxu0
    %5679 = vmatprep.mubr.bf16.mxu0 %v5180
    %5680 = vmatmul.mubr.bf16.gmra.mrb[0].mxu0 %v4924
    %v5681 = vpop.f32.mrb[0].mxu0
    %v5682 = vadd.f32 %v5241, %v5681
    %v5683 = vpop.f32.mrb[0].mxu0
    %v5684 = vpop.f32.mrb[0].mxu0
    %v5685 = vadd.f32 %v5241, %v5684
    %v5686 = vpop.f32.mrb[0].mxu0
    %5687 = vmatprep.mubr.bf16.mxu0 %v5183
    %5688 = vmatmul.mubr.bf16.gmra.mrb[0].mxu0 %v4927
    %v5689 = vpop.f32.mrb[0].mxu0
    %v5690 = vadd.f32 %v5241, %v5689
    %v5691 = vpop.f32.mrb[0].mxu0
    %v5692 = vpop.f32.mrb[0].mxu0
    %v5693 = vadd.f32 %v5241, %v5692
    %v5694 = vpop.f32.mrb[0].mxu0
    %5695 = vmatprep.mubr.bf16.mxu0 %v5186
    %5696 = vmatmul.mubr.bf16.gmra.mrb[0].mxu0 %v4930
    %v5697 = vpop.f32.mrb[0].mxu0
    %v5698 = vadd.f32 %v5241, %v5697
    %v5699 = vpop.f32.mrb[0].mxu0
    %v5700 = vpop.f32.mrb[0].mxu0
    %v5701 = vadd.f32 %v5241, %v5700
    %v5702 = vpop.f32.mrb[0].mxu0
    %5703 = vmatprep.mubr.bf16.mxu0 %v5189
    %5704 = vmatmul.mubr.bf16.gmra.mrb[0].mxu0 %v4933
    %v5705 = vpop.f32.mrb[0].mxu0
    %v5706 = vadd.f32 %v5241, %v5705
    %v5707 = vpop.f32.mrb[0].mxu0
    %v5708 = vpop.f32.mrb[0].mxu0
    %v5709 = vadd.f32 %v5241, %v5708
    %v5710 = vpop.f32.mrb[0].mxu0
    %5711 = vmatprep.mubr.bf16.mxu0 %v5192
    %5712 = vmatmul.mubr.bf16.gmra.mrb[0].mxu0 %v4936
    %v5713 = vpop.f32.mrb[0].mxu0
    %v5714 = vadd.f32 %v5241, %v5713
    %v5715 = vpop.f32.mrb[0].mxu0
    %v5716 = vpop.f32.mrb[0].mxu0
    %v5717 = vadd.f32 %v5241, %v5716
    %v5718 = vpop.f32.mrb[0].mxu0
    %5719 = vmatprep.mubr.bf16.mxu0 %v5195
    %5720 = vmatmul.mubr.bf16.gmra.mrb[0].mxu0 %v4939
    %v5721 = vpop.f32.mrb[0].mxu0
    %v5722 = vadd.f32 %v5241, %v5721
    %v5723 = vpop.f32.mrb[0].mxu0
    %v5724 = vpop.f32.mrb[0].mxu0
    %v5725 = vadd.f32 %v5241, %v5724
    %v5726 = vpop.f32.mrb[0].mxu0
    %5727 = vmatprep.mubr.bf16.mxu0 %v5198
    %5728 = vmatmul.mubr.bf16.gmra.mrb[0].mxu0 %v4942
    %v5729 = vpop.f32.mrb[0].mxu0
    %v5730 = vadd.f32 %v5241, %v5729
    %v5731 = vpop.f32.mrb[0].mxu0
    %v5732 = vpop.f32.mrb[0].mxu0
    %v5733 = vadd.f32 %v5241, %v5732
    %v5734 = vpop.f32.mrb[0].mxu0
    %5735 = vdwg.mxu0
    %5736 = vmatprep.subr.bf16.mxu0 0
    %5737 = vmatpush1.bf16.msra.mxu0 %v5331
    %5738 = vmatprep.subr.bf16.mxu0 0
    %5739 = vmatpush1.bf16.msra.mxu0 %v5332
    %5740 = vmatprep.subr.bf16.mxu0 0
    %5741 = vmatpush1.bf16.msra.mxu0 0
    %5742 = vmatprep.subr.bf16.mxu0 0
    %5743 = vmatpush1.bf16.msra.mxu0 0
    %5744 = vmatprep.subr.bf16.mxu0 0
    %5745 = vmatpush1.bf16.msra.mxu0 0
    %5746 = vmatprep.subr.bf16.mxu0 0
    %5747 = vmatpush1.bf16.msra.mxu0 0
    %5748 = vmatprep.subr.bf16.mxu0 0
    %5749 = vmatpush1.bf16.msra.mxu0 0
    %5750 = vmatprep.subr.bf16.mxu0 0
    %5751 = vmatpush1.bf16.msra.mxu0 0
    %5752 = vmatprep.subr.bf16.mxu0 0
    %5753 = vmatpush1.bf16.msra.mxu0 0
    %5754 = vmatprep.subr.bf16.mxu0 0
    %5755 = vmatpush1.bf16.msra.mxu0 0
    %5756 = vmatprep.subr.bf16.mxu0 0
    %5757 = vmatpush1.bf16.msra.mxu0 0
    %5758 = vmatprep.subr.bf16.mxu0 0
    %5759 = vmatpush1.bf16.msra.mxu0 0
    %5760 = vmatprep.subr.bf16.mxu0 0
    %5761 = vmatpush1.bf16.msra.mxu0 0
    %5762 = vmatprep.subr.bf16.mxu0 0
    %5763 = vmatpush1.bf16.msra.mxu0 0
    %5764 = vmatprep.subr.bf16.mxu0 0
    %5765 = vmatpush1.bf16.msra.mxu0 0
    %5766 = vmatprep.subr.bf16.mxu0 0
    %5767 = vmatpush1.bf16.msra.mxu0 0
    %5768 = vmatprep.mubr.bf16.mxu0 0
    %5769 = vmatmul.mubr.bf16.gmra.mrb[0].mxu0 %v5352
    %v5770 = vpop.f32.mrb[0].mxu0
    %v5771 = vadd.f32 %v5482, %v5770
    %v5772 = vpop.f32.mrb[0].mxu0
    %v5773 = vpop.f32.mrb[0].mxu0
    %v5774 = vadd.f32 %v5485, %v5773
    %v5775 = vpop.f32.mrb[0].mxu0
    %5776 = vmatprep.mubr.bf16.mxu0 0
    %5777 = vmatmul.mubr.bf16.gmra.mrb[0].mxu0 %v5355
    %v5778 = vpop.f32.mrb[0].mxu0
    %v5779 = vadd.f32 %v5490, %v5778
    %v5780 = vpop.f32.mrb[0].mxu0
    %v5781 = vpop.f32.mrb[0].mxu0
    %v5782 = vadd.f32 %v5493, %v5781
    %v5783 = vpop.f32.mrb[0].mxu0
    %5784 = vmatprep.mubr.bf16.mxu0 0
    %5785 = vmatmul.mubr.bf16.gmra.mrb[0].mxu0 %v5358
    %v5786 = vpop.f32.mrb[0].mxu0
    %v5787 = vadd.f32 %v5498, %v5786
    %v5788 = vpop.f32.mrb[0].mxu0
    %v5789 = vpop.f32.mrb[0].mxu0
    %v5790 = vadd.f32 %v5501, %v5789
    %v5791 = vpop.f32.mrb[0].mxu0
    %5792 = vmatprep.mubr.bf16.mxu0 0
    %5793 = vmatmul.mubr.bf16.gmra.mrb[0].mxu0 %v5361
    %v5794 = vpop.f32.mrb[0].mxu0
    %v5795 = vadd.f32 %v5506, %v5794
    %v5796 = vpop.f32.mrb[0].mxu0
    %v5797 = vpop.f32.mrb[0].mxu0
    %v5798 = vadd.f32 %v5509, %v5797
    %v5799 = vpop.f32.mrb[0].mxu0
    %5800 = vmatprep.mubr.bf16.mxu0 0
    %5801 = vmatmul.mubr.bf16.gmra.mrb[0].mxu0 %v5364
    %v5802 = vpop.f32.mrb[0].mxu0
    %v5803 = vadd.f32 %v5514, %v5802
    %v5804 = vpop.f32.mrb[0].mxu0
    %v5805 = vpop.f32.mrb[0].mxu0
    %v5806 = vadd.f32 %v5517, %v5805
    %v5807 = vpop.f32.mrb[0].mxu0
    %5808 = vmatprep.mubr.bf16.mxu0 0
    %5809 = vmatmul.mubr.bf16.gmra.mrb[0].mxu0 %v5367
    %v5810 = vpop.f32.mrb[0].mxu0
    %v5811 = vadd.f32 %v5522, %v5810
    %v5812 = vpop.f32.mrb[0].mxu0
    %v5813 = vpop.f32.mrb[0].mxu0
    %v5814 = vadd.f32 %v5525, %v5813
    %v5815 = vpop.f32.mrb[0].mxu0
    %5816 = vmatprep.mubr.bf16.mxu0 0
    %5817 = vmatmul.mubr.bf16.gmra.mrb[0].mxu0 %v5370
    %v5818 = vpop.f32.mrb[0].mxu0
    %v5819 = vadd.f32 %v5530, %v5818
    %v5820 = vpop.f32.mrb[0].mxu0
    %v5821 = vpop.f32.mrb[0].mxu0
    %v5822 = vadd.f32 %v5533, %v5821
    %v5823 = vpop.f32.mrb[0].mxu0
    %5824 = vmatprep.mubr.bf16.mxu0 0
    %5825 = vmatmul.mubr.bf16.gmra.mrb[0].mxu0 %v5373
    %v5826 = vpop.f32.mrb[0].mxu0
    %v5827 = vadd.f32 %v5538, %v5826
    %v5828 = vpop.f32.mrb[0].mxu0
    %v5829 = vpop.f32.mrb[0].mxu0
    %v5830 = vadd.f32 %v5541, %v5829
    %v5831 = vpop.f32.mrb[0].mxu0
    %5832 = vmatprep.mubr.bf16.mxu0 0
    %5833 = vmatmul.mubr.bf16.gmra.mrb[0].mxu0 %v5376
    %v5834 = vpop.f32.mrb[0].mxu0
    %v5835 = vadd.f32 %v5546, %v5834
    %v5836 = vpop.f32.mrb[0].mxu0
    %v5837 = vpop.f32.mrb[0].mxu0
    %v5838 = vadd.f32 %v5549, %v5837
    %v5839 = vpop.f32.mrb[0].mxu0
    %5840 = vmatprep.mubr.bf16.mxu0 0
    %5841 = vmatmul.mubr.bf16.gmra.mrb[0].mxu0 %v5379
    %v5842 = vpop.f32.mrb[0].mxu0
    %v5843 = vadd.f32 %v5554, %v5842
    %v5844 = vpop.f32.mrb[0].mxu0
    %v5845 = vpop.f32.mrb[0].mxu0
    %v5846 = vadd.f32 %v5557, %v5845
    %v5847 = vpop.f32.mrb[0].mxu0
    %5848 = vmatprep.mubr.bf16.mxu0 0
    %5849 = vmatmul.mubr.bf16.gmra.mrb[0].mxu0 %v5382
    %v5850 = vpop.f32.mrb[0].mxu0
    %v5851 = vadd.f32 %v5562, %v5850
    %v5852 = vpop.f32.mrb[0].mxu0
    %v5853 = vpop.f32.mrb[0].mxu0
    %v5854 = vadd.f32 %v5565, %v5853
    %v5855 = vpop.f32.mrb[0].mxu0
    %5856 = vmatprep.mubr.bf16.mxu0 0
    %5857 = vmatmul.mubr.bf16.gmra.mrb[0].mxu0 %v5385
    %v5858 = vpop.f32.mrb[0].mxu0
    %v5859 = vadd.f32 %v5570, %v5858
    %v5860 = vpop.f32.mrb[0].mxu0
    %v5861 = vpop.f32.mrb[0].mxu0
    %v5862 = vadd.f32 %v5573, %v5861
    %v5863 = vpop.f32.mrb[0].mxu0
    %5864 = vmatprep.mubr.bf16.mxu0 0
    %5865 = vmatmul.mubr.bf16.gmra.mrb[0].mxu0 %v5388
    %v5866 = vpop.f32.mrb[0].mxu0
    %v5867 = vadd.f32 %v5578, %v5866
    %v5868 = vpop.f32.mrb[0].mxu0
    %v5869 = vpop.f32.mrb[0].mxu0
    %v5870 = vadd.f32 %v5581, %v5869
    %v5871 = vpop.f32.mrb[0].mxu0
    %5872 = vmatprep.mubr.bf16.mxu0 0
    %5873 = vmatmul.mubr.bf16.gmra.mrb[0].mxu0 %v5391
    %v5874 = vpop.f32.mrb[0].mxu0
    %v5875 = vadd.f32 %v5586, %v5874
    %v5876 = vpop.f32.mrb[0].mxu0
    %v5877 = vpop.f32.mrb[0].mxu0
    %v5878 = vadd.f32 %v5589, %v5877
    %v5879 = vpop.f32.mrb[0].mxu0
    %5880 = vmatprep.mubr.bf16.mxu0 0
    %5881 = vmatmul.mubr.bf16.gmra.mrb[0].mxu0 %v5394
    %v5882 = vpop.f32.mrb[0].mxu0
    %v5883 = vadd.f32 %v5594, %v5882
    %v5884 = vpop.f32.mrb[0].mxu0
    %v5885 = vpop.f32.mrb[0].mxu0
    %v5886 = vadd.f32 %v5597, %v5885
    %v5887 = vpop.f32.mrb[0].mxu0
    %5888 = vmatprep.mubr.bf16.mxu0 0
    %5889 = vmatmul.mubr.bf16.gmra.mrb[0].mxu0 %v5397
    %v5890 = vpop.f32.mrb[0].mxu0
    %v5891 = vadd.f32 %v5602, %v5890
    %v5892 = vpop.f32.mrb[0].mxu0
    %v5893 = vpop.f32.mrb[0].mxu0
    %v5894 = vadd.f32 %v5605, %v5893
    %v5895 = vpop.f32.mrb[0].mxu0
    %5896 = vmatprep.mubr.bf16.mxu0 0
    %5897 = vmatmul.mubr.bf16.gmra.mrb[0].mxu0 %v5400
    %v5898 = vpop.f32.mrb[0].mxu0
    %v5899 = vadd.f32 %v5610, %v5898
    %v5900 = vpop.f32.mrb[0].mxu0
    %v5901 = vpop.f32.mrb[0].mxu0
    %v5902 = vadd.f32 %v5613, %v5901
    %v5903 = vpop.f32.mrb[0].mxu0
    %5904 = vmatprep.mubr.bf16.mxu0 0
    %5905 = vmatmul.mubr.bf16.gmra.mrb[0].mxu0 %v5403
    %v5906 = vpop.f32.mrb[0].mxu0
    %v5907 = vadd.f32 %v5618, %v5906
    %v5908 = vpop.f32.mrb[0].mxu0
    %v5909 = vpop.f32.mrb[0].mxu0
    %v5910 = vadd.f32 %v5621, %v5909
    %v5911 = vpop.f32.mrb[0].mxu0
    %5912 = vmatprep.mubr.bf16.mxu0 0
    %5913 = vmatmul.mubr.bf16.gmra.mrb[0].mxu0 %v5406
    %v5914 = vpop.f32.mrb[0].mxu0
    %v5915 = vadd.f32 %v5626, %v5914
    %v5916 = vpop.f32.mrb[0].mxu0
    %v5917 = vpop.f32.mrb[0].mxu0
    %v5918 = vadd.f32 %v5629, %v5917
    %v5919 = vpop.f32.mrb[0].mxu0
    %5920 = vmatprep.mubr.bf16.mxu0 0
    %5921 = vmatmul.mubr.bf16.gmra.mrb[0].mxu0 %v5409
    %v5922 = vpop.f32.mrb[0].mxu0
    %v5923 = vadd.f32 %v5634, %v5922
    %v5924 = vpop.f32.mrb[0].mxu0
    %v5925 = vpop.f32.mrb[0].mxu0
    %v5926 = vadd.f32 %v5637, %v5925
    %v5927 = vpop.f32.mrb[0].mxu0
    %5928 = vmatprep.mubr.bf16.mxu0 0
    %5929 = vmatmul.mubr.bf16.gmra.mrb[0].mxu0 %v5412
    %v5930 = vpop.f32.mrb[0].mxu0
    %v5931 = vadd.f32 %v5642, %v5930
    %v5932 = vpop.f32.mrb[0].mxu0
    %v5933 = vpop.f32.mrb[0].mxu0
    %v5934 = vadd.f32 %v5645, %v5933
    %v5935 = vpop.f32.mrb[0].mxu0
    %5936 = vmatprep.mubr.bf16.mxu0 0
    %5937 = vmatmul.mubr.bf16.gmra.mrb[0].mxu0 %v5415
    %v5938 = vpop.f32.mrb[0].mxu0
    %v5939 = vadd.f32 %v5650, %v5938
    %v5940 = vpop.f32.mrb[0].mxu0
    %v5941 = vpop.f32.mrb[0].mxu0
    %v5942 = vadd.f32 %v5653, %v5941
    %v5943 = vpop.f32.mrb[0].mxu0
    %5944 = vmatprep.mubr.bf16.mxu0 0
    %5945 = vmatmul.mubr.bf16.gmra.mrb[0].mxu0 %v5418
    %v5946 = vpop.f32.mrb[0].mxu0
    %v5947 = vadd.f32 %v5658, %v5946
    %v5948 = vpop.f32.mrb[0].mxu0
    %v5949 = vpop.f32.mrb[0].mxu0
    %v5950 = vadd.f32 %v5661, %v5949
    %v5951 = vpop.f32.mrb[0].mxu0
    %5952 = vmatprep.mubr.bf16.mxu0 0
    %5953 = vmatmul.mubr.bf16.gmra.mrb[0].mxu0 %v5421
    %v5954 = vpop.f32.mrb[0].mxu0
    %v5955 = vadd.f32 %v5666, %v5954
    %v5956 = vpop.f32.mrb[0].mxu0
    %v5957 = vpop.f32.mrb[0].mxu0
    %v5958 = vadd.f32 %v5669, %v5957
    %v5959 = vpop.f32.mrb[0].mxu0
    %5960 = vmatprep.mubr.bf16.mxu0 0
    %5961 = vmatmul.mubr.bf16.gmra.mrb[0].mxu0 %v5424
    %v5962 = vpop.f32.mrb[0].mxu0
    %v5963 = vadd.f32 %v5674, %v5962
    %v5964 = vpop.f32.mrb[0].mxu0
    %v5965 = vpop.f32.mrb[0].mxu0
    %v5966 = vadd.f32 %v5677, %v5965
    %v5967 = vpop.f32.mrb[0].mxu0
    %5968 = vmatprep.mubr.bf16.mxu0 0
    %5969 = vmatmul.mubr.bf16.gmra.mrb[0].mxu0 %v5427
    %v5970 = vpop.f32.mrb[0].mxu0
    %v5971 = vadd.f32 %v5682, %v5970
    %v5972 = vpop.f32.mrb[0].mxu0
    %v5973 = vpop.f32.mrb[0].mxu0
    %v5974 = vadd.f32 %v5685, %v5973
    %v5975 = vpop.f32.mrb[0].mxu0
    %5976 = vmatprep.mubr.bf16.mxu0 0
    %5977 = vmatmul.mubr.bf16.gmra.mrb[0].mxu0 %v5430
    %v5978 = vpop.f32.mrb[0].mxu0
    %v5979 = vadd.f32 %v5690, %v5978
    %v5980 = vpop.f32.mrb[0].mxu0
    %v5981 = vpop.f32.mrb[0].mxu0
    %v5982 = vadd.f32 %v5693, %v5981
    %v5983 = vpop.f32.mrb[0].mxu0
    %5984 = vmatprep.mubr.bf16.mxu0 0
    %5985 = vmatmul.mubr.bf16.gmra.mrb[0].mxu0 %v5433
    %v5986 = vpop.f32.mrb[0].mxu0
    %v5987 = vadd.f32 %v5698, %v5986
    %v5988 = vpop.f32.mrb[0].mxu0
    %v5989 = vpop.f32.mrb[0].mxu0
    %v5990 = vadd.f32 %v5701, %v5989
    %v5991 = vpop.f32.mrb[0].mxu0
    %5992 = vmatprep.mubr.bf16.mxu0 0
    %5993 = vmatmul.mubr.bf16.gmra.mrb[0].mxu0 %v5436
    %v5994 = vpop.f32.mrb[0].mxu0
    %v5995 = vadd.f32 %v5706, %v5994
    %v5996 = vpop.f32.mrb[0].mxu0
    %v5997 = vpop.f32.mrb[0].mxu0
    %v5998 = vadd.f32 %v5709, %v5997
    %v5999 = vpop.f32.mrb[0].mxu0
    %6000 = vmatprep.mubr.bf16.mxu0 0
    %6001 = vmatmul.mubr.bf16.gmra.mrb[0].mxu0 %v5439
    %v6002 = vpop.f32.mrb[0].mxu0
    %v6003 = vadd.f32 %v5714, %v6002
    %v6004 = vpop.f32.mrb[0].mxu0
    %v6005 = vpop.f32.mrb[0].mxu0
    %v6006 = vadd.f32 %v5717, %v6005
    %v6007 = vpop.f32.mrb[0].mxu0
    %6008 = vmatprep.mubr.bf16.mxu0 0
    %6009 = vmatmul.mubr.bf16.gmra.mrb[0].mxu0 %v5442
    %v6010 = vpop.f32.mrb[0].mxu0
    %v6011 = vadd.f32 %v5722, %v6010
    %v6012 = vpop.f32.mrb[0].mxu0
    %v6013 = vpop.f32.mrb[0].mxu0
    %v6014 = vadd.f32 %v5725, %v6013
    %v6015 = vpop.f32.mrb[0].mxu0
    %6016 = vmatprep.mubr.bf16.mxu0 0
    %6017 = vmatmul.mubr.bf16.gmra.mrb[0].mxu0 %v5445
    %v6018 = vpop.f32.mrb[0].mxu0
    %v6019 = vadd.f32 %v5730, %v6018
    %v6020 = vpop.f32.mrb[0].mxu0
    %v6021 = vpop.f32.mrb[0].mxu0
    %v6022 = vadd.f32 %v5733, %v6021
    %v6023 = vpop.f32.mrb[0].mxu0
    %6024 = vdwg.mxu0
    %v6025 = vld [vmem:[#allocation4] sm:$0xff]
    %v6026 = vld [vmem:[#allocation4 + $0x8] sm:$0xff]
    %v6027 = vld [vmem:[#allocation4 + $0x10] sm:$0xff]
    %v6028 = vld [vmem:[#allocation4 + $0x18] sm:$0xff]
    %v6029 = vld [vmem:[#allocation4 + $0x20] sm:$0xff]
    %v6030 = vld [vmem:[#allocation4 + $0x28] sm:$0xff]
    %v6031 = vld [vmem:[#allocation4 + $0x30] sm:$0xff]
    %v6032 = vld [vmem:[#allocation4 + $0x38] sm:$0xff]
    %v6033 = vld [vmem:[#allocation4 + $0x40] sm:$0xff]
    %v6034 = vld [vmem:[#allocation4 + $0x48] sm:$0xff]
    %v6035 = vld [vmem:[#allocation4 + $0x50] sm:$0xff]
    %v6036 = vld [vmem:[#allocation4 + $0x58] sm:$0xff]
    %v6037 = vld [vmem:[#allocation4 + $0x60] sm:$0xff]
    %v6038 = vld [vmem:[#allocation4 + $0x68] sm:$0xff]
    %v6039 = vld [vmem:[#allocation4 + $0x70] sm:$0xff]
    %v6040 = vld [vmem:[#allocation4 + $0x78] sm:$0xff]
    %v6041 = vld [vmem:[#allocation4 + $0x80] sm:$0xff]
    %v6042 = vld [vmem:[#allocation4 + $0x88] sm:$0xff]
    %v6043 = vld [vmem:[#allocation4 + $0x90] sm:$0xff]
    %v6044 = vld [vmem:[#allocation4 + $0x98] sm:$0xff]
    %v6045 = vld [vmem:[#allocation4 + $0xa0] sm:$0xff]
    %v6046 = vld [vmem:[#allocation4 + $0xa8] sm:$0xff]
    %v6047 = vld [vmem:[#allocation4 + $0xb0] sm:$0xff]
    %v6048 = vld [vmem:[#allocation4 + $0xb8] sm:$0xff]
    %v6049 = vld [vmem:[#allocation4 + $0xc0] sm:$0xff]
    %v6050 = vld [vmem:[#allocation4 + $0xc8] sm:$0xff]
    %v6051 = vld [vmem:[#allocation4 + $0xd0] sm:$0xff]
    %v6052 = vld [vmem:[#allocation4 + $0xd8] sm:$0xff]
    %v6053 = vld [vmem:[#allocation4 + $0xe0] sm:$0xff]
    %v6054 = vld [vmem:[#allocation4 + $0xe8] sm:$0xff]
    %v6055 = vld [vmem:[#allocation4 + $0xf0] sm:$0xff]
    %v6056 = vld [vmem:[#allocation4 + $0xf8] sm:$0xff]
    %v6057 = vld [vmem:[#allocation4 + $0x100] sm:$0xff]
    %v6058 = vld [vmem:[#allocation4 + $0x108] sm:$0xff]
    %v6059 = vld [vmem:[#allocation4 + $0x110] sm:$0xff]
    %v6060 = vld [vmem:[#allocation4 + $0x118] sm:$0xff]
    %v6061 = vld [vmem:[#allocation4 + $0x120] sm:$0xff]
    %v6062 = vld [vmem:[#allocation4 + $0x128] sm:$0xff]
    %v6063 = vld [vmem:[#allocation4 + $0x130] sm:$0xff]
    %v6064 = vld [vmem:[#allocation4 + $0x138] sm:$0xff]
    %v6065 = vld [vmem:[#allocation4 + $0x140] sm:$0xff]
    %v6066 = vld [vmem:[#allocation4 + $0x148] sm:$0xff]
    %v6067 = vld [vmem:[#allocation4 + $0x150] sm:$0xff]
    %v6068 = vld [vmem:[#allocation4 + $0x158] sm:$0xff]
    %v6069 = vld [vmem:[#allocation4 + $0x160] sm:$0xff]
    %v6070 = vld [vmem:[#allocation4 + $0x168] sm:$0xff]
    %v6071 = vld [vmem:[#allocation4 + $0x170] sm:$0xff]
    %v6072 = vld [vmem:[#allocation4 + $0x178] sm:$0xff]
    %v6073 = vld [vmem:[#allocation4 + $0x180] sm:$0xff]
    %v6074 = vld [vmem:[#allocation4 + $0x188] sm:$0xff]
    %v6075 = vld [vmem:[#allocation4 + $0x190] sm:$0xff]
    %v6076 = vld [vmem:[#allocation4 + $0x198] sm:$0xff]
    %v6077 = vld [vmem:[#allocation4 + $0x1a0] sm:$0xff]
    %v6078 = vld [vmem:[#allocation4 + $0x1a8] sm:$0xff]
    %v6079 = vld [vmem:[#allocation4 + $0x1b0] sm:$0xff]
    %v6080 = vld [vmem:[#allocation4 + $0x1b8] sm:$0xff]
    %v6081 = vld [vmem:[#allocation4 + $0x1c0] sm:$0xff]
    %v6082 = vld [vmem:[#allocation4 + $0x1c8] sm:$0xff]
    %v6083 = vld [vmem:[#allocation4 + $0x1d0] sm:$0xff]
    %v6084 = vld [vmem:[#allocation4 + $0x1d8] sm:$0xff]
    %v6085 = vld [vmem:[#allocation4 + $0x1e0] sm:$0xff]
    %v6086 = vld [vmem:[#allocation4 + $0x1e8] sm:$0xff]
    %v6087 = vld [vmem:[#allocation4 + $0x1f0] sm:$0xff]
    %v6088 = vld [vmem:[#allocation4 + $0x1f8] sm:$0xff]
    %v6089 = vadd.f32 %v5771, %v6025
    %v6090 = vadd.f32 %v5774, %v6026
    %v6091 = vadd.f32 %v5779, %v6027
    %v6092 = vadd.f32 %v5782, %v6028
    %v6093 = vadd.f32 %v5787, %v6029
    %v6094 = vadd.f32 %v5790, %v6030
    %v6095 = vadd.f32 %v5795, %v6031
    %v6096 = vadd.f32 %v5798, %v6032
    %v6097 = vadd.f32 %v5803, %v6033
    %v6098 = vadd.f32 %v5806, %v6034
    %v6099 = vadd.f32 %v5811, %v6035
    %v6100 = vadd.f32 %v5814, %v6036
    %v6101 = vadd.f32 %v5819, %v6037
    %v6102 = vadd.f32 %v5822, %v6038
    %v6103 = vadd.f32 %v5827, %v6039
    %v6104 = vadd.f32 %v5830, %v6040
    %v6105 = vadd.f32 %v5835, %v6041
    %v6106 = vadd.f32 %v5838, %v6042
    %v6107 = vadd.f32 %v5843, %v6043
    %v6108 = vadd.f32 %v5846, %v6044
    %v6109 = vadd.f32 %v5851, %v6045
    %v6110 = vadd.f32 %v5854, %v6046
    %v6111 = vadd.f32 %v5859, %v6047
    %v6112 = vadd.f32 %v5862, %v6048
    %v6113 = vadd.f32 %v5867, %v6049
    %v6114 = vadd.f32 %v5870, %v6050
    %v6115 = vadd.f32 %v5875, %v6051
    %v6116 = vadd.f32 %v5878, %v6052
    %v6117 = vadd.f32 %v5883, %v6053
    %v6118 = vadd.f32 %v5886, %v6054
    %v6119 = vadd.f32 %v5891, %v6055
    %v6120 = vadd.f32 %v5894, %v6056
    %v6121 = vadd.f32 %v5899, %v6057
    %v6122 = vadd.f32 %v5902, %v6058
    %v6123 = vadd.f32 %v5907, %v6059
    %v6124 = vadd.f32 %v5910, %v6060
    %v6125 = vadd.f32 %v5915, %v6061
    %v6126 = vadd.f32 %v5918, %v6062
    %v6127 = vadd.f32 %v5923, %v6063
    %v6128 = vadd.f32 %v5926, %v6064
    %v6129 = vadd.f32 %v5931, %v6065
    %v6130 = vadd.f32 %v5934, %v6066
    %v6131 = vadd.f32 %v5939, %v6067
    %v6132 = vadd.f32 %v5942, %v6068
    %v6133 = vadd.f32 %v5947, %v6069
    %v6134 = vadd.f32 %v5950, %v6070
    %v6135 = vadd.f32 %v5955, %v6071
    %v6136 = vadd.f32 %v5958, %v6072
    %v6137 = vadd.f32 %v5963, %v6073
    %v6138 = vadd.f32 %v5966, %v6074
    %v6139 = vadd.f32 %v5971, %v6075
    %v6140 = vadd.f32 %v5974, %v6076
    %v6141 = vadd.f32 %v5979, %v6077
    %v6142 = vadd.f32 %v5982, %v6078
    %v6143 = vadd.f32 %v5987, %v6079
    %v6144 = vadd.f32 %v5990, %v6080
    %v6145 = vadd.f32 %v5995, %v6081
    %v6146 = vadd.f32 %v5998, %v6082
    %v6147 = vadd.f32 %v6003, %v6083
    %v6148 = vadd.f32 %v6006, %v6084
    %v6149 = vadd.f32 %v6011, %v6085
    %v6150 = vadd.f32 %v6014, %v6086
    %v6151 = vadd.f32 %v6019, %v6087
    %v6152 = vadd.f32 %v6022, %v6088
    %v6153 = vmax.f32 %v6089, 0.0
    %v6154 = vmax.f32 %v6090, 0.0
    %v6155 = vmax.f32 %v6091, 0.0
    %v6156 = vmax.f32 %v6092, 0.0
    %v6157 = vmax.f32 %v6093, 0.0
    %v6158 = vmax.f32 %v6094, 0.0
    %v6159 = vmax.f32 %v6095, 0.0
    %v6160 = vmax.f32 %v6096, 0.0
    %v6161 = vmax.f32 %v6097, 0.0
    %v6162 = vmax.f32 %v6098, 0.0
    %v6163 = vmax.f32 %v6099, 0.0
    %v6164 = vmax.f32 %v6100, 0.0
    %v6165 = vmax.f32 %v6101, 0.0
    %v6166 = vmax.f32 %v6102, 0.0
    %v6167 = vmax.f32 %v6103, 0.0
    %v6168 = vmax.f32 %v6104, 0.0
    %v6169 = vmax.f32 %v6105, 0.0
    %v6170 = vmax.f32 %v6106, 0.0
    %v6171 = vmax.f32 %v6107, 0.0
    %v6172 = vmax.f32 %v6108, 0.0
    %v6173 = vmax.f32 %v6109, 0.0
    %v6174 = vmax.f32 %v6110, 0.0
    %v6175 = vmax.f32 %v6111, 0.0
    %v6176 = vmax.f32 %v6112, 0.0
    %v6177 = vmax.f32 %v6113, 0.0
    %v6178 = vmax.f32 %v6114, 0.0
    %v6179 = vmax.f32 %v6115, 0.0
    %v6180 = vmax.f32 %v6116, 0.0
    %v6181 = vmax.f32 %v6117, 0.0
    %v6182 = vmax.f32 %v6118, 0.0
    %v6183 = vmax.f32 %v6119, 0.0
    %v6184 = vmax.f32 %v6120, 0.0
    %v6185 = vmax.f32 %v6121, 0.0
    %v6186 = vmax.f32 %v6122, 0.0
    %v6187 = vmax.f32 %v6123, 0.0
    %v6188 = vmax.f32 %v6124, 0.0
    %v6189 = vmax.f32 %v6125, 0.0
    %v6190 = vmax.f32 %v6126, 0.0
    %v6191 = vmax.f32 %v6127, 0.0
    %v6192 = vmax.f32 %v6128, 0.0
    %v6193 = vmax.f32 %v6129, 0.0
    %v6194 = vmax.f32 %v6130, 0.0
    %v6195 = vmax.f32 %v6131, 0.0
    %v6196 = vmax.f32 %v6132, 0.0
    %v6197 = vmax.f32 %v6133, 0.0
    %v6198 = vmax.f32 %v6134, 0.0
    %v6199 = vmax.f32 %v6135, 0.0
    %v6200 = vmax.f32 %v6136, 0.0
    %v6201 = vmax.f32 %v6137, 0.0
    %v6202 = vmax.f32 %v6138, 0.0
    %v6203 = vmax.f32 %v6139, 0.0
    %v6204 = vmax.f32 %v6140, 0.0
    %v6205 = vmax.f32 %v6141, 0.0
    %v6206 = vmax.f32 %v6142, 0.0
    %v6207 = vmax.f32 %v6143, 0.0
    %v6208 = vmax.f32 %v6144, 0.0
    %v6209 = vmax.f32 %v6145, 0.0
    %v6210 = vmax.f32 %v6146, 0.0
    %v6211 = vmax.f32 %v6147, 0.0
    %v6212 = vmax.f32 %v6148, 0.0
    %v6213 = vmax.f32 %v6149, 0.0
    %v6214 = vmax.f32 %v6150, 0.0
    %v6215 = vmax.f32 %v6151, 0.0
    %v6216 = vmax.f32 %v6152, 0.0
    %6217 = vst.msk [vmem:[#allocation7] sm:$0xff] %vm36, %v6153
    %6218 = vst.msk [vmem:[#allocation7 + $0x8] sm:$0xff] %vm36, %v6154
    %6219 = vst.msk [vmem:[#allocation7 + $0x10] sm:$0xff] %vm36, %v6155
    %6220 = vst.msk [vmem:[#allocation7 + $0x18] sm:$0xff] %vm36, %v6156
    %6221 = vst.msk [vmem:[#allocation7 + $0x20] sm:$0xff] %vm36, %v6157
    %6222 = vst.msk [vmem:[#allocation7 + $0x28] sm:$0xff] %vm36, %v6158
    %6223 = vst.msk [vmem:[#allocation7 + $0x30] sm:$0xff] %vm36, %v6159
    %6224 = vst.msk [vmem:[#allocation7 + $0x38] sm:$0xff] %vm36, %v6160
    %6225 = vst.msk [vmem:[#allocation7 + $0x40] sm:$0xff] %vm36, %v6161
    %6226 = vst.msk [vmem:[#allocation7 + $0x48] sm:$0xff] %vm36, %v6162
    %6227 = vst.msk [vmem:[#allocation7 + $0x50] sm:$0xff] %vm36, %v6163
    %6228 = vst.msk [vmem:[#allocation7 + $0x58] sm:$0xff] %vm36, %v6164
    %6229 = vst.msk [vmem:[#allocation7 + $0x60] sm:$0xff] %vm36, %v6165
    %6230 = vst.msk [vmem:[#allocation7 + $0x68] sm:$0xff] %vm36, %v6166
    %6231 = vst.msk [vmem:[#allocation7 + $0x70] sm:$0xff] %vm36, %v6167
    %6232 = vst.msk [vmem:[#allocation7 + $0x78] sm:$0xff] %vm36, %v6168
    %6233 = vst.msk [vmem:[#allocation7 + $0x80] sm:$0xff] %vm36, %v6169
    %6234 = vst.msk [vmem:[#allocation7 + $0x88] sm:$0xff] %vm36, %v6170
    %6235 = vst.msk [vmem:[#allocation7 + $0x90] sm:$0xff] %vm36, %v6171
    %6236 = vst.msk [vmem:[#allocation7 + $0x98] sm:$0xff] %vm36, %v6172
    %6237 = vst.msk [vmem:[#allocation7 + $0xa0] sm:$0xff] %vm36, %v6173
    %6238 = vst.msk [vmem:[#allocation7 + $0xa8] sm:$0xff] %vm36, %v6174
    %6239 = vst.msk [vmem:[#allocation7 + $0xb0] sm:$0xff] %vm36, %v6175
    %6240 = vst.msk [vmem:[#allocation7 + $0xb8] sm:$0xff] %vm36, %v6176
    %6241 = vst.msk [vmem:[#allocation7 + $0xc0] sm:$0xff] %vm36, %v6177
    %6242 = vst.msk [vmem:[#allocation7 + $0xc8] sm:$0xff] %vm36, %v6178
    %6243 = vst.msk [vmem:[#allocation7 + $0xd0] sm:$0xff] %vm36, %v6179
    %6244 = vst.msk [vmem:[#allocation7 + $0xd8] sm:$0xff] %vm36, %v6180
    %6245 = vst.msk [vmem:[#allocation7 + $0xe0] sm:$0xff] %vm36, %v6181
    %6246 = vst.msk [vmem:[#allocation7 + $0xe8] sm:$0xff] %vm36, %v6182
    %6247 = vst.msk [vmem:[#allocation7 + $0xf0] sm:$0xff] %vm36, %v6183
    %6248 = vst.msk [vmem:[#allocation7 + $0xf8] sm:$0xff] %vm36, %v6184
    %6249 = vst.msk [vmem:[#allocation7 + $0x100] sm:$0xff] %vm36, %v6185
    %6250 = vst.msk [vmem:[#allocation7 + $0x108] sm:$0xff] %vm36, %v6186
    %6251 = vst.msk [vmem:[#allocation7 + $0x110] sm:$0xff] %vm36, %v6187
    %6252 = vst.msk [vmem:[#allocation7 + $0x118] sm:$0xff] %vm36, %v6188
    %6253 = vst.msk [vmem:[#allocation7 + $0x120] sm:$0xff] %vm36, %v6189
    %6254 = vst.msk [vmem:[#allocation7 + $0x128] sm:$0xff] %vm36, %v6190
    %6255 = vst.msk [vmem:[#allocation7 + $0x130] sm:$0xff] %vm36, %v6191
    %6256 = vst.msk [vmem:[#allocation7 + $0x138] sm:$0xff] %vm36, %v6192
    %6257 = vst.msk [vmem:[#allocation7 + $0x140] sm:$0xff] %vm36, %v6193
    %6258 = vst.msk [vmem:[#allocation7 + $0x148] sm:$0xff] %vm36, %v6194
    %6259 = vst.msk [vmem:[#allocation7 + $0x150] sm:$0xff] %vm36, %v6195
    %6260 = vst.msk [vmem:[#allocation7 + $0x158] sm:$0xff] %vm36, %v6196
    %6261 = vst.msk [vmem:[#allocation7 + $0x160] sm:$0xff] %vm36, %v6197
    %6262 = vst.msk [vmem:[#allocation7 + $0x168] sm:$0xff] %vm36, %v6198
    %6263 = vst.msk [vmem:[#allocation7 + $0x170] sm:$0xff] %vm36, %v6199
    %6264 = vst.msk [vmem:[#allocation7 + $0x178] sm:$0xff] %vm36, %v6200
    %6265 = vst.msk [vmem:[#allocation7 + $0x180] sm:$0xff] %vm36, %v6201
    %6266 = vst.msk [vmem:[#allocation7 + $0x188] sm:$0xff] %vm36, %v6202
    %6267 = vst.msk [vmem:[#allocation7 + $0x190] sm:$0xff] %vm36, %v6203
    %6268 = vst.msk [vmem:[#allocation7 + $0x198] sm:$0xff] %vm36, %v6204
    %6269 = vst.msk [vmem:[#allocation7 + $0x1a0] sm:$0xff] %vm36, %v6205
    %6270 = vst.msk [vmem:[#allocation7 + $0x1a8] sm:$0xff] %vm36, %v6206
    %6271 = vst.msk [vmem:[#allocation7 + $0x1b0] sm:$0xff] %vm36, %v6207
    %6272 = vst.msk [vmem:[#allocation7 + $0x1b8] sm:$0xff] %vm36, %v6208
    %6273 = vst.msk [vmem:[#allocation7 + $0x1c0] sm:$0xff] %vm36, %v6209
    %6274 = vst.msk [vmem:[#allocation7 + $0x1c8] sm:$0xff] %vm36, %v6210
    %6275 = vst.msk [vmem:[#allocation7 + $0x1d0] sm:$0xff] %vm36, %v6211
    %6276 = vst.msk [vmem:[#allocation7 + $0x1d8] sm:$0xff] %vm36, %v6212
    %6277 = vst.msk [vmem:[#allocation7 + $0x1e0] sm:$0xff] %vm36, %v6213
    %6278 = vst.msk [vmem:[#allocation7 + $0x1e8] sm:$0xff] %vm36, %v6214
    %6279 = vst.msk [vmem:[#allocation7 + $0x1f0] sm:$0xff] %vm36, %v6215
    %6280 = vst.msk [vmem:[#allocation7 + $0x1f8] sm:$0xff] %vm36, %v6216
    // Predicated region
    $region26: #{tpu_custom_call.1} parent=1 // pred_check
      _
    $region27: #{tpu_custom_call.1} parent=1 // pred_check_branch
      %6282 = sbr.rel (0) target = $region29
    $region28: #{tpu_custom_call.1} parent=1 // pred_region
      %s6284 = ssub.s32 8192, 8192
      %6285 = vsyncadd [#allocation6], %s6284
      %s6286 = sshll.u32 [#allocation7], 4
      %s6287 = int_to_ptr.vmem [resolvable:$true] %s6286
      %6292 = dma.vmem_to_hbm [thread:$0]  %s6287, 8192, %s5, [#allocation6], 128, 128, 8
    $region29: #{tpu_custom_call.1} parent=1 // pred_fallthru
      _
    // Predicated region
    $region30: #{tpu_custom_call.1} parent=1 // pred_check
      _
    $region31: #{tpu_custom_call.1} parent=1 // pred_check_branch
      %6294 = sbr.rel (0) target = $region33
    $region32: #{tpu_custom_call.1} parent=1 // pred_region
      %6295 = dma.done [#allocation6], 8192
    $region33: #{tpu_custom_call.1} parent=1 // pred_fallthru
      _
    %6296 = vsyncpa [#allocation5], 1
    %6297 = vsyncpa [#allocation6], 1

</llo_original>
